<compile_context>
chip_gen: v6e
topology: v6e:2x2x1
jax: 0.10.0
libtpu: 0.0.40
codegen_flags: <defaults>
</compile_context>

<pallas_src>
import functools

import jax
import jax.numpy as jnp
from jax import lax
from jax.experimental import pallas as pl
from jax.experimental.pallas import tpu as pltpu

GN_EPS = 1e-5
NUM_GROUPS = 8


def _conv3_fused_kernel(x_ref, w1_ref, a1_ref, w2_ref, a2_ref, w3_ref, a3_ref,
                        memb_ref, membT_ref, masks_ref, o_ref, h_scr, *,
                        H, W, is_res):
    # x_ref:    (1, Cin, H*W)   one sample, channel-major, flat pixels (row-major)
    # w*_ref:   (9, Cout, C)    bf16 conv weights, tap index = dy*3 + dx
    # a*_ref:   (Cout, 3)       f32 columns = [conv bias, GN gamma, GN beta]
    # memb:     (Cout, G) one-hot channel->group; membT: (G, Cout)
    # masks:    (2, H*W)        [x != 0 mask, x != W-1 mask]
    # o_ref:    (1, Cout, H*W)
    # h_scr:    VMEM (Cout, H*W) f32 scratch holding the block-1 output
    HW = H * W
    Cout = o_ref.shape[1]
    cpg = Cout // NUM_GROUPS
    inv_count = 1.0 / float(HW * cpg)

    memb = memb_ref[...]                      # (Cout, G)
    membT = membT_ref[...]                    # (G, Cout)
    masks = masks_ref[...]                    # (2, HW)
    mask_l = masks[0:1, :]                    # valid where x != 0
    mask_r = masks[1:2, :]                    # valid where x != W-1

    def shift_pix(v, off):
        # out[:, p] = v[:, p + off], zero-filled outside [0, HW).
        if off == 0:
            return v
        c = v.shape[0]
        z = jnp.zeros((c, abs(off)), v.dtype)
        if off > 0:
            return jnp.concatenate([v[:, off:], z], axis=1)
        return jnp.concatenate([z, v[:, :HW + off]], axis=1)

    def conv_gn_relu(x, w_ref, aff_ref):
        # x: (C, HW) f32 ; returns (Cout, HW) f32 (post conv+GN+ReLU).
        aff = aff_ref[...]                                    # (Cout, 3) f32
        # dx taps: source columns x-1 / x / x+1, masked at the image edges,
        # cast once to bf16 for the MXU.
        taps = [
            (shift_pix(x, -1) * mask_l).astype(jnp.bfloat16),
            x.astype(jnp.bfloat16),
            (shift_pix(x, 1) * mask_r).astype(jnp.bfloat16),
        ]
        # 3x3 conv = 9 shifted-slab matmuls accumulated in f32 (no big im2col).
        acc = None
        for dy in range(3):
            oy = (dy - 1) * W                                 # row shift (in pixels)
            for dx in range(3):
                wi = w_ref[dy * 3 + dx]                       # (Cout, C) bf16
                d = jnp.dot(wi, shift_pix(taps[dx], oy),
                            preferred_element_type=jnp.float32)
                acc = d if acc is None else acc + d
        acc = acc + aff[:, 0:1]                               # conv bias

        # GroupNorm(NUM_GROUPS): stats over (channels-in-group, all pixels).
        s1 = jnp.sum(acc, axis=1, keepdims=True)              # (Cout, 1)
        s2 = jnp.sum(acc * acc, axis=1, keepdims=True)        # (Cout, 1)
        grp = jnp.dot(membT, jnp.concatenate([s1, s2], axis=1),
                      preferred_element_type=jnp.float32)     # (G, 2)
        mean_g = grp[:, 0:1] * inv_count
        var_g = jnp.maximum(grp[:, 1:2] * inv_count - mean_g * mean_g, 0.0)
        scale_g = lax.rsqrt(var_g + GN_EPS)
        per_ch = jnp.dot(memb, jnp.concatenate([mean_g, scale_g], axis=1),
                         preferred_element_type=jnp.float32)  # (Cout, 2)
        y = (acc - per_ch[:, 0:1]) * (per_ch[:, 1:2] * aff[:, 1:2]) + aff[:, 2:3]
        return jnp.maximum(y, 0.0)                            # ReLU

    x = x_ref[0]                                              # (Cin, HW) f32
    h_scr[...] = conv_gn_relu(x, w1_ref, a1_ref)              # self.main(x)
    y = conv_gn_relu(h_scr[...], w2_ref, a2_ref)              # self.conv[0:3]
    y = conv_gn_relu(y, w3_ref, a3_ref)                       # self.conv[3:6]
    if is_res:
        y = (h_scr[...] + y) * (1.0 / 1.414)
    o_ref[...] = y.reshape(1, Cout, HW)


def conv3_pallas(x_flat, params, is_res, H, W):
    """x_flat: (N, Cin, H*W) f32; params[block] = (w (9, Cout, C) bf16, aff (Cout, 3) f32)."""
    N, Cin, HW = x_flat.shape
    w1, a1 = params["main"]
    w2, a2 = params["conv1"]
    w3, a3 = params["conv2"]
    Cout = w1.shape[1]
    cpg = Cout // NUM_GROUPS

    ch = jnp.arange(Cout, dtype=jnp.int32)
    memb = (ch[:, None] // cpg ==
            jnp.arange(NUM_GROUPS, dtype=jnp.int32)[None, :]).astype(jnp.float32)
    membT = memb.T

    # Left/right image-edge masks on the flattened (row-major) pixel axis.
    xcol = jnp.arange(HW, dtype=jnp.int32) % W
    masks = jnp.stack([(xcol != 0), (xcol != W - 1)], axis=0).astype(jnp.float32)

    kernel = functools.partial(_conv3_fused_kernel, H=H, W=W, is_res=is_res)
    c2 = lambda n: (0, 0)
    c3 = lambda n: (0, 0, 0)

    return pl.pallas_call(
        kernel,
        out_shape=jax.ShapeDtypeStruct((N, Cout, HW), jnp.float32),
        grid_spec=pltpu.PrefetchScalarGridSpec(
            num_scalar_prefetch=0,
            grid=(N,),
            in_specs=[
                pl.BlockSpec((1, Cin, HW), lambda n: (n, 0, 0)),
                pl.BlockSpec(w1.shape, c3),
                pl.BlockSpec(a1.shape, c2),
                pl.BlockSpec(w2.shape, c3),
                pl.BlockSpec(a2.shape, c2),
                pl.BlockSpec(w3.shape, c3),
                pl.BlockSpec(a3.shape, c2),
                pl.BlockSpec(memb.shape, c2),
                pl.BlockSpec(membT.shape, c2),
                pl.BlockSpec(masks.shape, c2),
            ],
            out_specs=pl.BlockSpec((1, Cout, HW), lambda n: (n, 0, 0)),
            scratch_shapes=[pltpu.VMEM((Cout, HW), jnp.float32)],
        ),
        compiler_params=pltpu.CompilerParams(
            dimension_semantics=("parallel",),
            vmem_limit_bytes=48 * 1024 * 1024,
        ),
    )(x_flat, w1, a1, w2, a2, w3, a3, memb, membT, masks)


def init_block_params(key, cin, cout):
    """Conv2d(3x3) + GroupNorm params in kernel layout."""
    kw, kb, kg, kbe = jax.random.split(key, 4)
    fan_in = cin * 9
    bound = 1.0 / (fan_in ** 0.5)
    # PyTorch conv weight (Cout, Cin, 3, 3) -> (dy, dx, Cout, Cin) -> (9, Cout, Cin) bf16
    w_torch = jax.random.uniform(kw, (cout, cin, 3, 3), jnp.float32, -bound, bound)
    w = jnp.transpose(w_torch, (2, 3, 0, 1)).reshape(9, cout, cin).astype(jnp.bfloat16)
    b = jax.random.uniform(kb, (cout,), jnp.float32, -bound, bound)
    gamma = 1.0 + 0.05 * jax.random.normal(kg, (cout,), jnp.float32)
    beta = 0.05 * jax.random.normal(kbe, (cout,), jnp.float32)
    aff = jnp.stack([b, gamma, beta], axis=1)   # (Cout, 3)
    return (w, aff)


def init_conv3_params(key, in_channels, out_channels):
    assert out_channels % NUM_GROUPS == 0
    k1, k2, k3 = jax.random.split(key, 3)
    return {
        "main": init_block_params(k1, in_channels, out_channels),
        "conv1": init_block_params(k2, out_channels, out_channels),
        "conv2": init_block_params(k3, out_channels, out_channels),
    }


@functools.partial(jax.jit, static_argnames=("is_res",))
def conv3_forward(x_nchw, params, is_res=False):
    N, Cin, H, W = x_nchw.shape
    x = x_nchw.reshape(N, Cin, H * W).astype(jnp.float32)   # free reshape, stays NCHW
    out = conv3_pallas(x, params, is_res, H, W)
    return out.reshape(N, out.shape[1], H, W)


# ---------------- pure-JAX reference (for numerical validation) ----------------
def _ref_block(x_nchw, w, aff):
    cout = w.shape[1]
    cin = w.shape[2]
    # (9, Cout, Cin) [dy*3+dx, co, ci] -> OIHW (co, ci, dy, dx)
    w_oihw = jnp.transpose(w.astype(jnp.float32).reshape(3, 3, cout, cin), (2, 3, 0, 1))
    y = lax.conv_general_dilated(
        x_nchw, w_oihw, window_strides=(1, 1), padding="SAME",
        dimension_numbers=("NCHW", "OIHW", "NCHW"),
        precision=lax.Precision.HIGHEST)
    y = y + aff[:, 0].reshape(1, cout, 1, 1)
    n, c, hh, ww = y.shape
    cpg = c // NUM_GROUPS
    yg = y.reshape(n, NUM_GROUPS, cpg, hh * ww)
    mean = yg.mean(axis=(2, 3), keepdims=True)
    var = ((yg - mean) ** 2).mean(axis=(2, 3), keepdims=True)
    yn = ((yg - mean) / jnp.sqrt(var + GN_EPS)).reshape(n, c, hh, ww)
    return jnp.maximum(yn * aff[:, 1].reshape(1, c, 1, 1)
                       + aff[:, 2].reshape(1, c, 1, 1), 0.0)


def conv3_reference(x_nchw, params, is_res=False):
    x = x_nchw.astype(jnp.float32)
    h = _ref_block(x, *params["main"])
    y = _ref_block(_ref_block(h, *params["conv1"]), *params["conv2"])
    return (h + y) / 1.414 if is_res else y


if __name__ == "__main__":
    key = jax.random.PRNGKey(0)
    kx, kp = jax.random.split(key)

    batch, in_channels, out_channels, hw = 2, 4, 8, 16  # out_channels % 8 == 0 for GroupNorm(8)
    x = jax.random.normal(kx, (batch, in_channels, hw, hw), jnp.float32)  # NCHW
    params = init_conv3_params(kp, in_channels, out_channels)

    out_plain = conv3_forward(x, params, is_res=False)
    out_res = conv3_forward(x, params, is_res=True)
    jax.block_until_ready(out_plain)
    jax.block_until_ready(out_res)

    assert out_plain.shape == (batch, out_channels, hw, hw)
    assert out_res.shape == (batch, out_channels, hw, hw)

    ref_plain = conv3_reference(x, params, is_res=False)
    ref_res = conv3_reference(x, params, is_res=True)
    assert jnp.allclose(out_plain, ref_plain, atol=2e-2, rtol=2e-2), \
        float(jnp.max(jnp.abs(out_plain - ref_plain)))
    assert jnp.allclose(out_res, ref_res, atol=2e-2, rtol=2e-2), \
        float(jnp.max(jnp.abs(out_res - ref_res)))

    print("KERNEL_OK")
</pallas_src>

<mosaic_0001>
module attributes {stable_mosaic.version = 11 : i64} {
  func.func @_conv3_fused_kernel(%arg0: i32, %arg1: memref<1x4x256xf32, #tpu.memory_space<vmem>>, %arg2: memref<9x8x4xbf16, #tpu.memory_space<vmem>>, %arg3: memref<8x3xf32, #tpu.memory_space<vmem>>, %arg4: memref<9x8x8xbf16, #tpu.memory_space<vmem>>, %arg5: memref<8x3xf32, #tpu.memory_space<vmem>>, %arg6: memref<9x8x8xbf16, #tpu.memory_space<vmem>>, %arg7: memref<8x3xf32, #tpu.memory_space<vmem>>, %arg8: memref<8x8xf32, #tpu.memory_space<vmem>>, %arg9: memref<8x8xf32, #tpu.memory_space<vmem>>, %arg10: memref<2x256xf32, #tpu.memory_space<vmem>>, %arg11: memref<1x8x256xf32, #tpu.memory_space<vmem>>, %arg12: memref<8x256xf32, #tpu.memory_space<vmem>>) attributes {dimension_semantics = [#tpu.dimension_semantics<parallel>], iteration_bounds = array<i64: 2>, scalar_prefetch = 0 : i64, scratch_operands = 1 : i64, tpu.core_type = #tpu.core_type<tc>, window_params = [{transform_indices = @transform_0, window_bounds = array<i64: 1, 4, 256>}, {pipeline_mode = #tpu.pipeline_mode<synchronous>, transform_indices = @transform_1, window_bounds = array<i64: 9, 8, 4>}, {pipeline_mode = #tpu.pipeline_mode<synchronous>, transform_indices = @transform_2, window_bounds = array<i64: 8, 3>}, {pipeline_mode = #tpu.pipeline_mode<synchronous>, transform_indices = @transform_3, window_bounds = array<i64: 9, 8, 8>}, {pipeline_mode = #tpu.pipeline_mode<synchronous>, transform_indices = @transform_4, window_bounds = array<i64: 8, 3>}, {pipeline_mode = #tpu.pipeline_mode<synchronous>, transform_indices = @transform_5, window_bounds = array<i64: 9, 8, 8>}, {pipeline_mode = #tpu.pipeline_mode<synchronous>, transform_indices = @transform_6, window_bounds = array<i64: 8, 3>}, {pipeline_mode = #tpu.pipeline_mode<synchronous>, transform_indices = @transform_7, window_bounds = array<i64: 8, 8>}, {pipeline_mode = #tpu.pipeline_mode<synchronous>, transform_indices = @transform_8, window_bounds = array<i64: 8, 8>}, {pipeline_mode = #tpu.pipeline_mode<synchronous>, transform_indices = @transform_9, window_bounds = array<i64: 2, 256>}, {transform_indices = @transform_10, window_bounds = array<i64: 1, 8, 256>}]} {
    %c0 = arith.constant 0 : index
    %c0_0 = arith.constant 0 : index
    %0 = vector.load %arg8[%c0, %c0_0] : memref<8x8xf32, #tpu.memory_space<vmem>>, vector<8x8xf32>
    %c0_1 = arith.constant 0 : index
    %c0_2 = arith.constant 0 : index
    %1 = vector.load %arg9[%c0_1, %c0_2] : memref<8x8xf32, #tpu.memory_space<vmem>>, vector<8x8xf32>
    %c0_3 = arith.constant 0 : index
    %c0_4 = arith.constant 0 : index
    %2 = vector.load %arg10[%c0_3, %c0_4] : memref<2x256xf32, #tpu.memory_space<vmem>>, vector<2x256xf32>
    %3 = vector.extract_strided_slice %2 {offsets = [0, 0], sizes = [1, 256], strides = [1, 1]} : vector<2x256xf32> to vector<1x256xf32>
    %4 = vector.extract_strided_slice %2 {offsets = [1, 0], sizes = [1, 256], strides = [1, 1]} : vector<2x256xf32> to vector<1x256xf32>
    %c0_5 = arith.constant 0 : index
    %c0_6 = arith.constant 0 : index
    %c0_7 = arith.constant 0 : index
    %5 = vector.load %arg1[%c0_5, %c0_6, %c0_7] : memref<1x4x256xf32, #tpu.memory_space<vmem>>, vector<1x4x256xf32>
    %6 = vector.shape_cast %5 : vector<1x4x256xf32> to vector<4x256xf32>
    %c0_8 = arith.constant 0 : index
    %c0_9 = arith.constant 0 : index
    %7 = vector.load %arg3[%c0_8, %c0_9] : memref<8x3xf32, #tpu.memory_space<vmem>>, vector<8x3xf32>
    %cst = arith.constant 0.000000e+00 : f32
    %8 = vector.broadcast %cst : f32 to vector<4x1xf32>
    %9 = vector.extract_strided_slice %6 {offsets = [0, 0], sizes = [4, 255], strides = [1, 1]} : vector<4x256xf32> to vector<4x255xf32>
    %10 = tpu.concatenate %8, %9 in 1 : vector<4x1xf32>, vector<4x255xf32> -> vector<4x256xf32>
    %11 = vector.broadcast %3 : vector<1x256xf32> to vector<4x256xf32>
    %12 = arith.mulf %10, %11 : vector<4x256xf32>
    %13 = arith.truncf %12 : vector<4x256xf32> to vector<4x256xbf16>
    %14 = arith.truncf %6 : vector<4x256xf32> to vector<4x256xbf16>
    %cst_10 = arith.constant 0.000000e+00 : f32
    %15 = vector.broadcast %cst_10 : f32 to vector<4x1xf32>
    %16 = vector.extract_strided_slice %6 {offsets = [0, 1], sizes = [4, 255], strides = [1, 1]} : vector<4x256xf32> to vector<4x255xf32>
    %17 = tpu.concatenate %16, %15 in 1 : vector<4x255xf32>, vector<4x1xf32> -> vector<4x256xf32>
    %18 = vector.broadcast %4 : vector<1x256xf32> to vector<4x256xf32>
    %19 = arith.mulf %17, %18 : vector<4x256xf32>
    %20 = arith.truncf %19 : vector<4x256xf32> to vector<4x256xbf16>
    %c0_11 = arith.constant 0 : index
    %c0_12 = arith.constant 0 : index
    %c0_13 = arith.constant 0 : index
    %21 = vector.load %arg2[%c0_11, %c0_12, %c0_13] : memref<9x8x4xbf16, #tpu.memory_space<vmem>>, vector<1x8x4xbf16>
    %22 = vector.shape_cast %21 : vector<1x8x4xbf16> to vector<8x4xbf16>
    %cst_14 = arith.constant 0.000000e+00 : bf16
    %23 = vector.broadcast %cst_14 : bf16 to vector<4x16xbf16>
    %24 = vector.extract_strided_slice %13 {offsets = [0, 0], sizes = [4, 240], strides = [1, 1]} : vector<4x256xbf16> to vector<4x240xbf16>
    %25 = tpu.concatenate %23, %24 in 1 : vector<4x16xbf16>, vector<4x240xbf16> -> vector<4x256xbf16>
    %cst_15 = arith.constant dense<0.000000e+00> : vector<8x256xf32>
    %26 = tpu.matmul %22, %25, %cst_15 {dimension_numbers = #tpu.dot_dimension_numbers<[1], [0], [0], [1], [0, 0, 1, 1], [], []>} : vector<8x4xbf16>, vector<4x256xbf16>, vector<8x256xf32> -> vector<8x256xf32>
    %c1 = arith.constant 1 : index
    %c0_16 = arith.constant 0 : index
    %c0_17 = arith.constant 0 : index
    %27 = vector.load %arg2[%c1, %c0_16, %c0_17] : memref<9x8x4xbf16, #tpu.memory_space<vmem>>, vector<1x8x4xbf16>
    %28 = vector.shape_cast %27 : vector<1x8x4xbf16> to vector<8x4xbf16>
    %cst_18 = arith.constant 0.000000e+00 : bf16
    %29 = vector.broadcast %cst_18 : bf16 to vector<4x16xbf16>
    %30 = vector.extract_strided_slice %14 {offsets = [0, 0], sizes = [4, 240], strides = [1, 1]} : vector<4x256xbf16> to vector<4x240xbf16>
    %31 = tpu.concatenate %29, %30 in 1 : vector<4x16xbf16>, vector<4x240xbf16> -> vector<4x256xbf16>
    %cst_19 = arith.constant dense<0.000000e+00> : vector<8x256xf32>
    %32 = tpu.matmul %28, %31, %cst_19 {dimension_numbers = #tpu.dot_dimension_numbers<[1], [0], [0], [1], [0, 0, 1, 1], [], []>} : vector<8x4xbf16>, vector<4x256xbf16>, vector<8x256xf32> -> vector<8x256xf32>
    %33 = arith.addf %26, %32 : vector<8x256xf32>
    %c2 = arith.constant 2 : index
    %c0_20 = arith.constant 0 : index
    %c0_21 = arith.constant 0 : index
    %34 = vector.load %arg2[%c2, %c0_20, %c0_21] : memref<9x8x4xbf16, #tpu.memory_space<vmem>>, vector<1x8x4xbf16>
    %35 = vector.shape_cast %34 : vector<1x8x4xbf16> to vector<8x4xbf16>
    %cst_22 = arith.constant 0.000000e+00 : bf16
    %36 = vector.broadcast %cst_22 : bf16 to vector<4x16xbf16>
    %37 = vector.extract_strided_slice %20 {offsets = [0, 0], sizes = [4, 240], strides = [1, 1]} : vector<4x256xbf16> to vector<4x240xbf16>
    %38 = tpu.concatenate %36, %37 in 1 : vector<4x16xbf16>, vector<4x240xbf16> -> vector<4x256xbf16>
    %cst_23 = arith.constant dense<0.000000e+00> : vector<8x256xf32>
    %39 = tpu.matmul %35, %38, %cst_23 {dimension_numbers = #tpu.dot_dimension_numbers<[1], [0], [0], [1], [0, 0, 1, 1], [], []>} : vector<8x4xbf16>, vector<4x256xbf16>, vector<8x256xf32> -> vector<8x256xf32>
    %40 = arith.addf %33, %39 : vector<8x256xf32>
    %c3 = arith.constant 3 : index
    %c0_24 = arith.constant 0 : index
    %c0_25 = arith.constant 0 : index
    %41 = vector.load %arg2[%c3, %c0_24, %c0_25] : memref<9x8x4xbf16, #tpu.memory_space<vmem>>, vector<1x8x4xbf16>
    %42 = vector.shape_cast %41 : vector<1x8x4xbf16> to vector<8x4xbf16>
    %cst_26 = arith.constant dense<0.000000e+00> : vector<8x256xf32>
    %43 = tpu.matmul %42, %13, %cst_26 {dimension_numbers = #tpu.dot_dimension_numbers<[1], [0], [0], [1], [0, 0, 1, 1], [], []>} : vector<8x4xbf16>, vector<4x256xbf16>, vector<8x256xf32> -> vector<8x256xf32>
    %44 = arith.addf %40, %43 : vector<8x256xf32>
    %c4 = arith.constant 4 : index
    %c0_27 = arith.constant 0 : index
    %c0_28 = arith.constant 0 : index
    %45 = vector.load %arg2[%c4, %c0_27, %c0_28] : memref<9x8x4xbf16, #tpu.memory_space<vmem>>, vector<1x8x4xbf16>
    %46 = vector.shape_cast %45 : vector<1x8x4xbf16> to vector<8x4xbf16>
    %cst_29 = arith.constant dense<0.000000e+00> : vector<8x256xf32>
    %47 = tpu.matmul %46, %14, %cst_29 {dimension_numbers = #tpu.dot_dimension_numbers<[1], [0], [0], [1], [0, 0, 1, 1], [], []>} : vector<8x4xbf16>, vector<4x256xbf16>, vector<8x256xf32> -> vector<8x256xf32>
    %48 = arith.addf %44, %47 : vector<8x256xf32>
    %c5 = arith.constant 5 : index
    %c0_30 = arith.constant 0 : index
    %c0_31 = arith.constant 0 : index
    %49 = vector.load %arg2[%c5, %c0_30, %c0_31] : memref<9x8x4xbf16, #tpu.memory_space<vmem>>, vector<1x8x4xbf16>
    %50 = vector.shape_cast %49 : vector<1x8x4xbf16> to vector<8x4xbf16>
    %cst_32 = arith.constant dense<0.000000e+00> : vector<8x256xf32>
    %51 = tpu.matmul %50, %20, %cst_32 {dimension_numbers = #tpu.dot_dimension_numbers<[1], [0], [0], [1], [0, 0, 1, 1], [], []>} : vector<8x4xbf16>, vector<4x256xbf16>, vector<8x256xf32> -> vector<8x256xf32>
    %52 = arith.addf %48, %51 : vector<8x256xf32>
    %c6 = arith.constant 6 : index
    %c0_33 = arith.constant 0 : index
    %c0_34 = arith.constant 0 : index
    %53 = vector.load %arg2[%c6, %c0_33, %c0_34] : memref<9x8x4xbf16, #tpu.memory_space<vmem>>, vector<1x8x4xbf16>
    %54 = vector.shape_cast %53 : vector<1x8x4xbf16> to vector<8x4xbf16>
    %cst_35 = arith.constant 0.000000e+00 : bf16
    %55 = vector.broadcast %cst_35 : bf16 to vector<4x16xbf16>
    %56 = vector.extract_strided_slice %13 {offsets = [0, 16], sizes = [4, 240], strides = [1, 1]} : vector<4x256xbf16> to vector<4x240xbf16>
    %57 = tpu.concatenate %56, %55 in 1 : vector<4x240xbf16>, vector<4x16xbf16> -> vector<4x256xbf16>
    %cst_36 = arith.constant dense<0.000000e+00> : vector<8x256xf32>
    %58 = tpu.matmul %54, %57, %cst_36 {dimension_numbers = #tpu.dot_dimension_numbers<[1], [0], [0], [1], [0, 0, 1, 1], [], []>} : vector<8x4xbf16>, vector<4x256xbf16>, vector<8x256xf32> -> vector<8x256xf32>
    %59 = arith.addf %52, %58 : vector<8x256xf32>
    %c7 = arith.constant 7 : index
    %c0_37 = arith.constant 0 : index
    %c0_38 = arith.constant 0 : index
    %60 = vector.load %arg2[%c7, %c0_37, %c0_38] : memref<9x8x4xbf16, #tpu.memory_space<vmem>>, vector<1x8x4xbf16>
    %61 = vector.shape_cast %60 : vector<1x8x4xbf16> to vector<8x4xbf16>
    %cst_39 = arith.constant 0.000000e+00 : bf16
    %62 = vector.broadcast %cst_39 : bf16 to vector<4x16xbf16>
    %63 = vector.extract_strided_slice %14 {offsets = [0, 16], sizes = [4, 240], strides = [1, 1]} : vector<4x256xbf16> to vector<4x240xbf16>
    %64 = tpu.concatenate %63, %62 in 1 : vector<4x240xbf16>, vector<4x16xbf16> -> vector<4x256xbf16>
    %cst_40 = arith.constant dense<0.000000e+00> : vector<8x256xf32>
    %65 = tpu.matmul %61, %64, %cst_40 {dimension_numbers = #tpu.dot_dimension_numbers<[1], [0], [0], [1], [0, 0, 1, 1], [], []>} : vector<8x4xbf16>, vector<4x256xbf16>, vector<8x256xf32> -> vector<8x256xf32>
    %66 = arith.addf %59, %65 : vector<8x256xf32>
    %c8 = arith.constant 8 : index
    %c0_41 = arith.constant 0 : index
    %c0_42 = arith.constant 0 : index
    %67 = vector.load %arg2[%c8, %c0_41, %c0_42] : memref<9x8x4xbf16, #tpu.memory_space<vmem>>, vector<1x8x4xbf16>
    %68 = vector.shape_cast %67 : vector<1x8x4xbf16> to vector<8x4xbf16>
    %cst_43 = arith.constant 0.000000e+00 : bf16
    %69 = vector.broadcast %cst_43 : bf16 to vector<4x16xbf16>
    %70 = vector.extract_strided_slice %20 {offsets = [0, 16], sizes = [4, 240], strides = [1, 1]} : vector<4x256xbf16> to vector<4x240xbf16>
    %71 = tpu.concatenate %70, %69 in 1 : vector<4x240xbf16>, vector<4x16xbf16> -> vector<4x256xbf16>
    %cst_44 = arith.constant dense<0.000000e+00> : vector<8x256xf32>
    %72 = tpu.matmul %68, %71, %cst_44 {dimension_numbers = #tpu.dot_dimension_numbers<[1], [0], [0], [1], [0, 0, 1, 1], [], []>} : vector<8x4xbf16>, vector<4x256xbf16>, vector<8x256xf32> -> vector<8x256xf32>
    %73 = arith.addf %66, %72 : vector<8x256xf32>
    %74 = vector.extract_strided_slice %7 {offsets = [0, 0], sizes = [8, 1], strides = [1, 1]} : vector<8x3xf32> to vector<8x1xf32>
    %75 = vector.broadcast %74 : vector<8x1xf32> to vector<8x256xf32>
    %76 = arith.addf %73, %75 : vector<8x256xf32>
    %cst_45 = arith.constant dense<0.000000e+00> : vector<8xf32>
    %77 = vector.multi_reduction <add>, %76, %cst_45 [1] : vector<8x256xf32> to vector<8xf32>
    %78 = vector.shape_cast %77 : vector<8xf32> to vector<8x1xf32>
    %79 = arith.mulf %76, %76 : vector<8x256xf32>
    %cst_46 = arith.constant dense<0.000000e+00> : vector<8xf32>
    %80 = vector.multi_reduction <add>, %79, %cst_46 [1] : vector<8x256xf32> to vector<8xf32>
    %81 = vector.shape_cast %80 : vector<8xf32> to vector<8x1xf32>
    %82 = tpu.concatenate %78, %81 in 1 : vector<8x1xf32>, vector<8x1xf32> -> vector<8x2xf32>
    %cst_47 = arith.constant dense<0.000000e+00> : vector<8x2xf32>
    %83 = tpu.matmul %1, %82, %cst_47 {dimension_numbers = #tpu.dot_dimension_numbers<[1], [0], [0], [1], [0, 0, 1, 1], [], []>} : vector<8x8xf32>, vector<8x2xf32>, vector<8x2xf32> -> vector<8x2xf32>
    %84 = vector.extract_strided_slice %83 {offsets = [0, 0], sizes = [8, 1], strides = [1, 1]} : vector<8x2xf32> to vector<8x1xf32>
    %cst_48 = arith.constant 3.906250e-03 : f32
    %85 = vector.broadcast %cst_48 : f32 to vector<8x1xf32>
    %86 = arith.mulf %84, %85 : vector<8x1xf32>
    %87 = vector.extract_strided_slice %83 {offsets = [0, 1], sizes = [8, 1], strides = [1, 1]} : vector<8x2xf32> to vector<8x1xf32>
    %cst_49 = arith.constant 3.906250e-03 : f32
    %88 = vector.broadcast %cst_49 : f32 to vector<8x1xf32>
    %89 = arith.mulf %87, %88 : vector<8x1xf32>
    %90 = arith.mulf %86, %86 : vector<8x1xf32>
    %91 = arith.subf %89, %90 : vector<8x1xf32>
    %cst_50 = arith.constant 0.000000e+00 : f32
    %92 = vector.broadcast %cst_50 : f32 to vector<8x1xf32>
    %93 = arith.maximumf %91, %92 : vector<8x1xf32>
    %cst_51 = arith.constant 9.99999974E-6 : f32
    %94 = vector.broadcast %cst_51 : f32 to vector<8x1xf32>
    %95 = arith.addf %93, %94 : vector<8x1xf32>
    %96 = math.rsqrt %95 : vector<8x1xf32>
    %97 = tpu.concatenate %86, %96 in 1 : vector<8x1xf32>, vector<8x1xf32> -> vector<8x2xf32>
    %cst_52 = arith.constant dense<0.000000e+00> : vector<8x2xf32>
    %98 = tpu.matmul %0, %97, %cst_52 {dimension_numbers = #tpu.dot_dimension_numbers<[1], [0], [0], [1], [0, 0, 1, 1], [], []>} : vector<8x8xf32>, vector<8x2xf32>, vector<8x2xf32> -> vector<8x2xf32>
    %99 = vector.extract_strided_slice %98 {offsets = [0, 0], sizes = [8, 1], strides = [1, 1]} : vector<8x2xf32> to vector<8x1xf32>
    %100 = vector.broadcast %99 : vector<8x1xf32> to vector<8x256xf32>
    %101 = arith.subf %76, %100 : vector<8x256xf32>
    %102 = vector.extract_strided_slice %98 {offsets = [0, 1], sizes = [8, 1], strides = [1, 1]} : vector<8x2xf32> to vector<8x1xf32>
    %103 = vector.extract_strided_slice %7 {offsets = [0, 1], sizes = [8, 1], strides = [1, 1]} : vector<8x3xf32> to vector<8x1xf32>
    %104 = arith.mulf %102, %103 : vector<8x1xf32>
    %105 = vector.broadcast %104 : vector<8x1xf32> to vector<8x256xf32>
    %106 = arith.mulf %101, %105 : vector<8x256xf32>
    %107 = vector.extract_strided_slice %7 {offsets = [0, 2], sizes = [8, 1], strides = [1, 1]} : vector<8x3xf32> to vector<8x1xf32>
    %108 = vector.broadcast %107 : vector<8x1xf32> to vector<8x256xf32>
    %109 = arith.addf %106, %108 : vector<8x256xf32>
    %cst_53 = arith.constant 0.000000e+00 : f32
    %110 = vector.broadcast %cst_53 : f32 to vector<8x256xf32>
    %111 = arith.maximumf %109, %110 : vector<8x256xf32>
    %c0_54 = arith.constant 0 : index
    %c0_55 = arith.constant 0 : index
    %112 = vector.load %arg12[%c0_54, %c0_55] : memref<8x256xf32, #tpu.memory_space<vmem>>, vector<8x256xf32>
    tpu.vector_store %arg12[%c0_54, %c0_55], %111 {strides = array<i32>} : memref<8x256xf32, #tpu.memory_space<vmem>>, vector<8x256xf32>,
    %c0_56 = arith.constant 0 : index
    %c0_57 = arith.constant 0 : index
    %113 = vector.load %arg12[%c0_56, %c0_57] : memref<8x256xf32, #tpu.memory_space<vmem>>, vector<8x256xf32>
    %c0_58 = arith.constant 0 : index
    %c0_59 = arith.constant 0 : index
    %114 = vector.load %arg5[%c0_58, %c0_59] : memref<8x3xf32, #tpu.memory_space<vmem>>, vector<8x3xf32>
    %cst_60 = arith.constant 0.000000e+00 : f32
    %115 = vector.broadcast %cst_60 : f32 to vector<8x1xf32>
    %116 = vector.extract_strided_slice %113 {offsets = [0, 0], sizes = [8, 255], strides = [1, 1]} : vector<8x256xf32> to vector<8x255xf32>
    %117 = tpu.concatenate %115, %116 in 1 : vector<8x1xf32>, vector<8x255xf32> -> vector<8x256xf32>
    %118 = vector.broadcast %3 : vector<1x256xf32> to vector<8x256xf32>
    %119 = arith.mulf %117, %118 : vector<8x256xf32>
    %120 = arith.truncf %119 : vector<8x256xf32> to vector<8x256xbf16>
    %121 = arith.truncf %113 : vector<8x256xf32> to vector<8x256xbf16>
    %cst_61 = arith.constant 0.000000e+00 : f32
    %122 = vector.broadcast %cst_61 : f32 to vector<8x1xf32>
    %123 = vector.extract_strided_slice %113 {offsets = [0, 1], sizes = [8, 255], strides = [1, 1]} : vector<8x256xf32> to vector<8x255xf32>
    %124 = tpu.concatenate %123, %122 in 1 : vector<8x255xf32>, vector<8x1xf32> -> vector<8x256xf32>
    %125 = vector.broadcast %4 : vector<1x256xf32> to vector<8x256xf32>
    %126 = arith.mulf %124, %125 : vector<8x256xf32>
    %127 = arith.truncf %126 : vector<8x256xf32> to vector<8x256xbf16>
    %c0_62 = arith.constant 0 : index
    %c0_63 = arith.constant 0 : index
    %c0_64 = arith.constant 0 : index
    %128 = vector.load %arg4[%c0_62, %c0_63, %c0_64] : memref<9x8x8xbf16, #tpu.memory_space<vmem>>, vector<1x8x8xbf16>
    %129 = vector.shape_cast %128 : vector<1x8x8xbf16> to vector<8x8xbf16>
    %cst_65 = arith.constant 0.000000e+00 : bf16
    %130 = vector.broadcast %cst_65 : bf16 to vector<8x16xbf16>
    %131 = vector.extract_strided_slice %120 {offsets = [0, 0], sizes = [8, 240], strides = [1, 1]} : vector<8x256xbf16> to vector<8x240xbf16>
    %132 = tpu.concatenate %130, %131 in 1 : vector<8x16xbf16>, vector<8x240xbf16> -> vector<8x256xbf16>
    %cst_66 = arith.constant dense<0.000000e+00> : vector<8x256xf32>
    %133 = tpu.matmul %129, %132, %cst_66 {dimension_numbers = #tpu.dot_dimension_numbers<[1], [0], [0], [1], [0, 0, 1, 1], [], []>} : vector<8x8xbf16>, vector<8x256xbf16>, vector<8x256xf32> -> vector<8x256xf32>
    %c1_67 = arith.constant 1 : index
    %c0_68 = arith.constant 0 : index
    %c0_69 = arith.constant 0 : index
    %134 = vector.load %arg4[%c1_67, %c0_68, %c0_69] : memref<9x8x8xbf16, #tpu.memory_space<vmem>>, vector<1x8x8xbf16>
    %135 = vector.shape_cast %134 : vector<1x8x8xbf16> to vector<8x8xbf16>
    %cst_70 = arith.constant 0.000000e+00 : bf16
    %136 = vector.broadcast %cst_70 : bf16 to vector<8x16xbf16>
    %137 = vector.extract_strided_slice %121 {offsets = [0, 0], sizes = [8, 240], strides = [1, 1]} : vector<8x256xbf16> to vector<8x240xbf16>
    %138 = tpu.concatenate %136, %137 in 1 : vector<8x16xbf16>, vector<8x240xbf16> -> vector<8x256xbf16>
    %cst_71 = arith.constant dense<0.000000e+00> : vector<8x256xf32>
    %139 = tpu.matmul %135, %138, %cst_71 {dimension_numbers = #tpu.dot_dimension_numbers<[1], [0], [0], [1], [0, 0, 1, 1], [], []>} : vector<8x8xbf16>, vector<8x256xbf16>, vector<8x256xf32> -> vector<8x256xf32>
    %140 = arith.addf %133, %139 : vector<8x256xf32>
    %c2_72 = arith.constant 2 : index
    %c0_73 = arith.constant 0 : index
    %c0_74 = arith.constant 0 : index
    %141 = vector.load %arg4[%c2_72, %c0_73, %c0_74] : memref<9x8x8xbf16, #tpu.memory_space<vmem>>, vector<1x8x8xbf16>
    %142 = vector.shape_cast %141 : vector<1x8x8xbf16> to vector<8x8xbf16>
    %cst_75 = arith.constant 0.000000e+00 : bf16
    %143 = vector.broadcast %cst_75 : bf16 to vector<8x16xbf16>
    %144 = vector.extract_strided_slice %127 {offsets = [0, 0], sizes = [8, 240], strides = [1, 1]} : vector<8x256xbf16> to vector<8x240xbf16>
    %145 = tpu.concatenate %143, %144 in 1 : vector<8x16xbf16>, vector<8x240xbf16> -> vector<8x256xbf16>
    %cst_76 = arith.constant dense<0.000000e+00> : vector<8x256xf32>
    %146 = tpu.matmul %142, %145, %cst_76 {dimension_numbers = #tpu.dot_dimension_numbers<[1], [0], [0], [1], [0, 0, 1, 1], [], []>} : vector<8x8xbf16>, vector<8x256xbf16>, vector<8x256xf32> -> vector<8x256xf32>
    %147 = arith.addf %140, %146 : vector<8x256xf32>
    %c3_77 = arith.constant 3 : index
    %c0_78 = arith.constant 0 : index
    %c0_79 = arith.constant 0 : index
    %148 = vector.load %arg4[%c3_77, %c0_78, %c0_79] : memref<9x8x8xbf16, #tpu.memory_space<vmem>>, vector<1x8x8xbf16>
    %149 = vector.shape_cast %148 : vector<1x8x8xbf16> to vector<8x8xbf16>
    %cst_80 = arith.constant dense<0.000000e+00> : vector<8x256xf32>
    %150 = tpu.matmul %149, %120, %cst_80 {dimension_numbers = #tpu.dot_dimension_numbers<[1], [0], [0], [1], [0, 0, 1, 1], [], []>} : vector<8x8xbf16>, vector<8x256xbf16>, vector<8x256xf32> -> vector<8x256xf32>
    %151 = arith.addf %147, %150 : vector<8x256xf32>
    %c4_81 = arith.constant 4 : index
    %c0_82 = arith.constant 0 : index
    %c0_83 = arith.constant 0 : index
    %152 = vector.load %arg4[%c4_81, %c0_82, %c0_83] : memref<9x8x8xbf16, #tpu.memory_space<vmem>>, vector<1x8x8xbf16>
    %153 = vector.shape_cast %152 : vector<1x8x8xbf16> to vector<8x8xbf16>
    %cst_84 = arith.constant dense<0.000000e+00> : vector<8x256xf32>
    %154 = tpu.matmul %153, %121, %cst_84 {dimension_numbers = #tpu.dot_dimension_numbers<[1], [0], [0], [1], [0, 0, 1, 1], [], []>} : vector<8x8xbf16>, vector<8x256xbf16>, vector<8x256xf32> -> vector<8x256xf32>
    %155 = arith.addf %151, %154 : vector<8x256xf32>
    %c5_85 = arith.constant 5 : index
    %c0_86 = arith.constant 0 : index
    %c0_87 = arith.constant 0 : index
    %156 = vector.load %arg4[%c5_85, %c0_86, %c0_87] : memref<9x8x8xbf16, #tpu.memory_space<vmem>>, vector<1x8x8xbf16>
    %157 = vector.shape_cast %156 : vector<1x8x8xbf16> to vector<8x8xbf16>
    %cst_88 = arith.constant dense<0.000000e+00> : vector<8x256xf32>
    %158 = tpu.matmul %157, %127, %cst_88 {dimension_numbers = #tpu.dot_dimension_numbers<[1], [0], [0], [1], [0, 0, 1, 1], [], []>} : vector<8x8xbf16>, vector<8x256xbf16>, vector<8x256xf32> -> vector<8x256xf32>
    %159 = arith.addf %155, %158 : vector<8x256xf32>
    %c6_89 = arith.constant 6 : index
    %c0_90 = arith.constant 0 : index
    %c0_91 = arith.constant 0 : index
    %160 = vector.load %arg4[%c6_89, %c0_90, %c0_91] : memref<9x8x8xbf16, #tpu.memory_space<vmem>>, vector<1x8x8xbf16>
    %161 = vector.shape_cast %160 : vector<1x8x8xbf16> to vector<8x8xbf16>
    %cst_92 = arith.constant 0.000000e+00 : bf16
    %162 = vector.broadcast %cst_92 : bf16 to vector<8x16xbf16>
    %163 = vector.extract_strided_slice %120 {offsets = [0, 16], sizes = [8, 240], strides = [1, 1]} : vector<8x256xbf16> to vector<8x240xbf16>
    %164 = tpu.concatenate %163, %162 in 1 : vector<8x240xbf16>, vector<8x16xbf16> -> vector<8x256xbf16>
    %cst_93 = arith.constant dense<0.000000e+00> : vector<8x256xf32>
    %165 = tpu.matmul %161, %164, %cst_93 {dimension_numbers = #tpu.dot_dimension_numbers<[1], [0], [0], [1], [0, 0, 1, 1], [], []>} : vector<8x8xbf16>, vector<8x256xbf16>, vector<8x256xf32> -> vector<8x256xf32>
    %166 = arith.addf %159, %165 : vector<8x256xf32>
    %c7_94 = arith.constant 7 : index
    %c0_95 = arith.constant 0 : index
    %c0_96 = arith.constant 0 : index
    %167 = vector.load %arg4[%c7_94, %c0_95, %c0_96] : memref<9x8x8xbf16, #tpu.memory_space<vmem>>, vector<1x8x8xbf16>
    %168 = vector.shape_cast %167 : vector<1x8x8xbf16> to vector<8x8xbf16>
    %cst_97 = arith.constant 0.000000e+00 : bf16
    %169 = vector.broadcast %cst_97 : bf16 to vector<8x16xbf16>
    %170 = vector.extract_strided_slice %121 {offsets = [0, 16], sizes = [8, 240], strides = [1, 1]} : vector<8x256xbf16> to vector<8x240xbf16>
    %171 = tpu.concatenate %170, %169 in 1 : vector<8x240xbf16>, vector<8x16xbf16> -> vector<8x256xbf16>
    %cst_98 = arith.constant dense<0.000000e+00> : vector<8x256xf32>
    %172 = tpu.matmul %168, %171, %cst_98 {dimension_numbers = #tpu.dot_dimension_numbers<[1], [0], [0], [1], [0, 0, 1, 1], [], []>} : vector<8x8xbf16>, vector<8x256xbf16>, vector<8x256xf32> -> vector<8x256xf32>
    %173 = arith.addf %166, %172 : vector<8x256xf32>
    %c8_99 = arith.constant 8 : index
    %c0_100 = arith.constant 0 : index
    %c0_101 = arith.constant 0 : index
    %174 = vector.load %arg4[%c8_99, %c0_100, %c0_101] : memref<9x8x8xbf16, #tpu.memory_space<vmem>>, vector<1x8x8xbf16>
    %175 = vector.shape_cast %174 : vector<1x8x8xbf16> to vector<8x8xbf16>
    %cst_102 = arith.constant 0.000000e+00 : bf16
    %176 = vector.broadcast %cst_102 : bf16 to vector<8x16xbf16>
    %177 = vector.extract_strided_slice %127 {offsets = [0, 16], sizes = [8, 240], strides = [1, 1]} : vector<8x256xbf16> to vector<8x240xbf16>
    %178 = tpu.concatenate %177, %176 in 1 : vector<8x240xbf16>, vector<8x16xbf16> -> vector<8x256xbf16>
    %cst_103 = arith.constant dense<0.000000e+00> : vector<8x256xf32>
    %179 = tpu.matmul %175, %178, %cst_103 {dimension_numbers = #tpu.dot_dimension_numbers<[1], [0], [0], [1], [0, 0, 1, 1], [], []>} : vector<8x8xbf16>, vector<8x256xbf16>, vector<8x256xf32> -> vector<8x256xf32>
    %180 = arith.addf %173, %179 : vector<8x256xf32>
    %181 = vector.extract_strided_slice %114 {offsets = [0, 0], sizes = [8, 1], strides = [1, 1]} : vector<8x3xf32> to vector<8x1xf32>
    %182 = vector.broadcast %181 : vector<8x1xf32> to vector<8x256xf32>
    %183 = arith.addf %180, %182 : vector<8x256xf32>
    %cst_104 = arith.constant dense<0.000000e+00> : vector<8xf32>
    %184 = vector.multi_reduction <add>, %183, %cst_104 [1] : vector<8x256xf32> to vector<8xf32>
    %185 = vector.shape_cast %184 : vector<8xf32> to vector<8x1xf32>
    %186 = arith.mulf %183, %183 : vector<8x256xf32>
    %cst_105 = arith.constant dense<0.000000e+00> : vector<8xf32>
    %187 = vector.multi_reduction <add>, %186, %cst_105 [1] : vector<8x256xf32> to vector<8xf32>
    %188 = vector.shape_cast %187 : vector<8xf32> to vector<8x1xf32>
    %189 = tpu.concatenate %185, %188 in 1 : vector<8x1xf32>, vector<8x1xf32> -> vector<8x2xf32>
    %cst_106 = arith.constant dense<0.000000e+00> : vector<8x2xf32>
    %190 = tpu.matmul %1, %189, %cst_106 {dimension_numbers = #tpu.dot_dimension_numbers<[1], [0], [0], [1], [0, 0, 1, 1], [], []>} : vector<8x8xf32>, vector<8x2xf32>, vector<8x2xf32> -> vector<8x2xf32>
    %191 = vector.extract_strided_slice %190 {offsets = [0, 0], sizes = [8, 1], strides = [1, 1]} : vector<8x2xf32> to vector<8x1xf32>
    %cst_107 = arith.constant 3.906250e-03 : f32
    %192 = vector.broadcast %cst_107 : f32 to vector<8x1xf32>
    %193 = arith.mulf %191, %192 : vector<8x1xf32>
    %194 = vector.extract_strided_slice %190 {offsets = [0, 1], sizes = [8, 1], strides = [1, 1]} : vector<8x2xf32> to vector<8x1xf32>
    %cst_108 = arith.constant 3.906250e-03 : f32
    %195 = vector.broadcast %cst_108 : f32 to vector<8x1xf32>
    %196 = arith.mulf %194, %195 : vector<8x1xf32>
    %197 = arith.mulf %193, %193 : vector<8x1xf32>
    %198 = arith.subf %196, %197 : vector<8x1xf32>
    %cst_109 = arith.constant 0.000000e+00 : f32
    %199 = vector.broadcast %cst_109 : f32 to vector<8x1xf32>
    %200 = arith.maximumf %198, %199 : vector<8x1xf32>
    %cst_110 = arith.constant 9.99999974E-6 : f32
    %201 = vector.broadcast %cst_110 : f32 to vector<8x1xf32>
    %202 = arith.addf %200, %201 : vector<8x1xf32>
    %203 = math.rsqrt %202 : vector<8x1xf32>
    %204 = tpu.concatenate %193, %203 in 1 : vector<8x1xf32>, vector<8x1xf32> -> vector<8x2xf32>
    %cst_111 = arith.constant dense<0.000000e+00> : vector<8x2xf32>
    %205 = tpu.matmul %0, %204, %cst_111 {dimension_numbers = #tpu.dot_dimension_numbers<[1], [0], [0], [1], [0, 0, 1, 1], [], []>} : vector<8x8xf32>, vector<8x2xf32>, vector<8x2xf32> -> vector<8x2xf32>
    %206 = vector.extract_strided_slice %205 {offsets = [0, 0], sizes = [8, 1], strides = [1, 1]} : vector<8x2xf32> to vector<8x1xf32>
    %207 = vector.broadcast %206 : vector<8x1xf32> to vector<8x256xf32>
    %208 = arith.subf %183, %207 : vector<8x256xf32>
    %209 = vector.extract_strided_slice %205 {offsets = [0, 1], sizes = [8, 1], strides = [1, 1]} : vector<8x2xf32> to vector<8x1xf32>
    %210 = vector.extract_strided_slice %114 {offsets = [0, 1], sizes = [8, 1], strides = [1, 1]} : vector<8x3xf32> to vector<8x1xf32>
    %211 = arith.mulf %209, %210 : vector<8x1xf32>
    %212 = vector.broadcast %211 : vector<8x1xf32> to vector<8x256xf32>
    %213 = arith.mulf %208, %212 : vector<8x256xf32>
    %214 = vector.extract_strided_slice %114 {offsets = [0, 2], sizes = [8, 1], strides = [1, 1]} : vector<8x3xf32> to vector<8x1xf32>
    %215 = vector.broadcast %214 : vector<8x1xf32> to vector<8x256xf32>
    %216 = arith.addf %213, %215 : vector<8x256xf32>
    %cst_112 = arith.constant 0.000000e+00 : f32
    %217 = vector.broadcast %cst_112 : f32 to vector<8x256xf32>
    %218 = arith.maximumf %216, %217 : vector<8x256xf32>
    %c0_113 = arith.constant 0 : index
    %c0_114 = arith.constant 0 : index
    %219 = vector.load %arg7[%c0_113, %c0_114] : memref<8x3xf32, #tpu.memory_space<vmem>>, vector<8x3xf32>
    %cst_115 = arith.constant 0.000000e+00 : f32
    %220 = vector.broadcast %cst_115 : f32 to vector<8x1xf32>
    %221 = vector.extract_strided_slice %218 {offsets = [0, 0], sizes = [8, 255], strides = [1, 1]} : vector<8x256xf32> to vector<8x255xf32>
    %222 = tpu.concatenate %220, %221 in 1 : vector<8x1xf32>, vector<8x255xf32> -> vector<8x256xf32>
    %223 = vector.broadcast %3 : vector<1x256xf32> to vector<8x256xf32>
    %224 = arith.mulf %222, %223 : vector<8x256xf32>
    %225 = arith.truncf %224 : vector<8x256xf32> to vector<8x256xbf16>
    %226 = arith.truncf %218 : vector<8x256xf32> to vector<8x256xbf16>
    %cst_116 = arith.constant 0.000000e+00 : f32
    %227 = vector.broadcast %cst_116 : f32 to vector<8x1xf32>
    %228 = vector.extract_strided_slice %218 {offsets = [0, 1], sizes = [8, 255], strides = [1, 1]} : vector<8x256xf32> to vector<8x255xf32>
    %229 = tpu.concatenate %228, %227 in 1 : vector<8x255xf32>, vector<8x1xf32> -> vector<8x256xf32>
    %230 = vector.broadcast %4 : vector<1x256xf32> to vector<8x256xf32>
    %231 = arith.mulf %229, %230 : vector<8x256xf32>
    %232 = arith.truncf %231 : vector<8x256xf32> to vector<8x256xbf16>
    %c0_117 = arith.constant 0 : index
    %c0_118 = arith.constant 0 : index
    %c0_119 = arith.constant 0 : index
    %233 = vector.load %arg6[%c0_117, %c0_118, %c0_119] : memref<9x8x8xbf16, #tpu.memory_space<vmem>>, vector<1x8x8xbf16>
    %234 = vector.shape_cast %233 : vector<1x8x8xbf16> to vector<8x8xbf16>
    %cst_120 = arith.constant 0.000000e+00 : bf16
    %235 = vector.broadcast %cst_120 : bf16 to vector<8x16xbf16>
    %236 = vector.extract_strided_slice %225 {offsets = [0, 0], sizes = [8, 240], strides = [1, 1]} : vector<8x256xbf16> to vector<8x240xbf16>
    %237 = tpu.concatenate %235, %236 in 1 : vector<8x16xbf16>, vector<8x240xbf16> -> vector<8x256xbf16>
    %cst_121 = arith.constant dense<0.000000e+00> : vector<8x256xf32>
    %238 = tpu.matmul %234, %237, %cst_121 {dimension_numbers = #tpu.dot_dimension_numbers<[1], [0], [0], [1], [0, 0, 1, 1], [], []>} : vector<8x8xbf16>, vector<8x256xbf16>, vector<8x256xf32> -> vector<8x256xf32>
    %c1_122 = arith.constant 1 : index
    %c0_123 = arith.constant 0 : index
    %c0_124 = arith.constant 0 : index
    %239 = vector.load %arg6[%c1_122, %c0_123, %c0_124] : memref<9x8x8xbf16, #tpu.memory_space<vmem>>, vector<1x8x8xbf16>
    %240 = vector.shape_cast %239 : vector<1x8x8xbf16> to vector<8x8xbf16>
    %cst_125 = arith.constant 0.000000e+00 : bf16
    %241 = vector.broadcast %cst_125 : bf16 to vector<8x16xbf16>
    %242 = vector.extract_strided_slice %226 {offsets = [0, 0], sizes = [8, 240], strides = [1, 1]} : vector<8x256xbf16> to vector<8x240xbf16>
    %243 = tpu.concatenate %241, %242 in 1 : vector<8x16xbf16>, vector<8x240xbf16> -> vector<8x256xbf16>
    %cst_126 = arith.constant dense<0.000000e+00> : vector<8x256xf32>
    %244 = tpu.matmul %240, %243, %cst_126 {dimension_numbers = #tpu.dot_dimension_numbers<[1], [0], [0], [1], [0, 0, 1, 1], [], []>} : vector<8x8xbf16>, vector<8x256xbf16>, vector<8x256xf32> -> vector<8x256xf32>
    %245 = arith.addf %238, %244 : vector<8x256xf32>
    %c2_127 = arith.constant 2 : index
    %c0_128 = arith.constant 0 : index
    %c0_129 = arith.constant 0 : index
    %246 = vector.load %arg6[%c2_127, %c0_128, %c0_129] : memref<9x8x8xbf16, #tpu.memory_space<vmem>>, vector<1x8x8xbf16>
    %247 = vector.shape_cast %246 : vector<1x8x8xbf16> to vector<8x8xbf16>
    %cst_130 = arith.constant 0.000000e+00 : bf16
    %248 = vector.broadcast %cst_130 : bf16 to vector<8x16xbf16>
    %249 = vector.extract_strided_slice %232 {offsets = [0, 0], sizes = [8, 240], strides = [1, 1]} : vector<8x256xbf16> to vector<8x240xbf16>
    %250 = tpu.concatenate %248, %249 in 1 : vector<8x16xbf16>, vector<8x240xbf16> -> vector<8x256xbf16>
    %cst_131 = arith.constant dense<0.000000e+00> : vector<8x256xf32>
    %251 = tpu.matmul %247, %250, %cst_131 {dimension_numbers = #tpu.dot_dimension_numbers<[1], [0], [0], [1], [0, 0, 1, 1], [], []>} : vector<8x8xbf16>, vector<8x256xbf16>, vector<8x256xf32> -> vector<8x256xf32>
    %252 = arith.addf %245, %251 : vector<8x256xf32>
    %c3_132 = arith.constant 3 : index
    %c0_133 = arith.constant 0 : index
    %c0_134 = arith.constant 0 : index
    %253 = vector.load %arg6[%c3_132, %c0_133, %c0_134] : memref<9x8x8xbf16, #tpu.memory_space<vmem>>, vector<1x8x8xbf16>
    %254 = vector.shape_cast %253 : vector<1x8x8xbf16> to vector<8x8xbf16>
    %cst_135 = arith.constant dense<0.000000e+00> : vector<8x256xf32>
    %255 = tpu.matmul %254, %225, %cst_135 {dimension_numbers = #tpu.dot_dimension_numbers<[1], [0], [0], [1], [0, 0, 1, 1], [], []>} : vector<8x8xbf16>, vector<8x256xbf16>, vector<8x256xf32> -> vector<8x256xf32>
    %256 = arith.addf %252, %255 : vector<8x256xf32>
    %c4_136 = arith.constant 4 : index
    %c0_137 = arith.constant 0 : index
    %c0_138 = arith.constant 0 : index
    %257 = vector.load %arg6[%c4_136, %c0_137, %c0_138] : memref<9x8x8xbf16, #tpu.memory_space<vmem>>, vector<1x8x8xbf16>
    %258 = vector.shape_cast %257 : vector<1x8x8xbf16> to vector<8x8xbf16>
    %cst_139 = arith.constant dense<0.000000e+00> : vector<8x256xf32>
    %259 = tpu.matmul %258, %226, %cst_139 {dimension_numbers = #tpu.dot_dimension_numbers<[1], [0], [0], [1], [0, 0, 1, 1], [], []>} : vector<8x8xbf16>, vector<8x256xbf16>, vector<8x256xf32> -> vector<8x256xf32>
    %260 = arith.addf %256, %259 : vector<8x256xf32>
    %c5_140 = arith.constant 5 : index
    %c0_141 = arith.constant 0 : index
    %c0_142 = arith.constant 0 : index
    %261 = vector.load %arg6[%c5_140, %c0_141, %c0_142] : memref<9x8x8xbf16, #tpu.memory_space<vmem>>, vector<1x8x8xbf16>
    %262 = vector.shape_cast %261 : vector<1x8x8xbf16> to vector<8x8xbf16>
    %cst_143 = arith.constant dense<0.000000e+00> : vector<8x256xf32>
    %263 = tpu.matmul %262, %232, %cst_143 {dimension_numbers = #tpu.dot_dimension_numbers<[1], [0], [0], [1], [0, 0, 1, 1], [], []>} : vector<8x8xbf16>, vector<8x256xbf16>, vector<8x256xf32> -> vector<8x256xf32>
    %264 = arith.addf %260, %263 : vector<8x256xf32>
    %c6_144 = arith.constant 6 : index
    %c0_145 = arith.constant 0 : index
    %c0_146 = arith.constant 0 : index
    %265 = vector.load %arg6[%c6_144, %c0_145, %c0_146] : memref<9x8x8xbf16, #tpu.memory_space<vmem>>, vector<1x8x8xbf16>
    %266 = vector.shape_cast %265 : vector<1x8x8xbf16> to vector<8x8xbf16>
    %cst_147 = arith.constant 0.000000e+00 : bf16
    %267 = vector.broadcast %cst_147 : bf16 to vector<8x16xbf16>
    %268 = vector.extract_strided_slice %225 {offsets = [0, 16], sizes = [8, 240], strides = [1, 1]} : vector<8x256xbf16> to vector<8x240xbf16>
    %269 = tpu.concatenate %268, %267 in 1 : vector<8x240xbf16>, vector<8x16xbf16> -> vector<8x256xbf16>
    %cst_148 = arith.constant dense<0.000000e+00> : vector<8x256xf32>
    %270 = tpu.matmul %266, %269, %cst_148 {dimension_numbers = #tpu.dot_dimension_numbers<[1], [0], [0], [1], [0, 0, 1, 1], [], []>} : vector<8x8xbf16>, vector<8x256xbf16>, vector<8x256xf32> -> vector<8x256xf32>
    %271 = arith.addf %264, %270 : vector<8x256xf32>
    %c7_149 = arith.constant 7 : index
    %c0_150 = arith.constant 0 : index
    %c0_151 = arith.constant 0 : index
    %272 = vector.load %arg6[%c7_149, %c0_150, %c0_151] : memref<9x8x8xbf16, #tpu.memory_space<vmem>>, vector<1x8x8xbf16>
    %273 = vector.shape_cast %272 : vector<1x8x8xbf16> to vector<8x8xbf16>
    %cst_152 = arith.constant 0.000000e+00 : bf16
    %274 = vector.broadcast %cst_152 : bf16 to vector<8x16xbf16>
    %275 = vector.extract_strided_slice %226 {offsets = [0, 16], sizes = [8, 240], strides = [1, 1]} : vector<8x256xbf16> to vector<8x240xbf16>
    %276 = tpu.concatenate %275, %274 in 1 : vector<8x240xbf16>, vector<8x16xbf16> -> vector<8x256xbf16>
    %cst_153 = arith.constant dense<0.000000e+00> : vector<8x256xf32>
    %277 = tpu.matmul %273, %276, %cst_153 {dimension_numbers = #tpu.dot_dimension_numbers<[1], [0], [0], [1], [0, 0, 1, 1], [], []>} : vector<8x8xbf16>, vector<8x256xbf16>, vector<8x256xf32> -> vector<8x256xf32>
    %278 = arith.addf %271, %277 : vector<8x256xf32>
    %c8_154 = arith.constant 8 : index
    %c0_155 = arith.constant 0 : index
    %c0_156 = arith.constant 0 : index
    %279 = vector.load %arg6[%c8_154, %c0_155, %c0_156] : memref<9x8x8xbf16, #tpu.memory_space<vmem>>, vector<1x8x8xbf16>
    %280 = vector.shape_cast %279 : vector<1x8x8xbf16> to vector<8x8xbf16>
    %cst_157 = arith.constant 0.000000e+00 : bf16
    %281 = vector.broadcast %cst_157 : bf16 to vector<8x16xbf16>
    %282 = vector.extract_strided_slice %232 {offsets = [0, 16], sizes = [8, 240], strides = [1, 1]} : vector<8x256xbf16> to vector<8x240xbf16>
    %283 = tpu.concatenate %282, %281 in 1 : vector<8x240xbf16>, vector<8x16xbf16> -> vector<8x256xbf16>
    %cst_158 = arith.constant dense<0.000000e+00> : vector<8x256xf32>
    %284 = tpu.matmul %280, %283, %cst_158 {dimension_numbers = #tpu.dot_dimension_numbers<[1], [0], [0], [1], [0, 0, 1, 1], [], []>} : vector<8x8xbf16>, vector<8x256xbf16>, vector<8x256xf32> -> vector<8x256xf32>
    %285 = arith.addf %278, %284 : vector<8x256xf32>
    %286 = vector.extract_strided_slice %219 {offsets = [0, 0], sizes = [8, 1], strides = [1, 1]} : vector<8x3xf32> to vector<8x1xf32>
    %287 = vector.broadcast %286 : vector<8x1xf32> to vector<8x256xf32>
    %288 = arith.addf %285, %287 : vector<8x256xf32>
    %cst_159 = arith.constant dense<0.000000e+00> : vector<8xf32>
    %289 = vector.multi_reduction <add>, %288, %cst_159 [1] : vector<8x256xf32> to vector<8xf32>
    %290 = vector.shape_cast %289 : vector<8xf32> to vector<8x1xf32>
    %291 = arith.mulf %288, %288 : vector<8x256xf32>
    %cst_160 = arith.constant dense<0.000000e+00> : vector<8xf32>
    %292 = vector.multi_reduction <add>, %291, %cst_160 [1] : vector<8x256xf32> to vector<8xf32>
    %293 = vector.shape_cast %292 : vector<8xf32> to vector<8x1xf32>
    %294 = tpu.concatenate %290, %293 in 1 : vector<8x1xf32>, vector<8x1xf32> -> vector<8x2xf32>
    %cst_161 = arith.constant dense<0.000000e+00> : vector<8x2xf32>
    %295 = tpu.matmul %1, %294, %cst_161 {dimension_numbers = #tpu.dot_dimension_numbers<[1], [0], [0], [1], [0, 0, 1, 1], [], []>} : vector<8x8xf32>, vector<8x2xf32>, vector<8x2xf32> -> vector<8x2xf32>
    %296 = vector.extract_strided_slice %295 {offsets = [0, 0], sizes = [8, 1], strides = [1, 1]} : vector<8x2xf32> to vector<8x1xf32>
    %cst_162 = arith.constant 3.906250e-03 : f32
    %297 = vector.broadcast %cst_162 : f32 to vector<8x1xf32>
    %298 = arith.mulf %296, %297 : vector<8x1xf32>
    %299 = vector.extract_strided_slice %295 {offsets = [0, 1], sizes = [8, 1], strides = [1, 1]} : vector<8x2xf32> to vector<8x1xf32>
    %cst_163 = arith.constant 3.906250e-03 : f32
    %300 = vector.broadcast %cst_163 : f32 to vector<8x1xf32>
    %301 = arith.mulf %299, %300 : vector<8x1xf32>
    %302 = arith.mulf %298, %298 : vector<8x1xf32>
    %303 = arith.subf %301, %302 : vector<8x1xf32>
    %cst_164 = arith.constant 0.000000e+00 : f32
    %304 = vector.broadcast %cst_164 : f32 to vector<8x1xf32>
    %305 = arith.maximumf %303, %304 : vector<8x1xf32>
    %cst_165 = arith.constant 9.99999974E-6 : f32
    %306 = vector.broadcast %cst_165 : f32 to vector<8x1xf32>
    %307 = arith.addf %305, %306 : vector<8x1xf32>
    %308 = math.rsqrt %307 : vector<8x1xf32>
    %309 = tpu.concatenate %298, %308 in 1 : vector<8x1xf32>, vector<8x1xf32> -> vector<8x2xf32>
    %cst_166 = arith.constant dense<0.000000e+00> : vector<8x2xf32>
    %310 = tpu.matmul %0, %309, %cst_166 {dimension_numbers = #tpu.dot_dimension_numbers<[1], [0], [0], [1], [0, 0, 1, 1], [], []>} : vector<8x8xf32>, vector<8x2xf32>, vector<8x2xf32> -> vector<8x2xf32>
    %311 = vector.extract_strided_slice %310 {offsets = [0, 0], sizes = [8, 1], strides = [1, 1]} : vector<8x2xf32> to vector<8x1xf32>
    %312 = vector.broadcast %311 : vector<8x1xf32> to vector<8x256xf32>
    %313 = arith.subf %288, %312 : vector<8x256xf32>
    %314 = vector.extract_strided_slice %310 {offsets = [0, 1], sizes = [8, 1], strides = [1, 1]} : vector<8x2xf32> to vector<8x1xf32>
    %315 = vector.extract_strided_slice %219 {offsets = [0, 1], sizes = [8, 1], strides = [1, 1]} : vector<8x3xf32> to vector<8x1xf32>
    %316 = arith.mulf %314, %315 : vector<8x1xf32>
    %317 = vector.broadcast %316 : vector<8x1xf32> to vector<8x256xf32>
    %318 = arith.mulf %313, %317 : vector<8x256xf32>
    %319 = vector.extract_strided_slice %219 {offsets = [0, 2], sizes = [8, 1], strides = [1, 1]} : vector<8x3xf32> to vector<8x1xf32>
    %320 = vector.broadcast %319 : vector<8x1xf32> to vector<8x256xf32>
    %321 = arith.addf %318, %320 : vector<8x256xf32>
    %cst_167 = arith.constant 0.000000e+00 : f32
    %322 = vector.broadcast %cst_167 : f32 to vector<8x256xf32>
    %323 = arith.maximumf %321, %322 : vector<8x256xf32>
    %324 = vector.shape_cast %323 : vector<8x256xf32> to vector<1x8x256xf32>
    %c0_168 = arith.constant 0 : index
    %c0_169 = arith.constant 0 : index
    %c0_170 = arith.constant 0 : index
    %325 = vector.load %arg11[%c0_168, %c0_169, %c0_170] : memref<1x8x256xf32, #tpu.memory_space<vmem>>, vector<1x8x256xf32>
    tpu.vector_store %arg11[%c0_168, %c0_169, %c0_170], %324 {strides = array<i32>} : memref<1x8x256xf32, #tpu.memory_space<vmem>>, vector<1x8x256xf32>,
    return
  }
  func.func @transform_0(%arg0: i32) -> (i32, i32, i32) {
    %c0_i32 = arith.constant 0 : i32
    %c0_i32_0 = arith.constant 0 : i32
    %c0_i32_1 = arith.constant 0 : i32
    return %arg0, %c0_i32, %c0_i32_0 : i32, i32, i32
  }
  func.func @transform_1(%arg0: i32) -> (i32, i32, i32) {
    %c0_i32 = arith.constant 0 : i32
    %c0_i32_0 = arith.constant 0 : i32
    %c0_i32_1 = arith.constant 0 : i32
    %c0_i32_2 = arith.constant 0 : i32
    return %c0_i32, %c0_i32_0, %c0_i32_1 : i32, i32, i32
  }
  func.func @transform_2(%arg0: i32) -> (i32, i32) {
    %c0_i32 = arith.constant 0 : i32
    %c0_i32_0 = arith.constant 0 : i32
    %c0_i32_1 = arith.constant 0 : i32
    return %c0_i32, %c0_i32_0 : i32, i32
  }
  func.func @transform_3(%arg0: i32) -> (i32, i32, i32) {
    %c0_i32 = arith.constant 0 : i32
    %c0_i32_0 = arith.constant 0 : i32
    %c0_i32_1 = arith.constant 0 : i32
    %c0_i32_2 = arith.constant 0 : i32
    return %c0_i32, %c0_i32_0, %c0_i32_1 : i32, i32, i32
  }
  func.func @transform_4(%arg0: i32) -> (i32, i32) {
    %c0_i32 = arith.constant 0 : i32
    %c0_i32_0 = arith.constant 0 : i32
    %c0_i32_1 = arith.constant 0 : i32
    return %c0_i32, %c0_i32_0 : i32, i32
  }
  func.func @transform_5(%arg0: i32) -> (i32, i32, i32) {
    %c0_i32 = arith.constant 0 : i32
    %c0_i32_0 = arith.constant 0 : i32
    %c0_i32_1 = arith.constant 0 : i32
    %c0_i32_2 = arith.constant 0 : i32
    return %c0_i32, %c0_i32_0, %c0_i32_1 : i32, i32, i32
  }
  func.func @transform_6(%arg0: i32) -> (i32, i32) {
    %c0_i32 = arith.constant 0 : i32
    %c0_i32_0 = arith.constant 0 : i32
    %c0_i32_1 = arith.constant 0 : i32
    return %c0_i32, %c0_i32_0 : i32, i32
  }
  func.func @transform_7(%arg0: i32) -> (i32, i32) {
    %c0_i32 = arith.constant 0 : i32
    %c0_i32_0 = arith.constant 0 : i32
    %c0_i32_1 = arith.constant 0 : i32
    return %c0_i32, %c0_i32_0 : i32, i32
  }
  func.func @transform_8(%arg0: i32) -> (i32, i32) {
    %c0_i32 = arith.constant 0 : i32
    %c0_i32_0 = arith.constant 0 : i32
    %c0_i32_1 = arith.constant 0 : i32
    return %c0_i32, %c0_i32_0 : i32, i32
  }
  func.func @transform_9(%arg0: i32) -> (i32, i32) {
    %c0_i32 = arith.constant 0 : i32
    %c0_i32_0 = arith.constant 0 : i32
    %c0_i32_1 = arith.constant 0 : i32
    return %c0_i32, %c0_i32_0 : i32, i32
  }
  func.func @transform_10(%arg0: i32) -> (i32, i32, i32) {
    %c0_i32 = arith.constant 0 : i32
    %c0_i32_0 = arith.constant 0 : i32
    %c0_i32_1 = arith.constant 0 : i32
    return %arg0, %c0_i32, %c0_i32_0 : i32, i32, i32
  }
}

</mosaic_0001>

<llo_original>
// kernel: conv3_forward.1
$region0: #{conv3_forward.1}
  #allocation0 [shape = 'u32[]', space=smem, size = 0x4, offset = 0x4, fixed_abs, tag = 'smem constant byte address 0x4 - core index']
  #allocation1 [shape = 'u32[144,128]{1,0:T(1,128)}', space=vmem, size = 0x12000, scoped, tag = 'internal scratch']
  #allocation2 [shape = 'f32[8,256]{1,0:T(8,128)}', space=vmem, size = 0x2000, scoped, tag = 'scratch operand']
  %s0 = inlined_call_operand.vmem [shape: f32[2,4,256], index: 0, kind: input, shape index: {}]
  %s1 = inlined_call_operand.vmem [shape: bf16[9,8,4], index: 1, kind: input, shape index: {}]
  %s2 = inlined_call_operand.vmem [shape: f32[8,3], index: 2, kind: input, shape index: {}]
  %s3 = inlined_call_operand.vmem [shape: bf16[9,8,8], index: 3, kind: input, shape index: {}]
  %s4 = inlined_call_operand.vmem [shape: f32[8,3], index: 4, kind: input, shape index: {}]
  %s5 = inlined_call_operand.vmem [shape: bf16[9,8,8], index: 5, kind: input, shape index: {}]
  %s6 = inlined_call_operand.vmem [shape: f32[8,3], index: 6, kind: input, shape index: {}]
  %s7 = inlined_call_operand.vmem [shape: f32[8,8], index: 7, kind: input, shape index: {}]
  %s8 = inlined_call_operand.vmem [shape: f32[8,8], index: 8, kind: input, shape index: {}]
  %s9 = inlined_call_operand.vmem [shape: f32[2,256], index: 9, kind: input, shape index: {}]
  %s10 = inlined_call_operand.vmem [shape: f32[2,8,256], index: 10, kind: output, shape index: {}]
  %s11 = sld [smem:[#allocation0]]
  $region73: #{conv3_forward.1} parent=0
    _
  %s13 = ssub.s32 1, %s11
  %s14 = scalar_select 0, %s13, %s11
  loop: start=0, step=1, limit=4
  $region2: #{conv3_forward.1} parent=0 // loop_pre_header
    _
  $region3: #{conv3_forward.1} parent=0 // loop_header
    %s16 = sphi 0, %s20
    %p17 = scmp.ge.s32.totalorder %s16, 4
    %s26 = sphi 0, %s28
    %s29 = sphi 0, %s26
    %s30 = sphi 0, %s29
    %s46 = sphi 0, %s30
    %s50 = sphi 0, %s50
    %s52 = sphi 0, %s50
    %s53 = sphi 0, %s52
    %s67 = sphi 0, %s53
    %s71 = sphi 0, %s71
    %s73 = sphi 0, %s71
    %s74 = sphi 0, %s73
    %s88 = sphi 0, %s74
    %s92 = sphi 0, %s92
    %s94 = sphi 0, %s92
    %s95 = sphi 0, %s94
    %s109 = sphi 0, %s95
    %s113 = sphi 0, %s113
    %s115 = sphi 0, %s113
    %s116 = sphi 0, %s115
    %s130 = sphi 0, %s116
    %s134 = sphi 0, %s134
    %s136 = sphi 0, %s134
    %s137 = sphi 0, %s136
    %s151 = sphi 0, %s137
    %s155 = sphi 0, %s155
    %s157 = sphi 0, %s155
    %s158 = sphi 0, %s157
    %s172 = sphi 0, %s158
    %s176 = sphi 0, %s176
    %s178 = sphi 0, %s176
    %s179 = sphi 0, %s178
    %s193 = sphi 0, %s179
    %s197 = sphi 0, %s197
    %s199 = sphi 0, %s197
    %s200 = sphi 0, %s199
    %s214 = sphi 0, %s200
    %s218 = sphi 0, %s218
    %s220 = sphi 0, %s218
    %s221 = sphi 0, %s220
    %s235 = sphi 0, %s221
    %s241 = sphi 0, %s243
    %s244 = sphi 0, %s241
    %s245 = sphi 0, %s244
    %s261 = sphi 0, %s245
  $region4: #{conv3_forward.1} parent=0 // loop_header_branch
    %19 = sbr.rel (%p17) target = $region8
  $region5: #{conv3_forward.1} parent=0 // loop_body
    %s21 = ssub.s32 %s16, 1
    %s22 = ssub.s32 %s16, 2
    %s23 = sadd.s32 %s16, 1
    %s24 = ssub.s32 %s16, %s23
    %p25 = scmp.eq.s32.totalorder %s24, 0
    %s27 = sadd.s32 %s26, 1
    %s28 = scalar_select %p25, %s26, %s27
    %p31 = pneg %p25
    %p32 = scmp.eq.s32.totalorder %s16, 1
    %p33 = por %p31, %p32
    %p34 = scmp.ne.s32.totalorder %s26, %s29
    %p35 = scmp.eq.s32.totalorder %s16, 0
    %p36 = por %p34, %p35
    %p37 = scmp.ne.s32.totalorder %s26, %s29
    %p38 = scmp.eq.s32.totalorder %s21, 1
    %p39 = por %p37, %p38
    %p40 = scmp.ne.s32.totalorder %s29, %s30
    %p41 = scmp.eq.s32.totalorder %s21, 0
    %p42 = por %p40, %p41
    %p43 = scmp.ne.s32.totalorder %s29, %s30
    %p44 = scmp.eq.s32.totalorder %s22, 1
    %p45 = por %p43, %p44
    %p47 = scmp.ne.s32.totalorder %s30, %s46
    %p48 = scmp.eq.s32.totalorder %s22, 0
    %p49 = por %p47, %p48
    %s51 = sadd.s32 %s50, 1
    %p54 = scmp.eq.s32.totalorder %s16, 1
    %p55 = scmp.ne.s32.totalorder %s50, %s52
    %p56 = scmp.eq.s32.totalorder %s16, 0
    %p57 = por %p55, %p56
    %p58 = scmp.ne.s32.totalorder %s50, %s52
    %p59 = scmp.eq.s32.totalorder %s21, 1
    %p60 = por %p58, %p59
    %p61 = scmp.ne.s32.totalorder %s52, %s53
    %p62 = scmp.eq.s32.totalorder %s21, 0
    %p63 = por %p61, %p62
    %p64 = scmp.ne.s32.totalorder %s52, %s53
    %p65 = scmp.eq.s32.totalorder %s22, 1
    %p66 = por %p64, %p65
    %p68 = scmp.ne.s32.totalorder %s53, %s67
    %p69 = scmp.eq.s32.totalorder %s22, 0
    %p70 = por %p68, %p69
    %s72 = sadd.s32 %s71, 1
    %p75 = scmp.eq.s32.totalorder %s16, 1
    %p76 = scmp.ne.s32.totalorder %s71, %s73
    %p77 = scmp.eq.s32.totalorder %s16, 0
    %p78 = por %p76, %p77
    %p79 = scmp.ne.s32.totalorder %s71, %s73
    %p80 = scmp.eq.s32.totalorder %s21, 1
    %p81 = por %p79, %p80
    %p82 = scmp.ne.s32.totalorder %s73, %s74
    %p83 = scmp.eq.s32.totalorder %s21, 0
    %p84 = por %p82, %p83
    %p85 = scmp.ne.s32.totalorder %s73, %s74
    %p86 = scmp.eq.s32.totalorder %s22, 1
    %p87 = por %p85, %p86
    %p89 = scmp.ne.s32.totalorder %s74, %s88
    %p90 = scmp.eq.s32.totalorder %s22, 0
    %p91 = por %p89, %p90
    %s93 = sadd.s32 %s92, 1
    %p96 = scmp.eq.s32.totalorder %s16, 1
    %p97 = scmp.ne.s32.totalorder %s92, %s94
    %p98 = scmp.eq.s32.totalorder %s16, 0
    %p99 = por %p97, %p98
    %p100 = scmp.ne.s32.totalorder %s92, %s94
    %p101 = scmp.eq.s32.totalorder %s21, 1
    %p102 = por %p100, %p101
    %p103 = scmp.ne.s32.totalorder %s94, %s95
    %p104 = scmp.eq.s32.totalorder %s21, 0
    %p105 = por %p103, %p104
    %p106 = scmp.ne.s32.totalorder %s94, %s95
    %p107 = scmp.eq.s32.totalorder %s22, 1
    %p108 = por %p106, %p107
    %p110 = scmp.ne.s32.totalorder %s95, %s109
    %p111 = scmp.eq.s32.totalorder %s22, 0
    %p112 = por %p110, %p111
    %s114 = sadd.s32 %s113, 1
    %p117 = scmp.eq.s32.totalorder %s16, 1
    %p118 = scmp.ne.s32.totalorder %s113, %s115
    %p119 = scmp.eq.s32.totalorder %s16, 0
    %p120 = por %p118, %p119
    %p121 = scmp.ne.s32.totalorder %s113, %s115
    %p122 = scmp.eq.s32.totalorder %s21, 1
    %p123 = por %p121, %p122
    %p124 = scmp.ne.s32.totalorder %s115, %s116
    %p125 = scmp.eq.s32.totalorder %s21, 0
    %p126 = por %p124, %p125
    %p127 = scmp.ne.s32.totalorder %s115, %s116
    %p128 = scmp.eq.s32.totalorder %s22, 1
    %p129 = por %p127, %p128
    %p131 = scmp.ne.s32.totalorder %s116, %s130
    %p132 = scmp.eq.s32.totalorder %s22, 0
    %p133 = por %p131, %p132
    %s135 = sadd.s32 %s134, 1
    %p138 = scmp.eq.s32.totalorder %s16, 1
    %p139 = scmp.ne.s32.totalorder %s134, %s136
    %p140 = scmp.eq.s32.totalorder %s16, 0
    %p141 = por %p139, %p140
    %p142 = scmp.ne.s32.totalorder %s134, %s136
    %p143 = scmp.eq.s32.totalorder %s21, 1
    %p144 = por %p142, %p143
    %p145 = scmp.ne.s32.totalorder %s136, %s137
    %p146 = scmp.eq.s32.totalorder %s21, 0
    %p147 = por %p145, %p146
    %p148 = scmp.ne.s32.totalorder %s136, %s137
    %p149 = scmp.eq.s32.totalorder %s22, 1
    %p150 = por %p148, %p149
    %p152 = scmp.ne.s32.totalorder %s137, %s151
    %p153 = scmp.eq.s32.totalorder %s22, 0
    %p154 = por %p152, %p153
    %s156 = sadd.s32 %s155, 1
    %p159 = scmp.eq.s32.totalorder %s16, 1
    %p160 = scmp.ne.s32.totalorder %s155, %s157
    %p161 = scmp.eq.s32.totalorder %s16, 0
    %p162 = por %p160, %p161
    %p163 = scmp.ne.s32.totalorder %s155, %s157
    %p164 = scmp.eq.s32.totalorder %s21, 1
    %p165 = por %p163, %p164
    %p166 = scmp.ne.s32.totalorder %s157, %s158
    %p167 = scmp.eq.s32.totalorder %s21, 0
    %p168 = por %p166, %p167
    %p169 = scmp.ne.s32.totalorder %s157, %s158
    %p170 = scmp.eq.s32.totalorder %s22, 1
    %p171 = por %p169, %p170
    %p173 = scmp.ne.s32.totalorder %s158, %s172
    %p174 = scmp.eq.s32.totalorder %s22, 0
    %p175 = por %p173, %p174
    %s177 = sadd.s32 %s176, 1
    %p180 = scmp.eq.s32.totalorder %s16, 1
    %p181 = scmp.ne.s32.totalorder %s176, %s178
    %p182 = scmp.eq.s32.totalorder %s16, 0
    %p183 = por %p181, %p182
    %p184 = scmp.ne.s32.totalorder %s176, %s178
    %p185 = scmp.eq.s32.totalorder %s21, 1
    %p186 = por %p184, %p185
    %p187 = scmp.ne.s32.totalorder %s178, %s179
    %p188 = scmp.eq.s32.totalorder %s21, 0
    %p189 = por %p187, %p188
    %p190 = scmp.ne.s32.totalorder %s178, %s179
    %p191 = scmp.eq.s32.totalorder %s22, 1
    %p192 = por %p190, %p191
    %p194 = scmp.ne.s32.totalorder %s179, %s193
    %p195 = scmp.eq.s32.totalorder %s22, 0
    %p196 = por %p194, %p195
    %s198 = sadd.s32 %s197, 1
    %p201 = scmp.eq.s32.totalorder %s16, 1
    %p202 = scmp.ne.s32.totalorder %s197, %s199
    %p203 = scmp.eq.s32.totalorder %s16, 0
    %p204 = por %p202, %p203
    %p205 = scmp.ne.s32.totalorder %s197, %s199
    %p206 = scmp.eq.s32.totalorder %s21, 1
    %p207 = por %p205, %p206
    %p208 = scmp.ne.s32.totalorder %s199, %s200
    %p209 = scmp.eq.s32.totalorder %s21, 0
    %p210 = por %p208, %p209
    %p211 = scmp.ne.s32.totalorder %s199, %s200
    %p212 = scmp.eq.s32.totalorder %s22, 1
    %p213 = por %p211, %p212
    %p215 = scmp.ne.s32.totalorder %s200, %s214
    %p216 = scmp.eq.s32.totalorder %s22, 0
    %p217 = por %p215, %p216
    %s219 = sadd.s32 %s218, 1
    %p222 = scmp.eq.s32.totalorder %s16, 1
    %p223 = scmp.ne.s32.totalorder %s218, %s220
    %p224 = scmp.eq.s32.totalorder %s16, 0
    %p225 = por %p223, %p224
    %p226 = scmp.ne.s32.totalorder %s218, %s220
    %p227 = scmp.eq.s32.totalorder %s21, 1
    %p228 = por %p226, %p227
    %p229 = scmp.ne.s32.totalorder %s220, %s221
    %p230 = scmp.eq.s32.totalorder %s21, 0
    %p231 = por %p229, %p230
    %p232 = scmp.ne.s32.totalorder %s220, %s221
    %p233 = scmp.eq.s32.totalorder %s22, 1
    %p234 = por %p232, %p233
    %p236 = scmp.ne.s32.totalorder %s221, %s235
    %p237 = scmp.eq.s32.totalorder %s22, 0
    %p238 = por %p236, %p237
    %s239 = ssub.s32 %s16, %s23
    %p240 = scmp.eq.s32.totalorder %s239, 0
    %s242 = sadd.s32 %s241, 1
    %s243 = scalar_select %p240, %s241, %s242
    %p246 = pneg %p240
    %p247 = scmp.eq.s32.totalorder %s16, 1
    %p248 = por %p246, %p247
    %p249 = scmp.ne.s32.totalorder %s241, %s244
    %p250 = scmp.eq.s32.totalorder %s16, 0
    %p251 = por %p249, %p250
    %p252 = scmp.ne.s32.totalorder %s241, %s244
    %p253 = scmp.eq.s32.totalorder %s21, 1
    %p254 = por %p252, %p253
    %p255 = scmp.ne.s32.totalorder %s244, %s245
    %p256 = scmp.eq.s32.totalorder %s21, 0
    %p257 = por %p255, %p256
    %p258 = scmp.ne.s32.totalorder %s244, %s245
    %p259 = scmp.eq.s32.totalorder %s22, 1
    %p260 = por %p258, %p259
    %p262 = scmp.ne.s32.totalorder %s245, %s261
    %p263 = scmp.eq.s32.totalorder %s22, 0
    %p264 = por %p262, %p263
    %p265 = scmp.le.s32.totalorder 1, %s16
    %p266 = scmp.lt.s32.totalorder %s16, 3
    %p267 = pnand %p265, %p266
    %p268 = pneg %p267
    // Predicated region
    $region9: #{conv3_forward.1} parent=5 // pred_check
      _
    $region10: #{conv3_forward.1} parent=5 // pred_check_branch
      %270 = sbr.rel (%p267) target = $region12
    $region11: #{conv3_forward.1} parent=5 // pred_region
      %s271 = ssub.s32 %s16, 1
      // Predicated region
      $region13: #{conv3_forward.1} parent=11 // pred_check
        %p272 = pneg %p63
      $region14: #{conv3_forward.1} parent=11 // pred_check_branch
        %274 = sbr.rel (%p272) target = $region16
      $region15: #{conv3_forward.1} parent=11 // pred_region
        _
      $region16: #{conv3_forward.1} parent=11 // pred_fallthru
        _
      // Predicated region
      $region17: #{conv3_forward.1} parent=11 // pred_check
        %p275 = pneg %p84
      $region18: #{conv3_forward.1} parent=11 // pred_check_branch
        %277 = sbr.rel (%p275) target = $region20
      $region19: #{conv3_forward.1} parent=11 // pred_region
        _
      $region20: #{conv3_forward.1} parent=11 // pred_fallthru
        _
      // Predicated region
      $region21: #{conv3_forward.1} parent=11 // pred_check
        %p278 = pneg %p105
      $region22: #{conv3_forward.1} parent=11 // pred_check_branch
        %280 = sbr.rel (%p278) target = $region24
      $region23: #{conv3_forward.1} parent=11 // pred_region
        _
      $region24: #{conv3_forward.1} parent=11 // pred_fallthru
        _
      // Predicated region
      $region25: #{conv3_forward.1} parent=11 // pred_check
        %p281 = pneg %p126
      $region26: #{conv3_forward.1} parent=11 // pred_check_branch
        %283 = sbr.rel (%p281) target = $region28
      $region27: #{conv3_forward.1} parent=11 // pred_region
        _
      $region28: #{conv3_forward.1} parent=11 // pred_fallthru
        _
      // Predicated region
      $region29: #{conv3_forward.1} parent=11 // pred_check
        %p284 = pneg %p147
      $region30: #{conv3_forward.1} parent=11 // pred_check_branch
        %286 = sbr.rel (%p284) target = $region32
      $region31: #{conv3_forward.1} parent=11 // pred_region
        _
      $region32: #{conv3_forward.1} parent=11 // pred_fallthru
        _
      // Predicated region
      $region33: #{conv3_forward.1} parent=11 // pred_check
        %p287 = pneg %p168
      $region34: #{conv3_forward.1} parent=11 // pred_check_branch
        %289 = sbr.rel (%p287) target = $region36
      $region35: #{conv3_forward.1} parent=11 // pred_region
        _
      $region36: #{conv3_forward.1} parent=11 // pred_fallthru
        _
      // Predicated region
      $region37: #{conv3_forward.1} parent=11 // pred_check
        %p290 = pneg %p189
      $region38: #{conv3_forward.1} parent=11 // pred_check_branch
        %292 = sbr.rel (%p290) target = $region40
      $region39: #{conv3_forward.1} parent=11 // pred_region
        _
      $region40: #{conv3_forward.1} parent=11 // pred_fallthru
        _
      // Predicated region
      $region41: #{conv3_forward.1} parent=11 // pred_check
        %p293 = pneg %p210
      $region42: #{conv3_forward.1} parent=11 // pred_check_branch
        %295 = sbr.rel (%p293) target = $region44
      $region43: #{conv3_forward.1} parent=11 // pred_region
        _
      $region44: #{conv3_forward.1} parent=11 // pred_fallthru
        _
      // Predicated region
      $region45: #{conv3_forward.1} parent=11 // pred_check
        %p296 = pneg %p231
      $region46: #{conv3_forward.1} parent=11 // pred_check_branch
        %298 = sbr.rel (%p296) target = $region48
      $region47: #{conv3_forward.1} parent=11 // pred_region
        _
      $region48: #{conv3_forward.1} parent=11 // pred_fallthru
        _
    $region12: #{conv3_forward.1} parent=5 // pred_fallthru
      _
    %p299 = scmp.lt.s32.totalorder %s16, 2
    // Predicated region
    $region49: #{conv3_forward.1} parent=5 // pred_check
      %p300 = pneg %p299
    $region50: #{conv3_forward.1} parent=5 // pred_check_branch
      %302 = sbr.rel (%p300) target = $region52
    $region51: #{conv3_forward.1} parent=5 // pred_region
      // Predicated region
      $region53: #{conv3_forward.1} parent=51 // pred_check
        %p303 = pneg %p36
      $region54: #{conv3_forward.1} parent=51 // pred_check_branch
        %305 = sbr.rel (%p303) target = $region56
      $region55: #{conv3_forward.1} parent=51 // pred_region
        %p306 = scmp.lt.s32.totalorder %s16, 1
        %s307 = scalar_select %p306, %s16, 1
        %s308 = smul.addr %s307, 2
        %s309 = smul.addr %s308, 4
        %s310 = scalar_lea.vmem %s0, %s309
      $region56: #{conv3_forward.1} parent=51 // pred_fallthru
        _
    $region52: #{conv3_forward.1} parent=5 // pred_fallthru
      _
    %p311 = scmp.le.s32.totalorder 1, %s16
    %p312 = scmp.lt.s32.totalorder %s16, 3
    %p313 = pnand %p311, %p312
    %p314 = pneg %p313
    // Predicated region
    $region57: #{conv3_forward.1} parent=5 // pred_check
      _
    $region58: #{conv3_forward.1} parent=5 // pred_check_branch
      %316 = sbr.rel (%p313) target = $region60
    $region59: #{conv3_forward.1} parent=5 // pred_region
      %s317 = ssub.s32 %s16, 1
      %p318 = scmp.lt.s32.totalorder %s21, 1
      %s319 = scalar_select %p318, %s21, 1
      %s320 = smul.addr %s319, 2
      %s321 = smul.addr %s320, 4
      %s322 = scalar_lea.vmem %s0, %s321
      %p323 = pneg %p42
      %p324 = pneg %p39
      %p325 = pneg %p63
      %p326 = pneg %p60
      %p327 = pneg %p84
      %p328 = pneg %p81
      %p329 = pneg %p105
      %p330 = pneg %p102
      %p331 = pneg %p126
      %p332 = pneg %p123
      %p333 = pneg %p147
      %p334 = pneg %p144
      %p335 = pneg %p168
      %p336 = pneg %p165
      %p337 = pneg %p189
      %p338 = pneg %p186
      %p339 = pneg %p210
      %p340 = pneg %p207
      %p341 = pneg %p231
      %p342 = pneg %p228
      %p343 = pneg %p257
      %p344 = pneg %p254
      %p345 = scmp.lt.s32.totalorder %s21, 1
      %s346 = scalar_select %p345, %s21, 1
      %s347 = smul.addr %s346, 2
      %s348 = smul.addr %s347, 8
      %s349 = scalar_lea.vmem %s10, %s348
      %p350 = scmp.lt.s32.totalorder %s21, 1
      %s351 = scalar_select %p350, %s21, 1
      %s352 = smul.addr %s351, 2
      %s353 = smul.addr %s352, 4
      %s354 = scalar_lea.vmem %s0, %s353
      %p355 = scmp.lt.s32.totalorder %s21, 1
      %s356 = scalar_select %p355, %s21, 1
      %s357 = smul.addr %s356, 2
      %s358 = smul.addr %s357, 8
      %s359 = scalar_lea.vmem %s10, %s358
      %v361 = vld [vmem:[%s7] sm:$0xff]
      %v362 = vld [vmem:[%s8] sm:$0xff]
      %v363 = vld [vmem:[%s9] sm:$0xf]
      %v364 = vld [vmem:[%s354] sm:$0xff]
      %v365 = vld [vmem:[%s2] sm:$0xff]
      %v367 = vcombine.high %v364, %v364
      %368 = vrot.lane.b32.xlu0 %v364, 1
      %v369 = vpop.permute.xlu0 %368
      %370 = vrot.lane.b32.xlu0 %v367, 1
      %v371 = vpop.permute.xlu0 %370
      %vm372 = vcmask 7168
      %v373 = vsel %vm372, %v369, %v371
      %v376 = vsel %vm372, 0.0, %v369
      %v378 = vlaneseq
      %v379 = vshrl.u32 %v378, 7
      %v380 = vsub.s32 0, %v379
      %v381 = vrot.slane %v363, %v380
      %v382 = vlaneseq
      %v383 = vshrl.u32 %v382, 7
      %v384 = vsub.s32 2, %v383
      %v385 = vrot.slane %v363, %v384
      %v388 = vlaneseq
      %v389 = vshrl.u32 %v388, 7
      %v390 = vsub.s32 0, %v389
      %v391 = vrot.slane %v381, %v390
      %v392 = vlaneseq
      %v393 = vshrl.u32 %v392, 7
      %v394 = vsub.s32 0, %v393
      %v395 = vrot.slane %v385, %v394
      %v396 = vmul.f32 %v376, %v391
      %v397 = vmul.f32 %v373, %v395
      %v398 = vpack.c.bf16 %v396, %v396
      %v399 = vpack.c.bf16 %v397, %v397
      %v401 = vpack.c.bf16 %v364, %v364
      %v402 = vpack.c.bf16 %v367, %v367
      %403 = vrot.lane.b32.xlu0 %v364, 127
      %v404 = vpop.permute.xlu0 %403
      %405 = vrot.lane.b32.xlu0 %v367, 127
      %v406 = vpop.permute.xlu0 %405
      %vm407 = vcmask 1039360
      %v408 = vsel %vm407, %v404, %v406
      %v411 = vsel %vm407, %v406, 0.0
      %v412 = vlaneseq
      %v413 = vshrl.u32 %v412, 7
      %v414 = vsub.s32 1, %v413
      %v415 = vrot.slane %v363, %v414
      %v416 = vlaneseq
      %v417 = vshrl.u32 %v416, 7
      %v418 = vsub.s32 3, %v417
      %v419 = vrot.slane %v363, %v418
      %v422 = vlaneseq
      %v423 = vshrl.u32 %v422, 7
      %v424 = vsub.s32 1, %v423
      %v425 = vrot.slane %v415, %v424
      %v426 = vlaneseq
      %v427 = vshrl.u32 %v426, 7
      %v428 = vsub.s32 1, %v427
      %v429 = vrot.slane %v419, %v428
      %v430 = vmul.f32 %v408, %v425
      %v431 = vmul.f32 %v411, %v429
      %v432 = vpack.c.bf16 %v430, %v430
      %v433 = vpack.c.bf16 %v431, %v431
      %v434 = vld [vmem:[%s1] sm:$0xf]
      %437 = vrot.lane.b32.xlu0 %v398, 16
      %v438 = vpop.permute.xlu0 %437
      %439 = vrot.lane.b32.xlu0 %v399, 16
      %v440 = vpop.permute.xlu0 %439
      %vm441 = vcmask 130048
      %v442 = vsel %vm441, %v438, %v440
      %vm443 = vcmask 130048
      %v446 = vsel %vm443, 0, %v438
      %s447 = scalar_lea.vmem %s1, 4
      %v448 = vld [vmem:[%s447] sm:$0xf]
      %451 = vrot.lane.b32.xlu0 %v401, 16
      %v452 = vpop.permute.xlu0 %451
      %453 = vrot.lane.b32.xlu0 %v402, 16
      %v454 = vpop.permute.xlu0 %453
      %v455 = vsel %vm441, %v452, %v454
      %v457 = vsel %vm443, 0, %v452
      %vm458 = vcmask 31744
      %v460 = vsel %vm458, %v448, 0
      %vm462 = vcmask 1041408
      %v463 = vsel %vm462, %v457, 0
      %v466 = vsel %vm462, %v455, 0
      %468 = vmatprep.subr.bf16.mxu0 0
      %469 = vmatpush1.bf16.msra.mxu0 0
      %470 = vmatprep.subr.bf16.mxu0 0
      %471 = vmatpush1.bf16.msra.mxu0 0
      %472 = vmatprep.subr.bf16.mxu0 0
      %473 = vmatpush1.bf16.msra.mxu0 0
      %474 = vmatprep.subr.bf16.mxu0 0
      %475 = vmatpush1.bf16.msra.mxu0 0
      %476 = vmatprep.subr.bf16.mxu0 0
      %477 = vmatpush1.bf16.msra.mxu0 0
      %478 = vmatprep.subr.bf16.mxu0 0
      %479 = vmatpush1.bf16.msra.mxu0 0
      %480 = vmatprep.subr.bf16.mxu0 0
      %481 = vmatpush1.bf16.msra.mxu0 0
      %482 = vmatprep.subr.bf16.mxu0 %v466
      %483 = vmatpush1.bf16.msra.mxu0 %v463
      %484 = vmatprep.subr.bf16.mxu0 0
      %485 = vmatpush2.bf16.msra.mxu0 0
      %486 = vmatprep.subr.bf16.mxu0 0
      %487 = vmatpush2.bf16.msra.mxu0 0
      %488 = vmatprep.subr.bf16.mxu0 0
      %489 = vmatpush2.bf16.msra.mxu0 0
      %490 = vmatprep.subr.bf16.mxu0 0
      %491 = vmatpush2.bf16.msra.mxu0 0
      %492 = vmatprep.subr.bf16.mxu0 0
      %493 = vmatpush2.bf16.msra.mxu0 0
      %494 = vmatprep.subr.bf16.mxu0 0
      %495 = vmatpush2.bf16.msra.mxu0 0
      %496 = vmatprep.subr.bf16.mxu0 0
      %497 = vmatpush2.bf16.msra.mxu0 0
      %498 = vmatprep.subr.bf16.mxu0 0
      %499 = vmatpush2.bf16.msra.mxu0 0
      %500 = vmatprep.mubr.bf16.mxu0 0
      %501 = vmatmul.mubr.bf16.gmra.mxu0 %v460
      %v502 = vpop.f32.mrf.mxu0
      %v503 = vadd.f32 0.0, %v502
      %v504 = vpop.f32.mrf.mxu0
      %v505 = vadd.f32 0.0, %v504
      %v506 = vpop.f32.mrf.mxu0
      %v507 = vpop.f32.mrf.mxu0
      %508 = vdwg.mxu0
      %v510 = vsel %vm458, %v434, 0
      %v512 = vsel %vm462, %v446, 0
      %v515 = vsel %vm462, %v442, 0
      %517 = vmatprep.subr.bf16.mxu0 0
      %518 = vmatpush1.bf16.msra.mxu0 0
      %519 = vmatprep.subr.bf16.mxu0 0
      %520 = vmatpush1.bf16.msra.mxu0 0
      %521 = vmatprep.subr.bf16.mxu0 0
      %522 = vmatpush1.bf16.msra.mxu0 0
      %523 = vmatprep.subr.bf16.mxu0 0
      %524 = vmatpush1.bf16.msra.mxu0 0
      %525 = vmatprep.subr.bf16.mxu0 0
      %526 = vmatpush1.bf16.msra.mxu0 0
      %527 = vmatprep.subr.bf16.mxu0 0
      %528 = vmatpush1.bf16.msra.mxu0 0
      %529 = vmatprep.subr.bf16.mxu0 0
      %530 = vmatpush1.bf16.msra.mxu0 0
      %531 = vmatprep.subr.bf16.mxu0 %v515
      %532 = vmatpush1.bf16.msra.mxu0 %v512
      %533 = vmatprep.subr.bf16.mxu0 0
      %534 = vmatpush2.bf16.msra.mxu0 0
      %535 = vmatprep.subr.bf16.mxu0 0
      %536 = vmatpush2.bf16.msra.mxu0 0
      %537 = vmatprep.subr.bf16.mxu0 0
      %538 = vmatpush2.bf16.msra.mxu0 0
      %539 = vmatprep.subr.bf16.mxu0 0
      %540 = vmatpush2.bf16.msra.mxu0 0
      %541 = vmatprep.subr.bf16.mxu0 0
      %542 = vmatpush2.bf16.msra.mxu0 0
      %543 = vmatprep.subr.bf16.mxu0 0
      %544 = vmatpush2.bf16.msra.mxu0 0
      %545 = vmatprep.subr.bf16.mxu0 0
      %546 = vmatpush2.bf16.msra.mxu0 0
      %547 = vmatprep.subr.bf16.mxu0 0
      %548 = vmatpush2.bf16.msra.mxu0 0
      %549 = vmatprep.mubr.bf16.mxu0 0
      %550 = vmatmul.mubr.bf16.gmra.mxu0 %v510
      %v551 = vpop.f32.mrf.mxu0
      %v552 = vadd.f32 %v503, %v551
      %v553 = vpop.f32.mrf.mxu0
      %v554 = vadd.f32 %v505, %v553
      %v555 = vpop.f32.mrf.mxu0
      %v556 = vpop.f32.mrf.mxu0
      %557 = vdwg.mxu0
      %s558 = scalar_lea.vmem %s1, 8
      %v559 = vld [vmem:[%s558] sm:$0xf]
      %562 = vrot.lane.b32.xlu0 %v432, 16
      %v563 = vpop.permute.xlu0 %562
      %564 = vrot.lane.b32.xlu0 %v433, 16
      %v565 = vpop.permute.xlu0 %564
      %v566 = vsel %vm441, %v563, %v565
      %v568 = vsel %vm443, 0, %v563
      %v570 = vsel %vm458, %v559, 0
      %v572 = vsel %vm462, %v568, 0
      %v575 = vsel %vm462, %v566, 0
      %577 = vmatprep.subr.bf16.mxu0 0
      %578 = vmatpush1.bf16.msra.mxu0 0
      %579 = vmatprep.subr.bf16.mxu0 0
      %580 = vmatpush1.bf16.msra.mxu0 0
      %581 = vmatprep.subr.bf16.mxu0 0
      %582 = vmatpush1.bf16.msra.mxu0 0
      %583 = vmatprep.subr.bf16.mxu0 0
      %584 = vmatpush1.bf16.msra.mxu0 0
      %585 = vmatprep.subr.bf16.mxu0 0
      %586 = vmatpush1.bf16.msra.mxu0 0
      %587 = vmatprep.subr.bf16.mxu0 0
      %588 = vmatpush1.bf16.msra.mxu0 0
      %589 = vmatprep.subr.bf16.mxu0 0
      %590 = vmatpush1.bf16.msra.mxu0 0
      %591 = vmatprep.subr.bf16.mxu0 %v575
      %592 = vmatpush1.bf16.msra.mxu0 %v572
      %593 = vmatprep.subr.bf16.mxu0 0
      %594 = vmatpush2.bf16.msra.mxu0 0
      %595 = vmatprep.subr.bf16.mxu0 0
      %596 = vmatpush2.bf16.msra.mxu0 0
      %597 = vmatprep.subr.bf16.mxu0 0
      %598 = vmatpush2.bf16.msra.mxu0 0
      %599 = vmatprep.subr.bf16.mxu0 0
      %600 = vmatpush2.bf16.msra.mxu0 0
      %601 = vmatprep.subr.bf16.mxu0 0
      %602 = vmatpush2.bf16.msra.mxu0 0
      %603 = vmatprep.subr.bf16.mxu0 0
      %604 = vmatpush2.bf16.msra.mxu0 0
      %605 = vmatprep.subr.bf16.mxu0 0
      %606 = vmatpush2.bf16.msra.mxu0 0
      %607 = vmatprep.subr.bf16.mxu0 0
      %608 = vmatpush2.bf16.msra.mxu0 0
      %609 = vmatprep.mubr.bf16.mxu0 0
      %610 = vmatmul.mubr.bf16.gmra.mxu0 %v570
      %v611 = vpop.f32.mrf.mxu0
      %v612 = vadd.f32 0.0, %v611
      %v613 = vpop.f32.mrf.mxu0
      %v614 = vadd.f32 0.0, %v613
      %v615 = vpop.f32.mrf.mxu0
      %v616 = vpop.f32.mrf.mxu0
      %617 = vdwg.mxu0
      %v618 = vadd.f32 %v552, %v612
      %v619 = vadd.f32 %v554, %v614
      %s620 = scalar_lea.vmem %s1, 12
      %v621 = vld [vmem:[%s620] sm:$0xf]
      %v623 = vsel %vm458, %v621, 0
      %v626 = vsel %vm462, %v398, 0
      %v629 = vsel %vm462, %v399, 0
      %631 = vmatprep.subr.bf16.mxu0 0
      %632 = vmatpush1.bf16.msra.mxu0 0
      %633 = vmatprep.subr.bf16.mxu0 0
      %634 = vmatpush1.bf16.msra.mxu0 0
      %635 = vmatprep.subr.bf16.mxu0 0
      %636 = vmatpush1.bf16.msra.mxu0 0
      %637 = vmatprep.subr.bf16.mxu0 0
      %638 = vmatpush1.bf16.msra.mxu0 0
      %639 = vmatprep.subr.bf16.mxu0 0
      %640 = vmatpush1.bf16.msra.mxu0 0
      %641 = vmatprep.subr.bf16.mxu0 0
      %642 = vmatpush1.bf16.msra.mxu0 0
      %643 = vmatprep.subr.bf16.mxu0 0
      %644 = vmatpush1.bf16.msra.mxu0 0
      %645 = vmatprep.subr.bf16.mxu0 %v629
      %646 = vmatpush1.bf16.msra.mxu0 %v626
      %647 = vmatprep.subr.bf16.mxu0 0
      %648 = vmatpush2.bf16.msra.mxu0 0
      %649 = vmatprep.subr.bf16.mxu0 0
      %650 = vmatpush2.bf16.msra.mxu0 0
      %651 = vmatprep.subr.bf16.mxu0 0
      %652 = vmatpush2.bf16.msra.mxu0 0
      %653 = vmatprep.subr.bf16.mxu0 0
      %654 = vmatpush2.bf16.msra.mxu0 0
      %655 = vmatprep.subr.bf16.mxu0 0
      %656 = vmatpush2.bf16.msra.mxu0 0
      %657 = vmatprep.subr.bf16.mxu0 0
      %658 = vmatpush2.bf16.msra.mxu0 0
      %659 = vmatprep.subr.bf16.mxu0 0
      %660 = vmatpush2.bf16.msra.mxu0 0
      %661 = vmatprep.subr.bf16.mxu0 0
      %662 = vmatpush2.bf16.msra.mxu0 0
      %663 = vmatprep.mubr.bf16.mxu0 0
      %664 = vmatmul.mubr.bf16.gmra.mxu0 %v623
      %v665 = vpop.f32.mrf.mxu0
      %v666 = vadd.f32 0.0, %v665
      %v667 = vpop.f32.mrf.mxu0
      %v668 = vadd.f32 0.0, %v667
      %v669 = vpop.f32.mrf.mxu0
      %v670 = vpop.f32.mrf.mxu0
      %671 = vdwg.mxu0
      %v672 = vadd.f32 %v618, %v666
      %v673 = vadd.f32 %v619, %v668
      %s674 = scalar_lea.vmem %s1, 16
      %v675 = vld [vmem:[%s674] sm:$0xf]
      %v677 = vsel %vm458, %v675, 0
      %v680 = vsel %vm462, %v401, 0
      %v683 = vsel %vm462, %v402, 0
      %685 = vmatprep.subr.bf16.mxu0 0
      %686 = vmatpush1.bf16.msra.mxu0 0
      %687 = vmatprep.subr.bf16.mxu0 0
      %688 = vmatpush1.bf16.msra.mxu0 0
      %689 = vmatprep.subr.bf16.mxu0 0
      %690 = vmatpush1.bf16.msra.mxu0 0
      %691 = vmatprep.subr.bf16.mxu0 0
      %692 = vmatpush1.bf16.msra.mxu0 0
      %693 = vmatprep.subr.bf16.mxu0 0
      %694 = vmatpush1.bf16.msra.mxu0 0
      %695 = vmatprep.subr.bf16.mxu0 0
      %696 = vmatpush1.bf16.msra.mxu0 0
      %697 = vmatprep.subr.bf16.mxu0 0
      %698 = vmatpush1.bf16.msra.mxu0 0
      %699 = vmatprep.subr.bf16.mxu0 %v683
      %700 = vmatpush1.bf16.msra.mxu0 %v680
      %701 = vmatprep.subr.bf16.mxu0 0
      %702 = vmatpush2.bf16.msra.mxu0 0
      %703 = vmatprep.subr.bf16.mxu0 0
      %704 = vmatpush2.bf16.msra.mxu0 0
      %705 = vmatprep.subr.bf16.mxu0 0
      %706 = vmatpush2.bf16.msra.mxu0 0
      %707 = vmatprep.subr.bf16.mxu0 0
      %708 = vmatpush2.bf16.msra.mxu0 0
      %709 = vmatprep.subr.bf16.mxu0 0
      %710 = vmatpush2.bf16.msra.mxu0 0
      %711 = vmatprep.subr.bf16.mxu0 0
      %712 = vmatpush2.bf16.msra.mxu0 0
      %713 = vmatprep.subr.bf16.mxu0 0
      %714 = vmatpush2.bf16.msra.mxu0 0
      %715 = vmatprep.subr.bf16.mxu0 0
      %716 = vmatpush2.bf16.msra.mxu0 0
      %717 = vmatprep.mubr.bf16.mxu0 0
      %718 = vmatmul.mubr.bf16.gmra.mxu0 %v677
      %v719 = vpop.f32.mrf.mxu0
      %v720 = vadd.f32 0.0, %v719
      %v721 = vpop.f32.mrf.mxu0
      %v722 = vadd.f32 0.0, %v721
      %v723 = vpop.f32.mrf.mxu0
      %v724 = vpop.f32.mrf.mxu0
      %725 = vdwg.mxu0
      %v726 = vadd.f32 %v672, %v720
      %v727 = vadd.f32 %v673, %v722
      %s728 = scalar_lea.vmem %s1, 20
      %v729 = vld [vmem:[%s728] sm:$0xf]
      %v731 = vsel %vm458, %v729, 0
      %v734 = vsel %vm462, %v432, 0
      %v737 = vsel %vm462, %v433, 0
      %739 = vmatprep.subr.bf16.mxu0 0
      %740 = vmatpush1.bf16.msra.mxu0 0
      %741 = vmatprep.subr.bf16.mxu0 0
      %742 = vmatpush1.bf16.msra.mxu0 0
      %743 = vmatprep.subr.bf16.mxu0 0
      %744 = vmatpush1.bf16.msra.mxu0 0
      %745 = vmatprep.subr.bf16.mxu0 0
      %746 = vmatpush1.bf16.msra.mxu0 0
      %747 = vmatprep.subr.bf16.mxu0 0
      %748 = vmatpush1.bf16.msra.mxu0 0
      %749 = vmatprep.subr.bf16.mxu0 0
      %750 = vmatpush1.bf16.msra.mxu0 0
      %751 = vmatprep.subr.bf16.mxu0 0
      %752 = vmatpush1.bf16.msra.mxu0 0
      %753 = vmatprep.subr.bf16.mxu0 %v737
      %754 = vmatpush1.bf16.msra.mxu0 %v734
      %755 = vmatprep.subr.bf16.mxu0 0
      %756 = vmatpush2.bf16.msra.mxu0 0
      %757 = vmatprep.subr.bf16.mxu0 0
      %758 = vmatpush2.bf16.msra.mxu0 0
      %759 = vmatprep.subr.bf16.mxu0 0
      %760 = vmatpush2.bf16.msra.mxu0 0
      %761 = vmatprep.subr.bf16.mxu0 0
      %762 = vmatpush2.bf16.msra.mxu0 0
      %763 = vmatprep.subr.bf16.mxu0 0
      %764 = vmatpush2.bf16.msra.mxu0 0
      %765 = vmatprep.subr.bf16.mxu0 0
      %766 = vmatpush2.bf16.msra.mxu0 0
      %767 = vmatprep.subr.bf16.mxu0 0
      %768 = vmatpush2.bf16.msra.mxu0 0
      %769 = vmatprep.subr.bf16.mxu0 0
      %770 = vmatpush2.bf16.msra.mxu0 0
      %771 = vmatprep.mubr.bf16.mxu0 0
      %772 = vmatmul.mubr.bf16.gmra.mxu0 %v731
      %v773 = vpop.f32.mrf.mxu0
      %v774 = vadd.f32 0.0, %v773
      %v775 = vpop.f32.mrf.mxu0
      %v776 = vadd.f32 0.0, %v775
      %v777 = vpop.f32.mrf.mxu0
      %v778 = vpop.f32.mrf.mxu0
      %779 = vdwg.mxu0
      %v780 = vadd.f32 %v726, %v774
      %v781 = vadd.f32 %v727, %v776
      %s782 = scalar_lea.vmem %s1, 24
      %v783 = vld [vmem:[%s782] sm:$0xf]
      %784 = vrot.lane.b32.xlu0 %v398, 112
      %v785 = vpop.permute.xlu0 %784
      %786 = vrot.lane.b32.xlu0 %v399, 112
      %v787 = vpop.permute.xlu0 %786
      %vm788 = vcmask 916480
      %v789 = vsel %vm788, %v785, %v787
      %vm790 = vcmask 916480
      %v792 = vsel %vm790, %v787, 0
      %v794 = vsel %vm458, %v783, 0
      %v797 = vsel %vm462, %v789, 0
      %v799 = vsel %vm462, %v792, 0
      %801 = vmatprep.subr.bf16.mxu0 0
      %802 = vmatpush1.bf16.msra.mxu0 0
      %803 = vmatprep.subr.bf16.mxu0 0
      %804 = vmatpush1.bf16.msra.mxu0 0
      %805 = vmatprep.subr.bf16.mxu0 0
      %806 = vmatpush1.bf16.msra.mxu0 0
      %807 = vmatprep.subr.bf16.mxu0 0
      %808 = vmatpush1.bf16.msra.mxu0 0
      %809 = vmatprep.subr.bf16.mxu0 0
      %810 = vmatpush1.bf16.msra.mxu0 0
      %811 = vmatprep.subr.bf16.mxu0 0
      %812 = vmatpush1.bf16.msra.mxu0 0
      %813 = vmatprep.subr.bf16.mxu0 0
      %814 = vmatpush1.bf16.msra.mxu0 0
      %815 = vmatprep.subr.bf16.mxu0 %v799
      %816 = vmatpush1.bf16.msra.mxu0 %v797
      %817 = vmatprep.subr.bf16.mxu0 0
      %818 = vmatpush2.bf16.msra.mxu0 0
      %819 = vmatprep.subr.bf16.mxu0 0
      %820 = vmatpush2.bf16.msra.mxu0 0
      %821 = vmatprep.subr.bf16.mxu0 0
      %822 = vmatpush2.bf16.msra.mxu0 0
      %823 = vmatprep.subr.bf16.mxu0 0
      %824 = vmatpush2.bf16.msra.mxu0 0
      %825 = vmatprep.subr.bf16.mxu0 0
      %826 = vmatpush2.bf16.msra.mxu0 0
      %827 = vmatprep.subr.bf16.mxu0 0
      %828 = vmatpush2.bf16.msra.mxu0 0
      %829 = vmatprep.subr.bf16.mxu0 0
      %830 = vmatpush2.bf16.msra.mxu0 0
      %831 = vmatprep.subr.bf16.mxu0 0
      %832 = vmatpush2.bf16.msra.mxu0 0
      %833 = vmatprep.mubr.bf16.mxu0 0
      %834 = vmatmul.mubr.bf16.gmra.mxu0 %v794
      %v835 = vpop.f32.mrf.mxu0
      %v836 = vadd.f32 0.0, %v835
      %v837 = vpop.f32.mrf.mxu0
      %v838 = vadd.f32 0.0, %v837
      %v839 = vpop.f32.mrf.mxu0
      %v840 = vpop.f32.mrf.mxu0
      %841 = vdwg.mxu0
      %v842 = vadd.f32 %v780, %v836
      %v843 = vadd.f32 %v781, %v838
      %s844 = scalar_lea.vmem %s1, 28
      %v845 = vld [vmem:[%s844] sm:$0xf]
      %846 = vrot.lane.b32.xlu0 %v401, 112
      %v847 = vpop.permute.xlu0 %846
      %848 = vrot.lane.b32.xlu0 %v402, 112
      %v849 = vpop.permute.xlu0 %848
      %v850 = vsel %vm788, %v847, %v849
      %v852 = vsel %vm790, %v849, 0
      %v854 = vsel %vm458, %v845, 0
      %v857 = vsel %vm462, %v850, 0
      %v859 = vsel %vm462, %v852, 0
      %861 = vmatprep.subr.bf16.mxu0 0
      %862 = vmatpush1.bf16.msra.mxu0 0
      %863 = vmatprep.subr.bf16.mxu0 0
      %864 = vmatpush1.bf16.msra.mxu0 0
      %865 = vmatprep.subr.bf16.mxu0 0
      %866 = vmatpush1.bf16.msra.mxu0 0
      %867 = vmatprep.subr.bf16.mxu0 0
      %868 = vmatpush1.bf16.msra.mxu0 0
      %869 = vmatprep.subr.bf16.mxu0 0
      %870 = vmatpush1.bf16.msra.mxu0 0
      %871 = vmatprep.subr.bf16.mxu0 0
      %872 = vmatpush1.bf16.msra.mxu0 0
      %873 = vmatprep.subr.bf16.mxu0 0
      %874 = vmatpush1.bf16.msra.mxu0 0
      %875 = vmatprep.subr.bf16.mxu0 %v859
      %876 = vmatpush1.bf16.msra.mxu0 %v857
      %877 = vmatprep.subr.bf16.mxu0 0
      %878 = vmatpush2.bf16.msra.mxu0 0
      %879 = vmatprep.subr.bf16.mxu0 0
      %880 = vmatpush2.bf16.msra.mxu0 0
      %881 = vmatprep.subr.bf16.mxu0 0
      %882 = vmatpush2.bf16.msra.mxu0 0
      %883 = vmatprep.subr.bf16.mxu0 0
      %884 = vmatpush2.bf16.msra.mxu0 0
      %885 = vmatprep.subr.bf16.mxu0 0
      %886 = vmatpush2.bf16.msra.mxu0 0
      %887 = vmatprep.subr.bf16.mxu0 0
      %888 = vmatpush2.bf16.msra.mxu0 0
      %889 = vmatprep.subr.bf16.mxu0 0
      %890 = vmatpush2.bf16.msra.mxu0 0
      %891 = vmatprep.subr.bf16.mxu0 0
      %892 = vmatpush2.bf16.msra.mxu0 0
      %893 = vmatprep.mubr.bf16.mxu0 0
      %894 = vmatmul.mubr.bf16.gmra.mxu0 %v854
      %v895 = vpop.f32.mrf.mxu0
      %v896 = vadd.f32 0.0, %v895
      %v897 = vpop.f32.mrf.mxu0
      %v898 = vadd.f32 0.0, %v897
      %v899 = vpop.f32.mrf.mxu0
      %v900 = vpop.f32.mrf.mxu0
      %901 = vdwg.mxu0
      %v902 = vadd.f32 %v842, %v896
      %v903 = vadd.f32 %v843, %v898
      %s904 = scalar_lea.vmem %s1, 32
      %v905 = vld [vmem:[%s904] sm:$0xf]
      %906 = vrot.lane.b32.xlu0 %v432, 112
      %v907 = vpop.permute.xlu0 %906
      %908 = vrot.lane.b32.xlu0 %v433, 112
      %v909 = vpop.permute.xlu0 %908
      %v910 = vsel %vm788, %v907, %v909
      %v912 = vsel %vm790, %v909, 0
      %v914 = vsel %vm458, %v905, 0
      %v917 = vsel %vm462, %v910, 0
      %v919 = vsel %vm462, %v912, 0
      %921 = vmatprep.subr.bf16.mxu0 0
      %922 = vmatpush1.bf16.msra.mxu0 0
      %923 = vmatprep.subr.bf16.mxu0 0
      %924 = vmatpush1.bf16.msra.mxu0 0
      %925 = vmatprep.subr.bf16.mxu0 0
      %926 = vmatpush1.bf16.msra.mxu0 0
      %927 = vmatprep.subr.bf16.mxu0 0
      %928 = vmatpush1.bf16.msra.mxu0 0
      %929 = vmatprep.subr.bf16.mxu0 0
      %930 = vmatpush1.bf16.msra.mxu0 0
      %931 = vmatprep.subr.bf16.mxu0 0
      %932 = vmatpush1.bf16.msra.mxu0 0
      %933 = vmatprep.subr.bf16.mxu0 0
      %934 = vmatpush1.bf16.msra.mxu0 0
      %935 = vmatprep.subr.bf16.mxu0 %v919
      %936 = vmatpush1.bf16.msra.mxu0 %v917
      %937 = vmatprep.subr.bf16.mxu0 0
      %938 = vmatpush2.bf16.msra.mxu0 0
      %939 = vmatprep.subr.bf16.mxu0 0
      %940 = vmatpush2.bf16.msra.mxu0 0
      %941 = vmatprep.subr.bf16.mxu0 0
      %942 = vmatpush2.bf16.msra.mxu0 0
      %943 = vmatprep.subr.bf16.mxu0 0
      %944 = vmatpush2.bf16.msra.mxu0 0
      %945 = vmatprep.subr.bf16.mxu0 0
      %946 = vmatpush2.bf16.msra.mxu0 0
      %947 = vmatprep.subr.bf16.mxu0 0
      %948 = vmatpush2.bf16.msra.mxu0 0
      %949 = vmatprep.subr.bf16.mxu0 0
      %950 = vmatpush2.bf16.msra.mxu0 0
      %951 = vmatprep.subr.bf16.mxu0 0
      %952 = vmatpush2.bf16.msra.mxu0 0
      %953 = vmatprep.mubr.bf16.mxu0 0
      %954 = vmatmul.mubr.bf16.gmra.mxu0 %v914
      %v955 = vpop.f32.mrf.mxu0
      %v956 = vadd.f32 0.0, %v955
      %v957 = vpop.f32.mrf.mxu0
      %v958 = vadd.f32 0.0, %v957
      %v959 = vpop.f32.mrf.mxu0
      %v960 = vpop.f32.mrf.mxu0
      %961 = vdwg.mxu0
      %v962 = vadd.f32 %v902, %v956
      %v963 = vadd.f32 %v903, %v958
      %965 = vset.pattern.permute.xlu0 0
      %966 = vperm.xlu0 %965, %v365
      %v967 = vpop.permute.xlu0 %966
      %v969 = vadd.f32 %v962, %v967
      %v970 = vadd.f32 %v963, %v967
      %v971 = vadd.f32 %v969, %v970
      %972 = vadd.xlane.f32.xlu0 %v971
      %v973 = vpop.xlane.xlu0 %972
      %v974 = vmul.f32 %v969, %v969
      %v975 = vmul.f32 %v970, %v970
      %v976 = vadd.f32 %v974, %v975
      %977 = vadd.xlane.f32.xlu0 %v976
      %v978 = vpop.xlane.xlu0 %977
      %v979 = vsel %vm372, %v973, %v978
      %vm980 = vcmask 64512
      %v982 = vsel %vm980, %v362, 0
      %984 = vmatprep.subr.mxu0 0.0
      %985 = vmatpush1.msra.mxu0 0.0
      %986 = vmatprep.subr.mxu0 0.0
      %987 = vmatpush1.msra.mxu0 0.0
      %988 = vmatprep.subr.mxu0 0.0
      %989 = vmatpush1.msra.mxu0 0.0
      %990 = vmatprep.subr.mxu0 0.0
      %991 = vmatpush1.msra.mxu0 0.0
      %992 = vmatprep.subr.mxu0 0.0
      %993 = vmatpush1.msra.mxu0 0.0
      %994 = vmatprep.subr.mxu0 0.0
      %995 = vmatpush1.msra.mxu0 0.0
      %996 = vmatprep.subr.mxu0 0.0
      %997 = vmatpush1.msra.mxu0 0.0
      %998 = vmatprep.subr.mxu0 0.0
      %999 = vmatpush1.msra.mxu0 0.0
      %1000 = vmatprep.subr.mxu0 0.0
      %1001 = vmatpush1.msra.mxu0 0.0
      %1002 = vmatprep.subr.mxu0 0.0
      %1003 = vmatpush1.msra.mxu0 0.0
      %1004 = vmatprep.subr.mxu0 0.0
      %1005 = vmatpush1.msra.mxu0 0.0
      %1006 = vmatprep.subr.mxu0 0.0
      %1007 = vmatpush1.msra.mxu0 0.0
      %1008 = vmatprep.subr.mxu0 0.0
      %1009 = vmatpush1.msra.mxu0 0.0
      %1010 = vmatprep.subr.mxu0 0.0
      %1011 = vmatpush1.msra.mxu0 0.0
      %1012 = vmatprep.subr.mxu0 0.0
      %1013 = vmatpush1.msra.mxu0 0.0
      %1014 = vmatprep.subr.mxu0 0.0
      %1015 = vmatpush1.msra.mxu0 %v979
      %1016 = vmatprep.subr.mxu0 0.0
      %1017 = vmatpush2.msra.mxu0 0.0
      %1018 = vmatprep.subr.mxu0 0.0
      %1019 = vmatpush2.msra.mxu0 0.0
      %1020 = vmatprep.subr.mxu0 0.0
      %1021 = vmatpush2.msra.mxu0 0.0
      %1022 = vmatprep.subr.mxu0 0.0
      %1023 = vmatpush2.msra.mxu0 0.0
      %1024 = vmatprep.subr.mxu0 0.0
      %1025 = vmatpush2.msra.mxu0 0.0
      %1026 = vmatprep.subr.mxu0 0.0
      %1027 = vmatpush2.msra.mxu0 0.0
      %1028 = vmatprep.subr.mxu0 0.0
      %1029 = vmatpush2.msra.mxu0 0.0
      %1030 = vmatprep.subr.mxu0 0.0
      %1031 = vmatpush2.msra.mxu0 0.0
      %1032 = vmatprep.subr.mxu0 0.0
      %1033 = vmatpush2.msra.mxu0 0.0
      %1034 = vmatprep.subr.mxu0 0.0
      %1035 = vmatpush2.msra.mxu0 0.0
      %1036 = vmatprep.subr.mxu0 0.0
      %1037 = vmatpush2.msra.mxu0 0.0
      %1038 = vmatprep.subr.mxu0 0.0
      %1039 = vmatpush2.msra.mxu0 0.0
      %1040 = vmatprep.subr.mxu0 0.0
      %1041 = vmatpush2.msra.mxu0 0.0
      %1042 = vmatprep.subr.mxu0 0.0
      %1043 = vmatpush2.msra.mxu0 0.0
      %1044 = vmatprep.subr.mxu0 0.0
      %1045 = vmatpush2.msra.mxu0 0.0
      %1046 = vmatprep.subr.mxu0 0.0
      %1047 = vmatpush2.msra.mxu0 0.0
      %1048 = vmatprep.mubr.f32.mxu0 0.0
      %1049 = vmatmul.mubr.f32.gmra.mxu0 %v982
      %v1050 = vpop.f32.mrf.mxu0
      %v1051 = vadd.f32 0.0, %v1050
      %v1052 = vpop.f32.mrf.mxu0
      %1053 = vdwg.mxu0
      %v1054 = vmul.f32 %v1051, 0.00390625
      %v1055 = vmul.f32 %v1054, %v1054
      %1057 = vrot.lane.b32.xlu0 %v1055, 1
      %v1058 = vpop.permute.xlu0 %1057
      %v1060 = vsub.f32 %v1054, %v1058
      %v1061 = vmax.f32 %v1060, 0.0
      %v1062 = vadd.f32 %v1061, 1e-05
      %v1063 = vrsqrt.pop %v1062
      %v1064 = vsel %vm372, %v1054, %v1063
      %v1066 = vsel %vm980, %v361, 0
      %1068 = vmatprep.subr.mxu0 0.0
      %1069 = vmatpush1.msra.mxu0 0.0
      %1070 = vmatprep.subr.mxu0 0.0
      %1071 = vmatpush1.msra.mxu0 0.0
      %1072 = vmatprep.subr.mxu0 0.0
      %1073 = vmatpush1.msra.mxu0 0.0
      %1074 = vmatprep.subr.mxu0 0.0
      %1075 = vmatpush1.msra.mxu0 0.0
      %1076 = vmatprep.subr.mxu0 0.0
      %1077 = vmatpush1.msra.mxu0 0.0
      %1078 = vmatprep.subr.mxu0 0.0
      %1079 = vmatpush1.msra.mxu0 0.0
      %1080 = vmatprep.subr.mxu0 0.0
      %1081 = vmatpush1.msra.mxu0 0.0
      %1082 = vmatprep.subr.mxu0 0.0
      %1083 = vmatpush1.msra.mxu0 0.0
      %1084 = vmatprep.subr.mxu0 0.0
      %1085 = vmatpush1.msra.mxu0 0.0
      %1086 = vmatprep.subr.mxu0 0.0
      %1087 = vmatpush1.msra.mxu0 0.0
      %1088 = vmatprep.subr.mxu0 0.0
      %1089 = vmatpush1.msra.mxu0 0.0
      %1090 = vmatprep.subr.mxu0 0.0
      %1091 = vmatpush1.msra.mxu0 0.0
      %1092 = vmatprep.subr.mxu0 0.0
      %1093 = vmatpush1.msra.mxu0 0.0
      %1094 = vmatprep.subr.mxu0 0.0
      %1095 = vmatpush1.msra.mxu0 0.0
      %1096 = vmatprep.subr.mxu0 0.0
      %1097 = vmatpush1.msra.mxu0 0.0
      %1098 = vmatprep.subr.mxu0 0.0
      %1099 = vmatpush1.msra.mxu0 %v1064
      %1100 = vmatprep.subr.mxu0 0.0
      %1101 = vmatpush2.msra.mxu0 0.0
      %1102 = vmatprep.subr.mxu0 0.0
      %1103 = vmatpush2.msra.mxu0 0.0
      %1104 = vmatprep.subr.mxu0 0.0
      %1105 = vmatpush2.msra.mxu0 0.0
      %1106 = vmatprep.subr.mxu0 0.0
      %1107 = vmatpush2.msra.mxu0 0.0
      %1108 = vmatprep.subr.mxu0 0.0
      %1109 = vmatpush2.msra.mxu0 0.0
      %1110 = vmatprep.subr.mxu0 0.0
      %1111 = vmatpush2.msra.mxu0 0.0
      %1112 = vmatprep.subr.mxu0 0.0
      %1113 = vmatpush2.msra.mxu0 0.0
      %1114 = vmatprep.subr.mxu0 0.0
      %1115 = vmatpush2.msra.mxu0 0.0
      %1116 = vmatprep.subr.mxu0 0.0
      %1117 = vmatpush2.msra.mxu0 0.0
      %1118 = vmatprep.subr.mxu0 0.0
      %1119 = vmatpush2.msra.mxu0 0.0
      %1120 = vmatprep.subr.mxu0 0.0
      %1121 = vmatpush2.msra.mxu0 0.0
      %1122 = vmatprep.subr.mxu0 0.0
      %1123 = vmatpush2.msra.mxu0 0.0
      %1124 = vmatprep.subr.mxu0 0.0
      %1125 = vmatpush2.msra.mxu0 0.0
      %1126 = vmatprep.subr.mxu0 0.0
      %1127 = vmatpush2.msra.mxu0 0.0
      %1128 = vmatprep.subr.mxu0 0.0
      %1129 = vmatpush2.msra.mxu0 0.0
      %1130 = vmatprep.subr.mxu0 0.0
      %1131 = vmatpush2.msra.mxu0 0.0
      %1132 = vmatprep.mubr.f32.mxu0 0.0
      %1133 = vmatmul.mubr.f32.gmra.mxu0 %v1066
      %v1134 = vpop.f32.mrf.mxu0
      %v1135 = vadd.f32 0.0, %v1134
      %v1136 = vpop.f32.mrf.mxu0
      %1137 = vdwg.mxu0
      %1139 = vset.pattern.permute.xlu0 0
      %1140 = vperm.xlu0 %1139, %v1135
      %v1141 = vpop.permute.xlu0 %1140
      %v1143 = vsub.f32 %v969, %v1141
      %v1144 = vsub.f32 %v970, %v1141
      %v1145 = vmul.f32 %v1135, %v365
      %1147 = vset.pattern.permute.xlu0 1
      %1148 = vperm.xlu0 %1147, %v1145
      %v1149 = vpop.permute.xlu0 %1148
      %v1151 = vmul.f32 %v1143, %v1149
      %v1152 = vmul.f32 %v1144, %v1149
      %1153 = vset.pattern.permute.xlu0 2
      %1154 = vperm.xlu0 %1153, %v365
      %v1155 = vpop.permute.xlu0 %1154
      %v1157 = vadd.f32 %v1151, %v1155
      %v1158 = vadd.f32 %v1152, %v1155
      %v1159 = vmax.f32 %v1157, 0.0
      %v1160 = vmax.f32 %v1158, 0.0
      %1161 = vst [vmem:[#allocation2] sm:$0xff] %v1159
      %1162 = vst [vmem:[#allocation2 + $0x8] sm:$0xff] %v1160
      %v1163 = vld [vmem:[#allocation2] sm:$0xff]
      %v1164 = vld [vmem:[#allocation2 + $0x8] sm:$0xff]
      %v1165 = vld [vmem:[%s4] sm:$0xff]
      %1168 = vrot.lane.b32.xlu0 %v1163, 1
      %v1169 = vpop.permute.xlu0 %1168
      %1170 = vrot.lane.b32.xlu0 %v1164, 1
      %v1171 = vpop.permute.xlu0 %1170
      %v1172 = vsel %vm372, %v1169, %v1171
      %v1175 = vsel %vm372, 0.0, %v1169
      %v1176 = vmul.f32 %v1175, %v391
      %v1177 = vmul.f32 %v1172, %v395
      %v1178 = vpack.c.bf16 %v1176, %v1176
      %v1179 = vpack.c.bf16 %v1177, %v1177
      %v1180 = vpack.c.bf16 %v1163, %v1163
      %v1181 = vpack.c.bf16 %v1164, %v1164
      %1182 = vrot.lane.b32.xlu0 %v1163, 127
      %v1183 = vpop.permute.xlu0 %1182
      %1184 = vrot.lane.b32.xlu0 %v1164, 127
      %v1185 = vpop.permute.xlu0 %1184
      %v1186 = vsel %vm407, %v1183, %v1185
      %v1189 = vsel %vm407, %v1185, 0.0
      %v1190 = vmul.f32 %v1186, %v425
      %v1191 = vmul.f32 %v1189, %v429
      %v1192 = vpack.c.bf16 %v1190, %v1190
      %v1193 = vpack.c.bf16 %v1191, %v1191
      %v1194 = vld [vmem:[%s3] sm:$0xf]
      %1197 = vrot.lane.b32.xlu0 %v1178, 16
      %v1198 = vpop.permute.xlu0 %1197
      %1199 = vrot.lane.b32.xlu0 %v1179, 16
      %v1200 = vpop.permute.xlu0 %1199
      %v1201 = vsel %vm441, %v1198, %v1200
      %v1203 = vsel %vm443, 0, %v1198
      %s1204 = scalar_lea.vmem %s3, 4
      %v1205 = vld [vmem:[%s1204] sm:$0xf]
      %1208 = vrot.lane.b32.xlu0 %v1180, 16
      %v1209 = vpop.permute.xlu0 %1208
      %1210 = vrot.lane.b32.xlu0 %v1181, 16
      %v1211 = vpop.permute.xlu0 %1210
      %v1212 = vsel %vm441, %v1209, %v1211
      %v1214 = vsel %vm443, 0, %v1209
      %v1216 = vsel %vm980, %v1205, 0
      %vm1218 = vcmask 1043456
      %v1219 = vsel %vm1218, %v1214, 0
      %v1222 = vsel %vm1218, %v1212, 0
      %1224 = vmatprep.subr.bf16.mxu0 0
      %1225 = vmatpush1.bf16.msra.mxu0 0
      %1226 = vmatprep.subr.bf16.mxu0 0
      %1227 = vmatpush1.bf16.msra.mxu0 0
      %1228 = vmatprep.subr.bf16.mxu0 0
      %1229 = vmatpush1.bf16.msra.mxu0 0
      %1230 = vmatprep.subr.bf16.mxu0 0
      %1231 = vmatpush1.bf16.msra.mxu0 0
      %1232 = vmatprep.subr.bf16.mxu0 0
      %1233 = vmatpush1.bf16.msra.mxu0 0
      %1234 = vmatprep.subr.bf16.mxu0 0
      %1235 = vmatpush1.bf16.msra.mxu0 0
      %1236 = vmatprep.subr.bf16.mxu0 0
      %1237 = vmatpush1.bf16.msra.mxu0 0
      %1238 = vmatprep.subr.bf16.mxu0 %v1222
      %1239 = vmatpush1.bf16.msra.mxu0 %v1219
      %1240 = vmatprep.subr.bf16.mxu0 0
      %1241 = vmatpush2.bf16.msra.mxu0 0
      %1242 = vmatprep.subr.bf16.mxu0 0
      %1243 = vmatpush2.bf16.msra.mxu0 0
      %1244 = vmatprep.subr.bf16.mxu0 0
      %1245 = vmatpush2.bf16.msra.mxu0 0
      %1246 = vmatprep.subr.bf16.mxu0 0
      %1247 = vmatpush2.bf16.msra.mxu0 0
      %1248 = vmatprep.subr.bf16.mxu0 0
      %1249 = vmatpush2.bf16.msra.mxu0 0
      %1250 = vmatprep.subr.bf16.mxu0 0
      %1251 = vmatpush2.bf16.msra.mxu0 0
      %1252 = vmatprep.subr.bf16.mxu0 0
      %1253 = vmatpush2.bf16.msra.mxu0 0
      %1254 = vmatprep.subr.bf16.mxu0 0
      %1255 = vmatpush2.bf16.msra.mxu0 0
      %1256 = vmatprep.mubr.bf16.mxu0 0
      %1257 = vmatmul.mubr.bf16.gmra.mxu0 %v1216
      %v1258 = vpop.f32.mrf.mxu0
      %v1259 = vadd.f32 0.0, %v1258
      %v1260 = vpop.f32.mrf.mxu0
      %v1261 = vadd.f32 0.0, %v1260
      %v1262 = vpop.f32.mrf.mxu0
      %v1263 = vpop.f32.mrf.mxu0
      %1264 = vdwg.mxu0
      %v1266 = vsel %vm980, %v1194, 0
      %v1268 = vsel %vm1218, %v1203, 0
      %v1271 = vsel %vm1218, %v1201, 0
      %1273 = vmatprep.subr.bf16.mxu0 0
      %1274 = vmatpush1.bf16.msra.mxu0 0
      %1275 = vmatprep.subr.bf16.mxu0 0
      %1276 = vmatpush1.bf16.msra.mxu0 0
      %1277 = vmatprep.subr.bf16.mxu0 0
      %1278 = vmatpush1.bf16.msra.mxu0 0
      %1279 = vmatprep.subr.bf16.mxu0 0
      %1280 = vmatpush1.bf16.msra.mxu0 0
      %1281 = vmatprep.subr.bf16.mxu0 0
      %1282 = vmatpush1.bf16.msra.mxu0 0
      %1283 = vmatprep.subr.bf16.mxu0 0
      %1284 = vmatpush1.bf16.msra.mxu0 0
      %1285 = vmatprep.subr.bf16.mxu0 0
      %1286 = vmatpush1.bf16.msra.mxu0 0
      %1287 = vmatprep.subr.bf16.mxu0 %v1271
      %1288 = vmatpush1.bf16.msra.mxu0 %v1268
      %1289 = vmatprep.subr.bf16.mxu0 0
      %1290 = vmatpush2.bf16.msra.mxu0 0
      %1291 = vmatprep.subr.bf16.mxu0 0
      %1292 = vmatpush2.bf16.msra.mxu0 0
      %1293 = vmatprep.subr.bf16.mxu0 0
      %1294 = vmatpush2.bf16.msra.mxu0 0
      %1295 = vmatprep.subr.bf16.mxu0 0
      %1296 = vmatpush2.bf16.msra.mxu0 0
      %1297 = vmatprep.subr.bf16.mxu0 0
      %1298 = vmatpush2.bf16.msra.mxu0 0
      %1299 = vmatprep.subr.bf16.mxu0 0
      %1300 = vmatpush2.bf16.msra.mxu0 0
      %1301 = vmatprep.subr.bf16.mxu0 0
      %1302 = vmatpush2.bf16.msra.mxu0 0
      %1303 = vmatprep.subr.bf16.mxu0 0
      %1304 = vmatpush2.bf16.msra.mxu0 0
      %1305 = vmatprep.mubr.bf16.mxu0 0
      %1306 = vmatmul.mubr.bf16.gmra.mxu0 %v1266
      %v1307 = vpop.f32.mrf.mxu0
      %v1308 = vadd.f32 %v1259, %v1307
      %v1309 = vpop.f32.mrf.mxu0
      %v1310 = vadd.f32 %v1261, %v1309
      %v1311 = vpop.f32.mrf.mxu0
      %v1312 = vpop.f32.mrf.mxu0
      %1313 = vdwg.mxu0
      %s1314 = scalar_lea.vmem %s3, 8
      %v1315 = vld [vmem:[%s1314] sm:$0xf]
      %1318 = vrot.lane.b32.xlu0 %v1192, 16
      %v1319 = vpop.permute.xlu0 %1318
      %1320 = vrot.lane.b32.xlu0 %v1193, 16
      %v1321 = vpop.permute.xlu0 %1320
      %v1322 = vsel %vm441, %v1319, %v1321
      %v1324 = vsel %vm443, 0, %v1319
      %v1326 = vsel %vm980, %v1315, 0
      %v1328 = vsel %vm1218, %v1324, 0
      %v1331 = vsel %vm1218, %v1322, 0
      %1333 = vmatprep.subr.bf16.mxu0 0
      %1334 = vmatpush1.bf16.msra.mxu0 0
      %1335 = vmatprep.subr.bf16.mxu0 0
      %1336 = vmatpush1.bf16.msra.mxu0 0
      %1337 = vmatprep.subr.bf16.mxu0 0
      %1338 = vmatpush1.bf16.msra.mxu0 0
      %1339 = vmatprep.subr.bf16.mxu0 0
      %1340 = vmatpush1.bf16.msra.mxu0 0
      %1341 = vmatprep.subr.bf16.mxu0 0
      %1342 = vmatpush1.bf16.msra.mxu0 0
      %1343 = vmatprep.subr.bf16.mxu0 0
      %1344 = vmatpush1.bf16.msra.mxu0 0
      %1345 = vmatprep.subr.bf16.mxu0 0
      %1346 = vmatpush1.bf16.msra.mxu0 0
      %1347 = vmatprep.subr.bf16.mxu0 %v1331
      %1348 = vmatpush1.bf16.msra.mxu0 %v1328
      %1349 = vmatprep.subr.bf16.mxu0 0
      %1350 = vmatpush2.bf16.msra.mxu0 0
      %1351 = vmatprep.subr.bf16.mxu0 0
      %1352 = vmatpush2.bf16.msra.mxu0 0
      %1353 = vmatprep.subr.bf16.mxu0 0
      %1354 = vmatpush2.bf16.msra.mxu0 0
      %1355 = vmatprep.subr.bf16.mxu0 0
      %1356 = vmatpush2.bf16.msra.mxu0 0
      %1357 = vmatprep.subr.bf16.mxu0 0
      %1358 = vmatpush2.bf16.msra.mxu0 0
      %1359 = vmatprep.subr.bf16.mxu0 0
      %1360 = vmatpush2.bf16.msra.mxu0 0
      %1361 = vmatprep.subr.bf16.mxu0 0
      %1362 = vmatpush2.bf16.msra.mxu0 0
      %1363 = vmatprep.subr.bf16.mxu0 0
      %1364 = vmatpush2.bf16.msra.mxu0 0
      %1365 = vmatprep.mubr.bf16.mxu0 0
      %1366 = vmatmul.mubr.bf16.gmra.mxu0 %v1326
      %v1367 = vpop.f32.mrf.mxu0
      %v1368 = vadd.f32 0.0, %v1367
      %v1369 = vpop.f32.mrf.mxu0
      %v1370 = vadd.f32 0.0, %v1369
      %v1371 = vpop.f32.mrf.mxu0
      %v1372 = vpop.f32.mrf.mxu0
      %1373 = vdwg.mxu0
      %v1374 = vadd.f32 %v1308, %v1368
      %v1375 = vadd.f32 %v1310, %v1370
      %s1376 = scalar_lea.vmem %s3, 12
      %v1377 = vld [vmem:[%s1376] sm:$0xf]
      %v1379 = vsel %vm980, %v1377, 0
      %v1382 = vsel %vm1218, %v1178, 0
      %v1385 = vsel %vm1218, %v1179, 0
      %1387 = vmatprep.subr.bf16.mxu0 0
      %1388 = vmatpush1.bf16.msra.mxu0 0
      %1389 = vmatprep.subr.bf16.mxu0 0
      %1390 = vmatpush1.bf16.msra.mxu0 0
      %1391 = vmatprep.subr.bf16.mxu0 0
      %1392 = vmatpush1.bf16.msra.mxu0 0
      %1393 = vmatprep.subr.bf16.mxu0 0
      %1394 = vmatpush1.bf16.msra.mxu0 0
      %1395 = vmatprep.subr.bf16.mxu0 0
      %1396 = vmatpush1.bf16.msra.mxu0 0
      %1397 = vmatprep.subr.bf16.mxu0 0
      %1398 = vmatpush1.bf16.msra.mxu0 0
      %1399 = vmatprep.subr.bf16.mxu0 0
      %1400 = vmatpush1.bf16.msra.mxu0 0
      %1401 = vmatprep.subr.bf16.mxu0 %v1385
      %1402 = vmatpush1.bf16.msra.mxu0 %v1382
      %1403 = vmatprep.subr.bf16.mxu0 0
      %1404 = vmatpush2.bf16.msra.mxu0 0
      %1405 = vmatprep.subr.bf16.mxu0 0
      %1406 = vmatpush2.bf16.msra.mxu0 0
      %1407 = vmatprep.subr.bf16.mxu0 0
      %1408 = vmatpush2.bf16.msra.mxu0 0
      %1409 = vmatprep.subr.bf16.mxu0 0
      %1410 = vmatpush2.bf16.msra.mxu0 0
      %1411 = vmatprep.subr.bf16.mxu0 0
      %1412 = vmatpush2.bf16.msra.mxu0 0
      %1413 = vmatprep.subr.bf16.mxu0 0
      %1414 = vmatpush2.bf16.msra.mxu0 0
      %1415 = vmatprep.subr.bf16.mxu0 0
      %1416 = vmatpush2.bf16.msra.mxu0 0
      %1417 = vmatprep.subr.bf16.mxu0 0
      %1418 = vmatpush2.bf16.msra.mxu0 0
      %1419 = vmatprep.mubr.bf16.mxu0 0
      %1420 = vmatmul.mubr.bf16.gmra.mxu0 %v1379
      %v1421 = vpop.f32.mrf.mxu0
      %v1422 = vadd.f32 0.0, %v1421
      %v1423 = vpop.f32.mrf.mxu0
      %v1424 = vadd.f32 0.0, %v1423
      %v1425 = vpop.f32.mrf.mxu0
      %v1426 = vpop.f32.mrf.mxu0
      %1427 = vdwg.mxu0
      %v1428 = vadd.f32 %v1374, %v1422
      %v1429 = vadd.f32 %v1375, %v1424
      %s1430 = scalar_lea.vmem %s3, 16
      %v1431 = vld [vmem:[%s1430] sm:$0xf]
      %v1433 = vsel %vm980, %v1431, 0
      %v1436 = vsel %vm1218, %v1180, 0
      %v1439 = vsel %vm1218, %v1181, 0
      %1441 = vmatprep.subr.bf16.mxu0 0
      %1442 = vmatpush1.bf16.msra.mxu0 0
      %1443 = vmatprep.subr.bf16.mxu0 0
      %1444 = vmatpush1.bf16.msra.mxu0 0
      %1445 = vmatprep.subr.bf16.mxu0 0
      %1446 = vmatpush1.bf16.msra.mxu0 0
      %1447 = vmatprep.subr.bf16.mxu0 0
      %1448 = vmatpush1.bf16.msra.mxu0 0
      %1449 = vmatprep.subr.bf16.mxu0 0
      %1450 = vmatpush1.bf16.msra.mxu0 0
      %1451 = vmatprep.subr.bf16.mxu0 0
      %1452 = vmatpush1.bf16.msra.mxu0 0
      %1453 = vmatprep.subr.bf16.mxu0 0
      %1454 = vmatpush1.bf16.msra.mxu0 0
      %1455 = vmatprep.subr.bf16.mxu0 %v1439
      %1456 = vmatpush1.bf16.msra.mxu0 %v1436
      %1457 = vmatprep.subr.bf16.mxu0 0
      %1458 = vmatpush2.bf16.msra.mxu0 0
      %1459 = vmatprep.subr.bf16.mxu0 0
      %1460 = vmatpush2.bf16.msra.mxu0 0
      %1461 = vmatprep.subr.bf16.mxu0 0
      %1462 = vmatpush2.bf16.msra.mxu0 0
      %1463 = vmatprep.subr.bf16.mxu0 0
      %1464 = vmatpush2.bf16.msra.mxu0 0
      %1465 = vmatprep.subr.bf16.mxu0 0
      %1466 = vmatpush2.bf16.msra.mxu0 0
      %1467 = vmatprep.subr.bf16.mxu0 0
      %1468 = vmatpush2.bf16.msra.mxu0 0
      %1469 = vmatprep.subr.bf16.mxu0 0
      %1470 = vmatpush2.bf16.msra.mxu0 0
      %1471 = vmatprep.subr.bf16.mxu0 0
      %1472 = vmatpush2.bf16.msra.mxu0 0
      %1473 = vmatprep.mubr.bf16.mxu0 0
      %1474 = vmatmul.mubr.bf16.gmra.mxu0 %v1433
      %v1475 = vpop.f32.mrf.mxu0
      %v1476 = vadd.f32 0.0, %v1475
      %v1477 = vpop.f32.mrf.mxu0
      %v1478 = vadd.f32 0.0, %v1477
      %v1479 = vpop.f32.mrf.mxu0
      %v1480 = vpop.f32.mrf.mxu0
      %1481 = vdwg.mxu0
      %v1482 = vadd.f32 %v1428, %v1476
      %v1483 = vadd.f32 %v1429, %v1478
      %s1484 = scalar_lea.vmem %s3, 20
      %v1485 = vld [vmem:[%s1484] sm:$0xf]
      %v1487 = vsel %vm980, %v1485, 0
      %v1490 = vsel %vm1218, %v1192, 0
      %v1493 = vsel %vm1218, %v1193, 0
      %1495 = vmatprep.subr.bf16.mxu0 0
      %1496 = vmatpush1.bf16.msra.mxu0 0
      %1497 = vmatprep.subr.bf16.mxu0 0
      %1498 = vmatpush1.bf16.msra.mxu0 0
      %1499 = vmatprep.subr.bf16.mxu0 0
      %1500 = vmatpush1.bf16.msra.mxu0 0
      %1501 = vmatprep.subr.bf16.mxu0 0
      %1502 = vmatpush1.bf16.msra.mxu0 0
      %1503 = vmatprep.subr.bf16.mxu0 0
      %1504 = vmatpush1.bf16.msra.mxu0 0
      %1505 = vmatprep.subr.bf16.mxu0 0
      %1506 = vmatpush1.bf16.msra.mxu0 0
      %1507 = vmatprep.subr.bf16.mxu0 0
      %1508 = vmatpush1.bf16.msra.mxu0 0
      %1509 = vmatprep.subr.bf16.mxu0 %v1493
      %1510 = vmatpush1.bf16.msra.mxu0 %v1490
      %1511 = vmatprep.subr.bf16.mxu0 0
      %1512 = vmatpush2.bf16.msra.mxu0 0
      %1513 = vmatprep.subr.bf16.mxu0 0
      %1514 = vmatpush2.bf16.msra.mxu0 0
      %1515 = vmatprep.subr.bf16.mxu0 0
      %1516 = vmatpush2.bf16.msra.mxu0 0
      %1517 = vmatprep.subr.bf16.mxu0 0
      %1518 = vmatpush2.bf16.msra.mxu0 0
      %1519 = vmatprep.subr.bf16.mxu0 0
      %1520 = vmatpush2.bf16.msra.mxu0 0
      %1521 = vmatprep.subr.bf16.mxu0 0
      %1522 = vmatpush2.bf16.msra.mxu0 0
      %1523 = vmatprep.subr.bf16.mxu0 0
      %1524 = vmatpush2.bf16.msra.mxu0 0
      %1525 = vmatprep.subr.bf16.mxu0 0
      %1526 = vmatpush2.bf16.msra.mxu0 0
      %1527 = vmatprep.mubr.bf16.mxu0 0
      %1528 = vmatmul.mubr.bf16.gmra.mxu0 %v1487
      %v1529 = vpop.f32.mrf.mxu0
      %v1530 = vadd.f32 0.0, %v1529
      %v1531 = vpop.f32.mrf.mxu0
      %v1532 = vadd.f32 0.0, %v1531
      %v1533 = vpop.f32.mrf.mxu0
      %v1534 = vpop.f32.mrf.mxu0
      %1535 = vdwg.mxu0
      %v1536 = vadd.f32 %v1482, %v1530
      %v1537 = vadd.f32 %v1483, %v1532
      %s1538 = scalar_lea.vmem %s3, 24
      %v1539 = vld [vmem:[%s1538] sm:$0xf]
      %1540 = vrot.lane.b32.xlu0 %v1178, 112
      %v1541 = vpop.permute.xlu0 %1540
      %1542 = vrot.lane.b32.xlu0 %v1179, 112
      %v1543 = vpop.permute.xlu0 %1542
      %v1544 = vsel %vm788, %v1541, %v1543
      %v1546 = vsel %vm790, %v1543, 0
      %v1548 = vsel %vm980, %v1539, 0
      %v1551 = vsel %vm1218, %v1544, 0
      %v1553 = vsel %vm1218, %v1546, 0
      %1555 = vmatprep.subr.bf16.mxu0 0
      %1556 = vmatpush1.bf16.msra.mxu0 0
      %1557 = vmatprep.subr.bf16.mxu0 0
      %1558 = vmatpush1.bf16.msra.mxu0 0
      %1559 = vmatprep.subr.bf16.mxu0 0
      %1560 = vmatpush1.bf16.msra.mxu0 0
      %1561 = vmatprep.subr.bf16.mxu0 0
      %1562 = vmatpush1.bf16.msra.mxu0 0
      %1563 = vmatprep.subr.bf16.mxu0 0
      %1564 = vmatpush1.bf16.msra.mxu0 0
      %1565 = vmatprep.subr.bf16.mxu0 0
      %1566 = vmatpush1.bf16.msra.mxu0 0
      %1567 = vmatprep.subr.bf16.mxu0 0
      %1568 = vmatpush1.bf16.msra.mxu0 0
      %1569 = vmatprep.subr.bf16.mxu0 %v1553
      %1570 = vmatpush1.bf16.msra.mxu0 %v1551
      %1571 = vmatprep.subr.bf16.mxu0 0
      %1572 = vmatpush2.bf16.msra.mxu0 0
      %1573 = vmatprep.subr.bf16.mxu0 0
      %1574 = vmatpush2.bf16.msra.mxu0 0
      %1575 = vmatprep.subr.bf16.mxu0 0
      %1576 = vmatpush2.bf16.msra.mxu0 0
      %1577 = vmatprep.subr.bf16.mxu0 0
      %1578 = vmatpush2.bf16.msra.mxu0 0
      %1579 = vmatprep.subr.bf16.mxu0 0
      %1580 = vmatpush2.bf16.msra.mxu0 0
      %1581 = vmatprep.subr.bf16.mxu0 0
      %1582 = vmatpush2.bf16.msra.mxu0 0
      %1583 = vmatprep.subr.bf16.mxu0 0
      %1584 = vmatpush2.bf16.msra.mxu0 0
      %1585 = vmatprep.subr.bf16.mxu0 0
      %1586 = vmatpush2.bf16.msra.mxu0 0
      %1587 = vmatprep.mubr.bf16.mxu0 0
      %1588 = vmatmul.mubr.bf16.gmra.mxu0 %v1548
      %v1589 = vpop.f32.mrf.mxu0
      %v1590 = vadd.f32 0.0, %v1589
      %v1591 = vpop.f32.mrf.mxu0
      %v1592 = vadd.f32 0.0, %v1591
      %v1593 = vpop.f32.mrf.mxu0
      %v1594 = vpop.f32.mrf.mxu0
      %1595 = vdwg.mxu0
      %v1596 = vadd.f32 %v1536, %v1590
      %v1597 = vadd.f32 %v1537, %v1592
      %s1598 = scalar_lea.vmem %s3, 28
      %v1599 = vld [vmem:[%s1598] sm:$0xf]
      %1600 = vrot.lane.b32.xlu0 %v1180, 112
      %v1601 = vpop.permute.xlu0 %1600
      %1602 = vrot.lane.b32.xlu0 %v1181, 112
      %v1603 = vpop.permute.xlu0 %1602
      %v1604 = vsel %vm788, %v1601, %v1603
      %v1606 = vsel %vm790, %v1603, 0
      %v1608 = vsel %vm980, %v1599, 0
      %v1611 = vsel %vm1218, %v1604, 0
      %v1613 = vsel %vm1218, %v1606, 0
      %1615 = vmatprep.subr.bf16.mxu0 0
      %1616 = vmatpush1.bf16.msra.mxu0 0
      %1617 = vmatprep.subr.bf16.mxu0 0
      %1618 = vmatpush1.bf16.msra.mxu0 0
      %1619 = vmatprep.subr.bf16.mxu0 0
      %1620 = vmatpush1.bf16.msra.mxu0 0
      %1621 = vmatprep.subr.bf16.mxu0 0
      %1622 = vmatpush1.bf16.msra.mxu0 0
      %1623 = vmatprep.subr.bf16.mxu0 0
      %1624 = vmatpush1.bf16.msra.mxu0 0
      %1625 = vmatprep.subr.bf16.mxu0 0
      %1626 = vmatpush1.bf16.msra.mxu0 0
      %1627 = vmatprep.subr.bf16.mxu0 0
      %1628 = vmatpush1.bf16.msra.mxu0 0
      %1629 = vmatprep.subr.bf16.mxu0 %v1613
      %1630 = vmatpush1.bf16.msra.mxu0 %v1611
      %1631 = vmatprep.subr.bf16.mxu0 0
      %1632 = vmatpush2.bf16.msra.mxu0 0
      %1633 = vmatprep.subr.bf16.mxu0 0
      %1634 = vmatpush2.bf16.msra.mxu0 0
      %1635 = vmatprep.subr.bf16.mxu0 0
      %1636 = vmatpush2.bf16.msra.mxu0 0
      %1637 = vmatprep.subr.bf16.mxu0 0
      %1638 = vmatpush2.bf16.msra.mxu0 0
      %1639 = vmatprep.subr.bf16.mxu0 0
      %1640 = vmatpush2.bf16.msra.mxu0 0
      %1641 = vmatprep.subr.bf16.mxu0 0
      %1642 = vmatpush2.bf16.msra.mxu0 0
      %1643 = vmatprep.subr.bf16.mxu0 0
      %1644 = vmatpush2.bf16.msra.mxu0 0
      %1645 = vmatprep.subr.bf16.mxu0 0
      %1646 = vmatpush2.bf16.msra.mxu0 0
      %1647 = vmatprep.mubr.bf16.mxu0 0
      %1648 = vmatmul.mubr.bf16.gmra.mxu0 %v1608
      %v1649 = vpop.f32.mrf.mxu0
      %v1650 = vadd.f32 0.0, %v1649
      %v1651 = vpop.f32.mrf.mxu0
      %v1652 = vadd.f32 0.0, %v1651
      %v1653 = vpop.f32.mrf.mxu0
      %v1654 = vpop.f32.mrf.mxu0
      %1655 = vdwg.mxu0
      %v1656 = vadd.f32 %v1596, %v1650
      %v1657 = vadd.f32 %v1597, %v1652
      %s1658 = scalar_lea.vmem %s3, 32
      %v1659 = vld [vmem:[%s1658] sm:$0xf]
      %1660 = vrot.lane.b32.xlu0 %v1192, 112
      %v1661 = vpop.permute.xlu0 %1660
      %1662 = vrot.lane.b32.xlu0 %v1193, 112
      %v1663 = vpop.permute.xlu0 %1662
      %v1664 = vsel %vm788, %v1661, %v1663
      %v1666 = vsel %vm790, %v1663, 0
      %v1668 = vsel %vm980, %v1659, 0
      %v1671 = vsel %vm1218, %v1664, 0
      %v1673 = vsel %vm1218, %v1666, 0
      %1675 = vmatprep.subr.bf16.mxu0 0
      %1676 = vmatpush1.bf16.msra.mxu0 0
      %1677 = vmatprep.subr.bf16.mxu0 0
      %1678 = vmatpush1.bf16.msra.mxu0 0
      %1679 = vmatprep.subr.bf16.mxu0 0
      %1680 = vmatpush1.bf16.msra.mxu0 0
      %1681 = vmatprep.subr.bf16.mxu0 0
      %1682 = vmatpush1.bf16.msra.mxu0 0
      %1683 = vmatprep.subr.bf16.mxu0 0
      %1684 = vmatpush1.bf16.msra.mxu0 0
      %1685 = vmatprep.subr.bf16.mxu0 0
      %1686 = vmatpush1.bf16.msra.mxu0 0
      %1687 = vmatprep.subr.bf16.mxu0 0
      %1688 = vmatpush1.bf16.msra.mxu0 0
      %1689 = vmatprep.subr.bf16.mxu0 %v1673
      %1690 = vmatpush1.bf16.msra.mxu0 %v1671
      %1691 = vmatprep.subr.bf16.mxu0 0
      %1692 = vmatpush2.bf16.msra.mxu0 0
      %1693 = vmatprep.subr.bf16.mxu0 0
      %1694 = vmatpush2.bf16.msra.mxu0 0
      %1695 = vmatprep.subr.bf16.mxu0 0
      %1696 = vmatpush2.bf16.msra.mxu0 0
      %1697 = vmatprep.subr.bf16.mxu0 0
      %1698 = vmatpush2.bf16.msra.mxu0 0
      %1699 = vmatprep.subr.bf16.mxu0 0
      %1700 = vmatpush2.bf16.msra.mxu0 0
      %1701 = vmatprep.subr.bf16.mxu0 0
      %1702 = vmatpush2.bf16.msra.mxu0 0
      %1703 = vmatprep.subr.bf16.mxu0 0
      %1704 = vmatpush2.bf16.msra.mxu0 0
      %1705 = vmatprep.subr.bf16.mxu0 0
      %1706 = vmatpush2.bf16.msra.mxu0 0
      %1707 = vmatprep.mubr.bf16.mxu0 0
      %1708 = vmatmul.mubr.bf16.gmra.mxu0 %v1668
      %v1709 = vpop.f32.mrf.mxu0
      %v1710 = vadd.f32 0.0, %v1709
      %v1711 = vpop.f32.mrf.mxu0
      %v1712 = vadd.f32 0.0, %v1711
      %v1713 = vpop.f32.mrf.mxu0
      %v1714 = vpop.f32.mrf.mxu0
      %1715 = vdwg.mxu0
      %v1716 = vadd.f32 %v1656, %v1710
      %v1717 = vadd.f32 %v1657, %v1712
      %1719 = vset.pattern.permute.xlu0 0
      %1720 = vperm.xlu0 %1719, %v1165
      %v1721 = vpop.permute.xlu0 %1720
      %v1723 = vadd.f32 %v1716, %v1721
      %v1724 = vadd.f32 %v1717, %v1721
      %v1725 = vadd.f32 %v1723, %v1724
      %1726 = vadd.xlane.f32.xlu0 %v1725
      %v1727 = vpop.xlane.xlu0 %1726
      %v1728 = vmul.f32 %v1723, %v1723
      %v1729 = vmul.f32 %v1724, %v1724
      %v1730 = vadd.f32 %v1728, %v1729
      %1731 = vadd.xlane.f32.xlu0 %v1730
      %v1732 = vpop.xlane.xlu0 %1731
      %v1733 = vsel %vm372, %v1727, %v1732
      %1734 = vmatprep.subr.mxu0 0.0
      %1735 = vmatpush1.msra.mxu0 0.0
      %1736 = vmatprep.subr.mxu0 0.0
      %1737 = vmatpush1.msra.mxu0 0.0
      %1738 = vmatprep.subr.mxu0 0.0
      %1739 = vmatpush1.msra.mxu0 0.0
      %1740 = vmatprep.subr.mxu0 0.0
      %1741 = vmatpush1.msra.mxu0 0.0
      %1742 = vmatprep.subr.mxu0 0.0
      %1743 = vmatpush1.msra.mxu0 0.0
      %1744 = vmatprep.subr.mxu0 0.0
      %1745 = vmatpush1.msra.mxu0 0.0
      %1746 = vmatprep.subr.mxu0 0.0
      %1747 = vmatpush1.msra.mxu0 0.0
      %1748 = vmatprep.subr.mxu0 0.0
      %1749 = vmatpush1.msra.mxu0 0.0
      %1750 = vmatprep.subr.mxu0 0.0
      %1751 = vmatpush1.msra.mxu0 0.0
      %1752 = vmatprep.subr.mxu0 0.0
      %1753 = vmatpush1.msra.mxu0 0.0
      %1754 = vmatprep.subr.mxu0 0.0
      %1755 = vmatpush1.msra.mxu0 0.0
      %1756 = vmatprep.subr.mxu0 0.0
      %1757 = vmatpush1.msra.mxu0 0.0
      %1758 = vmatprep.subr.mxu0 0.0
      %1759 = vmatpush1.msra.mxu0 0.0
      %1760 = vmatprep.subr.mxu0 0.0
      %1761 = vmatpush1.msra.mxu0 0.0
      %1762 = vmatprep.subr.mxu0 0.0
      %1763 = vmatpush1.msra.mxu0 0.0
      %1764 = vmatprep.subr.mxu0 0.0
      %1765 = vmatpush1.msra.mxu0 %v1733
      %1766 = vmatprep.subr.mxu0 0.0
      %1767 = vmatpush2.msra.mxu0 0.0
      %1768 = vmatprep.subr.mxu0 0.0
      %1769 = vmatpush2.msra.mxu0 0.0
      %1770 = vmatprep.subr.mxu0 0.0
      %1771 = vmatpush2.msra.mxu0 0.0
      %1772 = vmatprep.subr.mxu0 0.0
      %1773 = vmatpush2.msra.mxu0 0.0
      %1774 = vmatprep.subr.mxu0 0.0
      %1775 = vmatpush2.msra.mxu0 0.0
      %1776 = vmatprep.subr.mxu0 0.0
      %1777 = vmatpush2.msra.mxu0 0.0
      %1778 = vmatprep.subr.mxu0 0.0
      %1779 = vmatpush2.msra.mxu0 0.0
      %1780 = vmatprep.subr.mxu0 0.0
      %1781 = vmatpush2.msra.mxu0 0.0
      %1782 = vmatprep.subr.mxu0 0.0
      %1783 = vmatpush2.msra.mxu0 0.0
      %1784 = vmatprep.subr.mxu0 0.0
      %1785 = vmatpush2.msra.mxu0 0.0
      %1786 = vmatprep.subr.mxu0 0.0
      %1787 = vmatpush2.msra.mxu0 0.0
      %1788 = vmatprep.subr.mxu0 0.0
      %1789 = vmatpush2.msra.mxu0 0.0
      %1790 = vmatprep.subr.mxu0 0.0
      %1791 = vmatpush2.msra.mxu0 0.0
      %1792 = vmatprep.subr.mxu0 0.0
      %1793 = vmatpush2.msra.mxu0 0.0
      %1794 = vmatprep.subr.mxu0 0.0
      %1795 = vmatpush2.msra.mxu0 0.0
      %1796 = vmatprep.subr.mxu0 0.0
      %1797 = vmatpush2.msra.mxu0 0.0
      %1798 = vmatprep.mubr.f32.mxu0 0.0
      %1799 = vmatmul.mubr.f32.gmra.mxu0 %v982
      %v1800 = vpop.f32.mrf.mxu0
      %v1801 = vadd.f32 0.0, %v1800
      %v1802 = vpop.f32.mrf.mxu0
      %1803 = vdwg.mxu0
      %v1804 = vmul.f32 %v1801, 0.00390625
      %v1805 = vmul.f32 %v1804, %v1804
      %1807 = vrot.lane.b32.xlu0 %v1805, 1
      %v1808 = vpop.permute.xlu0 %1807
      %v1810 = vsub.f32 %v1804, %v1808
      %v1811 = vmax.f32 %v1810, 0.0
      %v1812 = vadd.f32 %v1811, 1e-05
      %v1813 = vrsqrt.pop %v1812
      %v1814 = vsel %vm372, %v1804, %v1813
      %1815 = vmatprep.subr.mxu0 0.0
      %1816 = vmatpush1.msra.mxu0 0.0
      %1817 = vmatprep.subr.mxu0 0.0
      %1818 = vmatpush1.msra.mxu0 0.0
      %1819 = vmatprep.subr.mxu0 0.0
      %1820 = vmatpush1.msra.mxu0 0.0
      %1821 = vmatprep.subr.mxu0 0.0
      %1822 = vmatpush1.msra.mxu0 0.0
      %1823 = vmatprep.subr.mxu0 0.0
      %1824 = vmatpush1.msra.mxu0 0.0
      %1825 = vmatprep.subr.mxu0 0.0
      %1826 = vmatpush1.msra.mxu0 0.0
      %1827 = vmatprep.subr.mxu0 0.0
      %1828 = vmatpush1.msra.mxu0 0.0
      %1829 = vmatprep.subr.mxu0 0.0
      %1830 = vmatpush1.msra.mxu0 0.0
      %1831 = vmatprep.subr.mxu0 0.0
      %1832 = vmatpush1.msra.mxu0 0.0
      %1833 = vmatprep.subr.mxu0 0.0
      %1834 = vmatpush1.msra.mxu0 0.0
      %1835 = vmatprep.subr.mxu0 0.0
      %1836 = vmatpush1.msra.mxu0 0.0
      %1837 = vmatprep.subr.mxu0 0.0
      %1838 = vmatpush1.msra.mxu0 0.0
      %1839 = vmatprep.subr.mxu0 0.0
      %1840 = vmatpush1.msra.mxu0 0.0
      %1841 = vmatprep.subr.mxu0 0.0
      %1842 = vmatpush1.msra.mxu0 0.0
      %1843 = vmatprep.subr.mxu0 0.0
      %1844 = vmatpush1.msra.mxu0 0.0
      %1845 = vmatprep.subr.mxu0 0.0
      %1846 = vmatpush1.msra.mxu0 %v1814
      %1847 = vmatprep.subr.mxu0 0.0
      %1848 = vmatpush2.msra.mxu0 0.0
      %1849 = vmatprep.subr.mxu0 0.0
      %1850 = vmatpush2.msra.mxu0 0.0
      %1851 = vmatprep.subr.mxu0 0.0
      %1852 = vmatpush2.msra.mxu0 0.0
      %1853 = vmatprep.subr.mxu0 0.0
      %1854 = vmatpush2.msra.mxu0 0.0
      %1855 = vmatprep.subr.mxu0 0.0
      %1856 = vmatpush2.msra.mxu0 0.0
      %1857 = vmatprep.subr.mxu0 0.0
      %1858 = vmatpush2.msra.mxu0 0.0
      %1859 = vmatprep.subr.mxu0 0.0
      %1860 = vmatpush2.msra.mxu0 0.0
      %1861 = vmatprep.subr.mxu0 0.0
      %1862 = vmatpush2.msra.mxu0 0.0
      %1863 = vmatprep.subr.mxu0 0.0
      %1864 = vmatpush2.msra.mxu0 0.0
      %1865 = vmatprep.subr.mxu0 0.0
      %1866 = vmatpush2.msra.mxu0 0.0
      %1867 = vmatprep.subr.mxu0 0.0
      %1868 = vmatpush2.msra.mxu0 0.0
      %1869 = vmatprep.subr.mxu0 0.0
      %1870 = vmatpush2.msra.mxu0 0.0
      %1871 = vmatprep.subr.mxu0 0.0
      %1872 = vmatpush2.msra.mxu0 0.0
      %1873 = vmatprep.subr.mxu0 0.0
      %1874 = vmatpush2.msra.mxu0 0.0
      %1875 = vmatprep.subr.mxu0 0.0
      %1876 = vmatpush2.msra.mxu0 0.0
      %1877 = vmatprep.subr.mxu0 0.0
      %1878 = vmatpush2.msra.mxu0 0.0
      %1879 = vmatprep.mubr.f32.mxu0 0.0
      %1880 = vmatmul.mubr.f32.gmra.mxu0 %v1066
      %v1881 = vpop.f32.mrf.mxu0
      %v1882 = vadd.f32 0.0, %v1881
      %v1883 = vpop.f32.mrf.mxu0
      %1884 = vdwg.mxu0
      %1886 = vset.pattern.permute.xlu0 0
      %1887 = vperm.xlu0 %1886, %v1882
      %v1888 = vpop.permute.xlu0 %1887
      %v1890 = vsub.f32 %v1723, %v1888
      %v1891 = vsub.f32 %v1724, %v1888
      %v1892 = vmul.f32 %v1882, %v1165
      %1894 = vset.pattern.permute.xlu0 1
      %1895 = vperm.xlu0 %1894, %v1892
      %v1896 = vpop.permute.xlu0 %1895
      %v1898 = vmul.f32 %v1890, %v1896
      %v1899 = vmul.f32 %v1891, %v1896
      %1900 = vset.pattern.permute.xlu0 2
      %1901 = vperm.xlu0 %1900, %v1165
      %v1902 = vpop.permute.xlu0 %1901
      %v1904 = vadd.f32 %v1898, %v1902
      %v1905 = vadd.f32 %v1899, %v1902
      %v1906 = vmax.f32 %v1904, 0.0
      %v1907 = vmax.f32 %v1905, 0.0
      %v1908 = vld [vmem:[%s6] sm:$0xff]
      %1911 = vrot.lane.b32.xlu0 %v1906, 1
      %v1912 = vpop.permute.xlu0 %1911
      %1913 = vrot.lane.b32.xlu0 %v1907, 1
      %v1914 = vpop.permute.xlu0 %1913
      %v1915 = vsel %vm372, %v1912, %v1914
      %v1918 = vsel %vm372, 0.0, %v1912
      %v1919 = vmul.f32 %v1918, %v391
      %v1920 = vmul.f32 %v1915, %v395
      %v1921 = vpack.c.bf16 %v1919, %v1919
      %v1922 = vpack.c.bf16 %v1920, %v1920
      %v1923 = vpack.c.bf16 %v1906, %v1906
      %v1924 = vpack.c.bf16 %v1907, %v1907
      %1925 = vrot.lane.b32.xlu0 %v1906, 127
      %v1926 = vpop.permute.xlu0 %1925
      %1927 = vrot.lane.b32.xlu0 %v1907, 127
      %v1928 = vpop.permute.xlu0 %1927
      %v1929 = vsel %vm407, %v1926, %v1928
      %v1932 = vsel %vm407, %v1928, 0.0
      %v1933 = vmul.f32 %v1929, %v425
      %v1934 = vmul.f32 %v1932, %v429
      %v1935 = vpack.c.bf16 %v1933, %v1933
      %v1936 = vpack.c.bf16 %v1934, %v1934
      %v1937 = vld [vmem:[%s5] sm:$0xf]
      %1940 = vrot.lane.b32.xlu0 %v1921, 16
      %v1941 = vpop.permute.xlu0 %1940
      %1942 = vrot.lane.b32.xlu0 %v1922, 16
      %v1943 = vpop.permute.xlu0 %1942
      %v1944 = vsel %vm441, %v1941, %v1943
      %v1946 = vsel %vm443, 0, %v1941
      %s1947 = scalar_lea.vmem %s5, 4
      %v1948 = vld [vmem:[%s1947] sm:$0xf]
      %1951 = vrot.lane.b32.xlu0 %v1923, 16
      %v1952 = vpop.permute.xlu0 %1951
      %1953 = vrot.lane.b32.xlu0 %v1924, 16
      %v1954 = vpop.permute.xlu0 %1953
      %v1955 = vsel %vm441, %v1952, %v1954
      %v1957 = vsel %vm443, 0, %v1952
      %v1959 = vsel %vm980, %v1948, 0
      %v1961 = vsel %vm1218, %v1957, 0
      %v1964 = vsel %vm1218, %v1955, 0
      %1966 = vmatprep.subr.bf16.mxu0 0
      %1967 = vmatpush1.bf16.msra.mxu0 0
      %1968 = vmatprep.subr.bf16.mxu0 0
      %1969 = vmatpush1.bf16.msra.mxu0 0
      %1970 = vmatprep.subr.bf16.mxu0 0
      %1971 = vmatpush1.bf16.msra.mxu0 0
      %1972 = vmatprep.subr.bf16.mxu0 0
      %1973 = vmatpush1.bf16.msra.mxu0 0
      %1974 = vmatprep.subr.bf16.mxu0 0
      %1975 = vmatpush1.bf16.msra.mxu0 0
      %1976 = vmatprep.subr.bf16.mxu0 0
      %1977 = vmatpush1.bf16.msra.mxu0 0
      %1978 = vmatprep.subr.bf16.mxu0 0
      %1979 = vmatpush1.bf16.msra.mxu0 0
      %1980 = vmatprep.subr.bf16.mxu0 %v1964
      %1981 = vmatpush1.bf16.msra.mxu0 %v1961
      %1982 = vmatprep.subr.bf16.mxu0 0
      %1983 = vmatpush2.bf16.msra.mxu0 0
      %1984 = vmatprep.subr.bf16.mxu0 0
      %1985 = vmatpush2.bf16.msra.mxu0 0
      %1986 = vmatprep.subr.bf16.mxu0 0
      %1987 = vmatpush2.bf16.msra.mxu0 0
      %1988 = vmatprep.subr.bf16.mxu0 0
      %1989 = vmatpush2.bf16.msra.mxu0 0
      %1990 = vmatprep.subr.bf16.mxu0 0
      %1991 = vmatpush2.bf16.msra.mxu0 0
      %1992 = vmatprep.subr.bf16.mxu0 0
      %1993 = vmatpush2.bf16.msra.mxu0 0
      %1994 = vmatprep.subr.bf16.mxu0 0
      %1995 = vmatpush2.bf16.msra.mxu0 0
      %1996 = vmatprep.subr.bf16.mxu0 0
      %1997 = vmatpush2.bf16.msra.mxu0 0
      %1998 = vmatprep.mubr.bf16.mxu0 0
      %1999 = vmatmul.mubr.bf16.gmra.mxu0 %v1959
      %v2000 = vpop.f32.mrf.mxu0
      %v2001 = vadd.f32 0.0, %v2000
      %v2002 = vpop.f32.mrf.mxu0
      %v2003 = vadd.f32 0.0, %v2002
      %v2004 = vpop.f32.mrf.mxu0
      %v2005 = vpop.f32.mrf.mxu0
      %2006 = vdwg.mxu0
      %v2008 = vsel %vm980, %v1937, 0
      %v2010 = vsel %vm1218, %v1946, 0
      %v2013 = vsel %vm1218, %v1944, 0
      %2015 = vmatprep.subr.bf16.mxu0 0
      %2016 = vmatpush1.bf16.msra.mxu0 0
      %2017 = vmatprep.subr.bf16.mxu0 0
      %2018 = vmatpush1.bf16.msra.mxu0 0
      %2019 = vmatprep.subr.bf16.mxu0 0
      %2020 = vmatpush1.bf16.msra.mxu0 0
      %2021 = vmatprep.subr.bf16.mxu0 0
      %2022 = vmatpush1.bf16.msra.mxu0 0
      %2023 = vmatprep.subr.bf16.mxu0 0
      %2024 = vmatpush1.bf16.msra.mxu0 0
      %2025 = vmatprep.subr.bf16.mxu0 0
      %2026 = vmatpush1.bf16.msra.mxu0 0
      %2027 = vmatprep.subr.bf16.mxu0 0
      %2028 = vmatpush1.bf16.msra.mxu0 0
      %2029 = vmatprep.subr.bf16.mxu0 %v2013
      %2030 = vmatpush1.bf16.msra.mxu0 %v2010
      %2031 = vmatprep.subr.bf16.mxu0 0
      %2032 = vmatpush2.bf16.msra.mxu0 0
      %2033 = vmatprep.subr.bf16.mxu0 0
      %2034 = vmatpush2.bf16.msra.mxu0 0
      %2035 = vmatprep.subr.bf16.mxu0 0
      %2036 = vmatpush2.bf16.msra.mxu0 0
      %2037 = vmatprep.subr.bf16.mxu0 0
      %2038 = vmatpush2.bf16.msra.mxu0 0
      %2039 = vmatprep.subr.bf16.mxu0 0
      %2040 = vmatpush2.bf16.msra.mxu0 0
      %2041 = vmatprep.subr.bf16.mxu0 0
      %2042 = vmatpush2.bf16.msra.mxu0 0
      %2043 = vmatprep.subr.bf16.mxu0 0
      %2044 = vmatpush2.bf16.msra.mxu0 0
      %2045 = vmatprep.subr.bf16.mxu0 0
      %2046 = vmatpush2.bf16.msra.mxu0 0
      %2047 = vmatprep.mubr.bf16.mxu0 0
      %2048 = vmatmul.mubr.bf16.gmra.mxu0 %v2008
      %v2049 = vpop.f32.mrf.mxu0
      %v2050 = vadd.f32 %v2001, %v2049
      %v2051 = vpop.f32.mrf.mxu0
      %v2052 = vadd.f32 %v2003, %v2051
      %v2053 = vpop.f32.mrf.mxu0
      %v2054 = vpop.f32.mrf.mxu0
      %2055 = vdwg.mxu0
      %s2056 = scalar_lea.vmem %s5, 8
      %v2057 = vld [vmem:[%s2056] sm:$0xf]
      %2060 = vrot.lane.b32.xlu0 %v1935, 16
      %v2061 = vpop.permute.xlu0 %2060
      %2062 = vrot.lane.b32.xlu0 %v1936, 16
      %v2063 = vpop.permute.xlu0 %2062
      %v2064 = vsel %vm441, %v2061, %v2063
      %v2066 = vsel %vm443, 0, %v2061
      %v2068 = vsel %vm980, %v2057, 0
      %v2070 = vsel %vm1218, %v2066, 0
      %v2073 = vsel %vm1218, %v2064, 0
      %2075 = vmatprep.subr.bf16.mxu0 0
      %2076 = vmatpush1.bf16.msra.mxu0 0
      %2077 = vmatprep.subr.bf16.mxu0 0
      %2078 = vmatpush1.bf16.msra.mxu0 0
      %2079 = vmatprep.subr.bf16.mxu0 0
      %2080 = vmatpush1.bf16.msra.mxu0 0
      %2081 = vmatprep.subr.bf16.mxu0 0
      %2082 = vmatpush1.bf16.msra.mxu0 0
      %2083 = vmatprep.subr.bf16.mxu0 0
      %2084 = vmatpush1.bf16.msra.mxu0 0
      %2085 = vmatprep.subr.bf16.mxu0 0
      %2086 = vmatpush1.bf16.msra.mxu0 0
      %2087 = vmatprep.subr.bf16.mxu0 0
      %2088 = vmatpush1.bf16.msra.mxu0 0
      %2089 = vmatprep.subr.bf16.mxu0 %v2073
      %2090 = vmatpush1.bf16.msra.mxu0 %v2070
      %2091 = vmatprep.subr.bf16.mxu0 0
      %2092 = vmatpush2.bf16.msra.mxu0 0
      %2093 = vmatprep.subr.bf16.mxu0 0
      %2094 = vmatpush2.bf16.msra.mxu0 0
      %2095 = vmatprep.subr.bf16.mxu0 0
      %2096 = vmatpush2.bf16.msra.mxu0 0
      %2097 = vmatprep.subr.bf16.mxu0 0
      %2098 = vmatpush2.bf16.msra.mxu0 0
      %2099 = vmatprep.subr.bf16.mxu0 0
      %2100 = vmatpush2.bf16.msra.mxu0 0
      %2101 = vmatprep.subr.bf16.mxu0 0
      %2102 = vmatpush2.bf16.msra.mxu0 0
      %2103 = vmatprep.subr.bf16.mxu0 0
      %2104 = vmatpush2.bf16.msra.mxu0 0
      %2105 = vmatprep.subr.bf16.mxu0 0
      %2106 = vmatpush2.bf16.msra.mxu0 0
      %2107 = vmatprep.mubr.bf16.mxu0 0
      %2108 = vmatmul.mubr.bf16.gmra.mxu0 %v2068
      %v2109 = vpop.f32.mrf.mxu0
      %v2110 = vadd.f32 0.0, %v2109
      %v2111 = vpop.f32.mrf.mxu0
      %v2112 = vadd.f32 0.0, %v2111
      %v2113 = vpop.f32.mrf.mxu0
      %v2114 = vpop.f32.mrf.mxu0
      %2115 = vdwg.mxu0
      %v2116 = vadd.f32 %v2050, %v2110
      %v2117 = vadd.f32 %v2052, %v2112
      %s2118 = scalar_lea.vmem %s5, 12
      %v2119 = vld [vmem:[%s2118] sm:$0xf]
      %v2121 = vsel %vm980, %v2119, 0
      %v2124 = vsel %vm1218, %v1921, 0
      %v2127 = vsel %vm1218, %v1922, 0
      %2129 = vmatprep.subr.bf16.mxu0 0
      %2130 = vmatpush1.bf16.msra.mxu0 0
      %2131 = vmatprep.subr.bf16.mxu0 0
      %2132 = vmatpush1.bf16.msra.mxu0 0
      %2133 = vmatprep.subr.bf16.mxu0 0
      %2134 = vmatpush1.bf16.msra.mxu0 0
      %2135 = vmatprep.subr.bf16.mxu0 0
      %2136 = vmatpush1.bf16.msra.mxu0 0
      %2137 = vmatprep.subr.bf16.mxu0 0
      %2138 = vmatpush1.bf16.msra.mxu0 0
      %2139 = vmatprep.subr.bf16.mxu0 0
      %2140 = vmatpush1.bf16.msra.mxu0 0
      %2141 = vmatprep.subr.bf16.mxu0 0
      %2142 = vmatpush1.bf16.msra.mxu0 0
      %2143 = vmatprep.subr.bf16.mxu0 %v2127
      %2144 = vmatpush1.bf16.msra.mxu0 %v2124
      %2145 = vmatprep.subr.bf16.mxu0 0
      %2146 = vmatpush2.bf16.msra.mxu0 0
      %2147 = vmatprep.subr.bf16.mxu0 0
      %2148 = vmatpush2.bf16.msra.mxu0 0
      %2149 = vmatprep.subr.bf16.mxu0 0
      %2150 = vmatpush2.bf16.msra.mxu0 0
      %2151 = vmatprep.subr.bf16.mxu0 0
      %2152 = vmatpush2.bf16.msra.mxu0 0
      %2153 = vmatprep.subr.bf16.mxu0 0
      %2154 = vmatpush2.bf16.msra.mxu0 0
      %2155 = vmatprep.subr.bf16.mxu0 0
      %2156 = vmatpush2.bf16.msra.mxu0 0
      %2157 = vmatprep.subr.bf16.mxu0 0
      %2158 = vmatpush2.bf16.msra.mxu0 0
      %2159 = vmatprep.subr.bf16.mxu0 0
      %2160 = vmatpush2.bf16.msra.mxu0 0
      %2161 = vmatprep.mubr.bf16.mxu0 0
      %2162 = vmatmul.mubr.bf16.gmra.mxu0 %v2121
      %v2163 = vpop.f32.mrf.mxu0
      %v2164 = vadd.f32 0.0, %v2163
      %v2165 = vpop.f32.mrf.mxu0
      %v2166 = vadd.f32 0.0, %v2165
      %v2167 = vpop.f32.mrf.mxu0
      %v2168 = vpop.f32.mrf.mxu0
      %2169 = vdwg.mxu0
      %v2170 = vadd.f32 %v2116, %v2164
      %v2171 = vadd.f32 %v2117, %v2166
      %s2172 = scalar_lea.vmem %s5, 16
      %v2173 = vld [vmem:[%s2172] sm:$0xf]
      %v2175 = vsel %vm980, %v2173, 0
      %v2178 = vsel %vm1218, %v1923, 0
      %v2181 = vsel %vm1218, %v1924, 0
      %2183 = vmatprep.subr.bf16.mxu0 0
      %2184 = vmatpush1.bf16.msra.mxu0 0
      %2185 = vmatprep.subr.bf16.mxu0 0
      %2186 = vmatpush1.bf16.msra.mxu0 0
      %2187 = vmatprep.subr.bf16.mxu0 0
      %2188 = vmatpush1.bf16.msra.mxu0 0
      %2189 = vmatprep.subr.bf16.mxu0 0
      %2190 = vmatpush1.bf16.msra.mxu0 0
      %2191 = vmatprep.subr.bf16.mxu0 0
      %2192 = vmatpush1.bf16.msra.mxu0 0
      %2193 = vmatprep.subr.bf16.mxu0 0
      %2194 = vmatpush1.bf16.msra.mxu0 0
      %2195 = vmatprep.subr.bf16.mxu0 0
      %2196 = vmatpush1.bf16.msra.mxu0 0
      %2197 = vmatprep.subr.bf16.mxu0 %v2181
      %2198 = vmatpush1.bf16.msra.mxu0 %v2178
      %2199 = vmatprep.subr.bf16.mxu0 0
      %2200 = vmatpush2.bf16.msra.mxu0 0
      %2201 = vmatprep.subr.bf16.mxu0 0
      %2202 = vmatpush2.bf16.msra.mxu0 0
      %2203 = vmatprep.subr.bf16.mxu0 0
      %2204 = vmatpush2.bf16.msra.mxu0 0
      %2205 = vmatprep.subr.bf16.mxu0 0
      %2206 = vmatpush2.bf16.msra.mxu0 0
      %2207 = vmatprep.subr.bf16.mxu0 0
      %2208 = vmatpush2.bf16.msra.mxu0 0
      %2209 = vmatprep.subr.bf16.mxu0 0
      %2210 = vmatpush2.bf16.msra.mxu0 0
      %2211 = vmatprep.subr.bf16.mxu0 0
      %2212 = vmatpush2.bf16.msra.mxu0 0
      %2213 = vmatprep.subr.bf16.mxu0 0
      %2214 = vmatpush2.bf16.msra.mxu0 0
      %2215 = vmatprep.mubr.bf16.mxu0 0
      %2216 = vmatmul.mubr.bf16.gmra.mxu0 %v2175
      %v2217 = vpop.f32.mrf.mxu0
      %v2218 = vadd.f32 0.0, %v2217
      %v2219 = vpop.f32.mrf.mxu0
      %v2220 = vadd.f32 0.0, %v2219
      %v2221 = vpop.f32.mrf.mxu0
      %v2222 = vpop.f32.mrf.mxu0
      %2223 = vdwg.mxu0
      %v2224 = vadd.f32 %v2170, %v2218
      %v2225 = vadd.f32 %v2171, %v2220
      %s2226 = scalar_lea.vmem %s5, 20
      %v2227 = vld [vmem:[%s2226] sm:$0xf]
      %v2229 = vsel %vm980, %v2227, 0
      %v2232 = vsel %vm1218, %v1935, 0
      %v2235 = vsel %vm1218, %v1936, 0
      %2237 = vmatprep.subr.bf16.mxu0 0
      %2238 = vmatpush1.bf16.msra.mxu0 0
      %2239 = vmatprep.subr.bf16.mxu0 0
      %2240 = vmatpush1.bf16.msra.mxu0 0
      %2241 = vmatprep.subr.bf16.mxu0 0
      %2242 = vmatpush1.bf16.msra.mxu0 0
      %2243 = vmatprep.subr.bf16.mxu0 0
      %2244 = vmatpush1.bf16.msra.mxu0 0
      %2245 = vmatprep.subr.bf16.mxu0 0
      %2246 = vmatpush1.bf16.msra.mxu0 0
      %2247 = vmatprep.subr.bf16.mxu0 0
      %2248 = vmatpush1.bf16.msra.mxu0 0
      %2249 = vmatprep.subr.bf16.mxu0 0
      %2250 = vmatpush1.bf16.msra.mxu0 0
      %2251 = vmatprep.subr.bf16.mxu0 %v2235
      %2252 = vmatpush1.bf16.msra.mxu0 %v2232
      %2253 = vmatprep.subr.bf16.mxu0 0
      %2254 = vmatpush2.bf16.msra.mxu0 0
      %2255 = vmatprep.subr.bf16.mxu0 0
      %2256 = vmatpush2.bf16.msra.mxu0 0
      %2257 = vmatprep.subr.bf16.mxu0 0
      %2258 = vmatpush2.bf16.msra.mxu0 0
      %2259 = vmatprep.subr.bf16.mxu0 0
      %2260 = vmatpush2.bf16.msra.mxu0 0
      %2261 = vmatprep.subr.bf16.mxu0 0
      %2262 = vmatpush2.bf16.msra.mxu0 0
      %2263 = vmatprep.subr.bf16.mxu0 0
      %2264 = vmatpush2.bf16.msra.mxu0 0
      %2265 = vmatprep.subr.bf16.mxu0 0
      %2266 = vmatpush2.bf16.msra.mxu0 0
      %2267 = vmatprep.subr.bf16.mxu0 0
      %2268 = vmatpush2.bf16.msra.mxu0 0
      %2269 = vmatprep.mubr.bf16.mxu0 0
      %2270 = vmatmul.mubr.bf16.gmra.mxu0 %v2229
      %v2271 = vpop.f32.mrf.mxu0
      %v2272 = vadd.f32 0.0, %v2271
      %v2273 = vpop.f32.mrf.mxu0
      %v2274 = vadd.f32 0.0, %v2273
      %v2275 = vpop.f32.mrf.mxu0
      %v2276 = vpop.f32.mrf.mxu0
      %2277 = vdwg.mxu0
      %v2278 = vadd.f32 %v2224, %v2272
      %v2279 = vadd.f32 %v2225, %v2274
      %s2280 = scalar_lea.vmem %s5, 24
      %v2281 = vld [vmem:[%s2280] sm:$0xf]
      %2282 = vrot.lane.b32.xlu0 %v1921, 112
      %v2283 = vpop.permute.xlu0 %2282
      %2284 = vrot.lane.b32.xlu0 %v1922, 112
      %v2285 = vpop.permute.xlu0 %2284
      %v2286 = vsel %vm788, %v2283, %v2285
      %v2288 = vsel %vm790, %v2285, 0
      %v2290 = vsel %vm980, %v2281, 0
      %v2293 = vsel %vm1218, %v2286, 0
      %v2295 = vsel %vm1218, %v2288, 0
      %2297 = vmatprep.subr.bf16.mxu0 0
      %2298 = vmatpush1.bf16.msra.mxu0 0
      %2299 = vmatprep.subr.bf16.mxu0 0
      %2300 = vmatpush1.bf16.msra.mxu0 0
      %2301 = vmatprep.subr.bf16.mxu0 0
      %2302 = vmatpush1.bf16.msra.mxu0 0
      %2303 = vmatprep.subr.bf16.mxu0 0
      %2304 = vmatpush1.bf16.msra.mxu0 0
      %2305 = vmatprep.subr.bf16.mxu0 0
      %2306 = vmatpush1.bf16.msra.mxu0 0
      %2307 = vmatprep.subr.bf16.mxu0 0
      %2308 = vmatpush1.bf16.msra.mxu0 0
      %2309 = vmatprep.subr.bf16.mxu0 0
      %2310 = vmatpush1.bf16.msra.mxu0 0
      %2311 = vmatprep.subr.bf16.mxu0 %v2295
      %2312 = vmatpush1.bf16.msra.mxu0 %v2293
      %2313 = vmatprep.subr.bf16.mxu0 0
      %2314 = vmatpush2.bf16.msra.mxu0 0
      %2315 = vmatprep.subr.bf16.mxu0 0
      %2316 = vmatpush2.bf16.msra.mxu0 0
      %2317 = vmatprep.subr.bf16.mxu0 0
      %2318 = vmatpush2.bf16.msra.mxu0 0
      %2319 = vmatprep.subr.bf16.mxu0 0
      %2320 = vmatpush2.bf16.msra.mxu0 0
      %2321 = vmatprep.subr.bf16.mxu0 0
      %2322 = vmatpush2.bf16.msra.mxu0 0
      %2323 = vmatprep.subr.bf16.mxu0 0
      %2324 = vmatpush2.bf16.msra.mxu0 0
      %2325 = vmatprep.subr.bf16.mxu0 0
      %2326 = vmatpush2.bf16.msra.mxu0 0
      %2327 = vmatprep.subr.bf16.mxu0 0
      %2328 = vmatpush2.bf16.msra.mxu0 0
      %2329 = vmatprep.mubr.bf16.mxu0 0
      %2330 = vmatmul.mubr.bf16.gmra.mxu0 %v2290
      %v2331 = vpop.f32.mrf.mxu0
      %v2332 = vadd.f32 0.0, %v2331
      %v2333 = vpop.f32.mrf.mxu0
      %v2334 = vadd.f32 0.0, %v2333
      %v2335 = vpop.f32.mrf.mxu0
      %v2336 = vpop.f32.mrf.mxu0
      %2337 = vdwg.mxu0
      %v2338 = vadd.f32 %v2278, %v2332
      %v2339 = vadd.f32 %v2279, %v2334
      %s2340 = scalar_lea.vmem %s5, 28
      %v2341 = vld [vmem:[%s2340] sm:$0xf]
      %2342 = vrot.lane.b32.xlu0 %v1923, 112
      %v2343 = vpop.permute.xlu0 %2342
      %2344 = vrot.lane.b32.xlu0 %v1924, 112
      %v2345 = vpop.permute.xlu0 %2344
      %v2346 = vsel %vm788, %v2343, %v2345
      %v2348 = vsel %vm790, %v2345, 0
      %v2350 = vsel %vm980, %v2341, 0
      %v2353 = vsel %vm1218, %v2346, 0
      %v2355 = vsel %vm1218, %v2348, 0
      %2357 = vmatprep.subr.bf16.mxu0 0
      %2358 = vmatpush1.bf16.msra.mxu0 0
      %2359 = vmatprep.subr.bf16.mxu0 0
      %2360 = vmatpush1.bf16.msra.mxu0 0
      %2361 = vmatprep.subr.bf16.mxu0 0
      %2362 = vmatpush1.bf16.msra.mxu0 0
      %2363 = vmatprep.subr.bf16.mxu0 0
      %2364 = vmatpush1.bf16.msra.mxu0 0
      %2365 = vmatprep.subr.bf16.mxu0 0
      %2366 = vmatpush1.bf16.msra.mxu0 0
      %2367 = vmatprep.subr.bf16.mxu0 0
      %2368 = vmatpush1.bf16.msra.mxu0 0
      %2369 = vmatprep.subr.bf16.mxu0 0
      %2370 = vmatpush1.bf16.msra.mxu0 0
      %2371 = vmatprep.subr.bf16.mxu0 %v2355
      %2372 = vmatpush1.bf16.msra.mxu0 %v2353
      %2373 = vmatprep.subr.bf16.mxu0 0
      %2374 = vmatpush2.bf16.msra.mxu0 0
      %2375 = vmatprep.subr.bf16.mxu0 0
      %2376 = vmatpush2.bf16.msra.mxu0 0
      %2377 = vmatprep.subr.bf16.mxu0 0
      %2378 = vmatpush2.bf16.msra.mxu0 0
      %2379 = vmatprep.subr.bf16.mxu0 0
      %2380 = vmatpush2.bf16.msra.mxu0 0
      %2381 = vmatprep.subr.bf16.mxu0 0
      %2382 = vmatpush2.bf16.msra.mxu0 0
      %2383 = vmatprep.subr.bf16.mxu0 0
      %2384 = vmatpush2.bf16.msra.mxu0 0
      %2385 = vmatprep.subr.bf16.mxu0 0
      %2386 = vmatpush2.bf16.msra.mxu0 0
      %2387 = vmatprep.subr.bf16.mxu0 0
      %2388 = vmatpush2.bf16.msra.mxu0 0
      %2389 = vmatprep.mubr.bf16.mxu0 0
      %2390 = vmatmul.mubr.bf16.gmra.mxu0 %v2350
      %v2391 = vpop.f32.mrf.mxu0
      %v2392 = vadd.f32 0.0, %v2391
      %v2393 = vpop.f32.mrf.mxu0
      %v2394 = vadd.f32 0.0, %v2393
      %v2395 = vpop.f32.mrf.mxu0
      %v2396 = vpop.f32.mrf.mxu0
      %2397 = vdwg.mxu0
      %v2398 = vadd.f32 %v2338, %v2392
      %v2399 = vadd.f32 %v2339, %v2394
      %s2400 = scalar_lea.vmem %s5, 32
      %v2401 = vld [vmem:[%s2400] sm:$0xf]
      %2402 = vrot.lane.b32.xlu0 %v1935, 112
      %v2403 = vpop.permute.xlu0 %2402
      %2404 = vrot.lane.b32.xlu0 %v1936, 112
      %v2405 = vpop.permute.xlu0 %2404
      %v2406 = vsel %vm788, %v2403, %v2405
      %v2408 = vsel %vm790, %v2405, 0
      %v2410 = vsel %vm980, %v2401, 0
      %v2413 = vsel %vm1218, %v2406, 0
      %v2415 = vsel %vm1218, %v2408, 0
      %2417 = vmatprep.subr.bf16.mxu0 0
      %2418 = vmatpush1.bf16.msra.mxu0 0
      %2419 = vmatprep.subr.bf16.mxu0 0
      %2420 = vmatpush1.bf16.msra.mxu0 0
      %2421 = vmatprep.subr.bf16.mxu0 0
      %2422 = vmatpush1.bf16.msra.mxu0 0
      %2423 = vmatprep.subr.bf16.mxu0 0
      %2424 = vmatpush1.bf16.msra.mxu0 0
      %2425 = vmatprep.subr.bf16.mxu0 0
      %2426 = vmatpush1.bf16.msra.mxu0 0
      %2427 = vmatprep.subr.bf16.mxu0 0
      %2428 = vmatpush1.bf16.msra.mxu0 0
      %2429 = vmatprep.subr.bf16.mxu0 0
      %2430 = vmatpush1.bf16.msra.mxu0 0
      %2431 = vmatprep.subr.bf16.mxu0 %v2415
      %2432 = vmatpush1.bf16.msra.mxu0 %v2413
      %2433 = vmatprep.subr.bf16.mxu0 0
      %2434 = vmatpush2.bf16.msra.mxu0 0
      %2435 = vmatprep.subr.bf16.mxu0 0
      %2436 = vmatpush2.bf16.msra.mxu0 0
      %2437 = vmatprep.subr.bf16.mxu0 0
      %2438 = vmatpush2.bf16.msra.mxu0 0
      %2439 = vmatprep.subr.bf16.mxu0 0
      %2440 = vmatpush2.bf16.msra.mxu0 0
      %2441 = vmatprep.subr.bf16.mxu0 0
      %2442 = vmatpush2.bf16.msra.mxu0 0
      %2443 = vmatprep.subr.bf16.mxu0 0
      %2444 = vmatpush2.bf16.msra.mxu0 0
      %2445 = vmatprep.subr.bf16.mxu0 0
      %2446 = vmatpush2.bf16.msra.mxu0 0
      %2447 = vmatprep.subr.bf16.mxu0 0
      %2448 = vmatpush2.bf16.msra.mxu0 0
      %2449 = vmatprep.mubr.bf16.mxu0 0
      %2450 = vmatmul.mubr.bf16.gmra.mxu0 %v2410
      %v2451 = vpop.f32.mrf.mxu0
      %v2452 = vadd.f32 0.0, %v2451
      %v2453 = vpop.f32.mrf.mxu0
      %v2454 = vadd.f32 0.0, %v2453
      %v2455 = vpop.f32.mrf.mxu0
      %v2456 = vpop.f32.mrf.mxu0
      %2457 = vdwg.mxu0
      %v2458 = vadd.f32 %v2398, %v2452
      %v2459 = vadd.f32 %v2399, %v2454
      %2461 = vset.pattern.permute.xlu0 0
      %2462 = vperm.xlu0 %2461, %v1908
      %v2463 = vpop.permute.xlu0 %2462
      %v2465 = vadd.f32 %v2458, %v2463
      %v2466 = vadd.f32 %v2459, %v2463
      %v2467 = vadd.f32 %v2465, %v2466
      %2468 = vadd.xlane.f32.xlu0 %v2467
      %v2469 = vpop.xlane.xlu0 %2468
      %v2470 = vmul.f32 %v2465, %v2465
      %v2471 = vmul.f32 %v2466, %v2466
      %v2472 = vadd.f32 %v2470, %v2471
      %2473 = vadd.xlane.f32.xlu0 %v2472
      %v2474 = vpop.xlane.xlu0 %2473
      %v2475 = vsel %vm372, %v2469, %v2474
      %2476 = vmatprep.subr.mxu0 0.0
      %2477 = vmatpush1.msra.mxu0 0.0
      %2478 = vmatprep.subr.mxu0 0.0
      %2479 = vmatpush1.msra.mxu0 0.0
      %2480 = vmatprep.subr.mxu0 0.0
      %2481 = vmatpush1.msra.mxu0 0.0
      %2482 = vmatprep.subr.mxu0 0.0
      %2483 = vmatpush1.msra.mxu0 0.0
      %2484 = vmatprep.subr.mxu0 0.0
      %2485 = vmatpush1.msra.mxu0 0.0
      %2486 = vmatprep.subr.mxu0 0.0
      %2487 = vmatpush1.msra.mxu0 0.0
      %2488 = vmatprep.subr.mxu0 0.0
      %2489 = vmatpush1.msra.mxu0 0.0
      %2490 = vmatprep.subr.mxu0 0.0
      %2491 = vmatpush1.msra.mxu0 0.0
      %2492 = vmatprep.subr.mxu0 0.0
      %2493 = vmatpush1.msra.mxu0 0.0
      %2494 = vmatprep.subr.mxu0 0.0
      %2495 = vmatpush1.msra.mxu0 0.0
      %2496 = vmatprep.subr.mxu0 0.0
      %2497 = vmatpush1.msra.mxu0 0.0
      %2498 = vmatprep.subr.mxu0 0.0
      %2499 = vmatpush1.msra.mxu0 0.0
      %2500 = vmatprep.subr.mxu0 0.0
      %2501 = vmatpush1.msra.mxu0 0.0
      %2502 = vmatprep.subr.mxu0 0.0
      %2503 = vmatpush1.msra.mxu0 0.0
      %2504 = vmatprep.subr.mxu0 0.0
      %2505 = vmatpush1.msra.mxu0 0.0
      %2506 = vmatprep.subr.mxu0 0.0
      %2507 = vmatpush1.msra.mxu0 %v2475
      %2508 = vmatprep.subr.mxu0 0.0
      %2509 = vmatpush2.msra.mxu0 0.0
      %2510 = vmatprep.subr.mxu0 0.0
      %2511 = vmatpush2.msra.mxu0 0.0
      %2512 = vmatprep.subr.mxu0 0.0
      %2513 = vmatpush2.msra.mxu0 0.0
      %2514 = vmatprep.subr.mxu0 0.0
      %2515 = vmatpush2.msra.mxu0 0.0
      %2516 = vmatprep.subr.mxu0 0.0
      %2517 = vmatpush2.msra.mxu0 0.0
      %2518 = vmatprep.subr.mxu0 0.0
      %2519 = vmatpush2.msra.mxu0 0.0
      %2520 = vmatprep.subr.mxu0 0.0
      %2521 = vmatpush2.msra.mxu0 0.0
      %2522 = vmatprep.subr.mxu0 0.0
      %2523 = vmatpush2.msra.mxu0 0.0
      %2524 = vmatprep.subr.mxu0 0.0
      %2525 = vmatpush2.msra.mxu0 0.0
      %2526 = vmatprep.subr.mxu0 0.0
      %2527 = vmatpush2.msra.mxu0 0.0
      %2528 = vmatprep.subr.mxu0 0.0
      %2529 = vmatpush2.msra.mxu0 0.0
      %2530 = vmatprep.subr.mxu0 0.0
      %2531 = vmatpush2.msra.mxu0 0.0
      %2532 = vmatprep.subr.mxu0 0.0
      %2533 = vmatpush2.msra.mxu0 0.0
      %2534 = vmatprep.subr.mxu0 0.0
      %2535 = vmatpush2.msra.mxu0 0.0
      %2536 = vmatprep.subr.mxu0 0.0
      %2537 = vmatpush2.msra.mxu0 0.0
      %2538 = vmatprep.subr.mxu0 0.0
      %2539 = vmatpush2.msra.mxu0 0.0
      %2540 = vmatprep.mubr.f32.mxu0 0.0
      %2541 = vmatmul.mubr.f32.gmra.mxu0 %v982
      %v2542 = vpop.f32.mrf.mxu0
      %v2543 = vadd.f32 0.0, %v2542
      %v2544 = vpop.f32.mrf.mxu0
      %2545 = vdwg.mxu0
      %v2546 = vmul.f32 %v2543, 0.00390625
      %v2547 = vmul.f32 %v2546, %v2546
      %2549 = vrot.lane.b32.xlu0 %v2547, 1
      %v2550 = vpop.permute.xlu0 %2549
      %v2552 = vsub.f32 %v2546, %v2550
      %v2553 = vmax.f32 %v2552, 0.0
      %v2554 = vadd.f32 %v2553, 1e-05
      %v2555 = vrsqrt.pop %v2554
      %v2556 = vsel %vm372, %v2546, %v2555
      %2557 = vmatprep.subr.mxu0 0.0
      %2558 = vmatpush1.msra.mxu0 0.0
      %2559 = vmatprep.subr.mxu0 0.0
      %2560 = vmatpush1.msra.mxu0 0.0
      %2561 = vmatprep.subr.mxu0 0.0
      %2562 = vmatpush1.msra.mxu0 0.0
      %2563 = vmatprep.subr.mxu0 0.0
      %2564 = vmatpush1.msra.mxu0 0.0
      %2565 = vmatprep.subr.mxu0 0.0
      %2566 = vmatpush1.msra.mxu0 0.0
      %2567 = vmatprep.subr.mxu0 0.0
      %2568 = vmatpush1.msra.mxu0 0.0
      %2569 = vmatprep.subr.mxu0 0.0
      %2570 = vmatpush1.msra.mxu0 0.0
      %2571 = vmatprep.subr.mxu0 0.0
      %2572 = vmatpush1.msra.mxu0 0.0
      %2573 = vmatprep.subr.mxu0 0.0
      %2574 = vmatpush1.msra.mxu0 0.0
      %2575 = vmatprep.subr.mxu0 0.0
      %2576 = vmatpush1.msra.mxu0 0.0
      %2577 = vmatprep.subr.mxu0 0.0
      %2578 = vmatpush1.msra.mxu0 0.0
      %2579 = vmatprep.subr.mxu0 0.0
      %2580 = vmatpush1.msra.mxu0 0.0
      %2581 = vmatprep.subr.mxu0 0.0
      %2582 = vmatpush1.msra.mxu0 0.0
      %2583 = vmatprep.subr.mxu0 0.0
      %2584 = vmatpush1.msra.mxu0 0.0
      %2585 = vmatprep.subr.mxu0 0.0
      %2586 = vmatpush1.msra.mxu0 0.0
      %2587 = vmatprep.subr.mxu0 0.0
      %2588 = vmatpush1.msra.mxu0 %v2556
      %2589 = vmatprep.subr.mxu0 0.0
      %2590 = vmatpush2.msra.mxu0 0.0
      %2591 = vmatprep.subr.mxu0 0.0
      %2592 = vmatpush2.msra.mxu0 0.0
      %2593 = vmatprep.subr.mxu0 0.0
      %2594 = vmatpush2.msra.mxu0 0.0
      %2595 = vmatprep.subr.mxu0 0.0
      %2596 = vmatpush2.msra.mxu0 0.0
      %2597 = vmatprep.subr.mxu0 0.0
      %2598 = vmatpush2.msra.mxu0 0.0
      %2599 = vmatprep.subr.mxu0 0.0
      %2600 = vmatpush2.msra.mxu0 0.0
      %2601 = vmatprep.subr.mxu0 0.0
      %2602 = vmatpush2.msra.mxu0 0.0
      %2603 = vmatprep.subr.mxu0 0.0
      %2604 = vmatpush2.msra.mxu0 0.0
      %2605 = vmatprep.subr.mxu0 0.0
      %2606 = vmatpush2.msra.mxu0 0.0
      %2607 = vmatprep.subr.mxu0 0.0
      %2608 = vmatpush2.msra.mxu0 0.0
      %2609 = vmatprep.subr.mxu0 0.0
      %2610 = vmatpush2.msra.mxu0 0.0
      %2611 = vmatprep.subr.mxu0 0.0
      %2612 = vmatpush2.msra.mxu0 0.0
      %2613 = vmatprep.subr.mxu0 0.0
      %2614 = vmatpush2.msra.mxu0 0.0
      %2615 = vmatprep.subr.mxu0 0.0
      %2616 = vmatpush2.msra.mxu0 0.0
      %2617 = vmatprep.subr.mxu0 0.0
      %2618 = vmatpush2.msra.mxu0 0.0
      %2619 = vmatprep.subr.mxu0 0.0
      %2620 = vmatpush2.msra.mxu0 0.0
      %2621 = vmatprep.mubr.f32.mxu0 0.0
      %2622 = vmatmul.mubr.f32.gmra.mxu0 %v1066
      %v2623 = vpop.f32.mrf.mxu0
      %v2624 = vadd.f32 0.0, %v2623
      %v2625 = vpop.f32.mrf.mxu0
      %2626 = vdwg.mxu0
      %2628 = vset.pattern.permute.xlu0 0
      %2629 = vperm.xlu0 %2628, %v2624
      %v2630 = vpop.permute.xlu0 %2629
      %v2632 = vsub.f32 %v2465, %v2630
      %v2633 = vsub.f32 %v2466, %v2630
      %v2634 = vmul.f32 %v2624, %v1908
      %2636 = vset.pattern.permute.xlu0 1
      %2637 = vperm.xlu0 %2636, %v2634
      %v2638 = vpop.permute.xlu0 %2637
      %v2640 = vmul.f32 %v2632, %v2638
      %v2641 = vmul.f32 %v2633, %v2638
      %2642 = vset.pattern.permute.xlu0 2
      %2643 = vperm.xlu0 %2642, %v1908
      %v2644 = vpop.permute.xlu0 %2643
      %v2646 = vadd.f32 %v2640, %v2644
      %v2647 = vadd.f32 %v2641, %v2644
      %v2648 = vmax.f32 %v2646, 0.0
      %v2649 = vmax.f32 %v2647, 0.0
      %2650 = vst [vmem:[%s359] sm:$0xff] %v2648
      %2651 = vst [vmem:[%s359 + $0x8] sm:$0xff] %v2649
      %p2652 = scmp.lt.s32.totalorder %s21, 1
      %s2653 = scalar_select %p2652, %s21, 1
      %s2654 = smul.addr %s2653, 2
      %s2655 = smul.addr %s2654, 8
      %s2656 = scalar_lea.vmem %s10, %s2655
      // Predicated region
      $region61: #{conv3_forward.1} parent=59 // pred_check
        %p2657 = pneg %p254
      $region62: #{conv3_forward.1} parent=59 // pred_check_branch
        %2659 = sbr.rel (%p2657) target = $region64
      $region63: #{conv3_forward.1} parent=59 // pred_region
        _
      $region64: #{conv3_forward.1} parent=59 // pred_fallthru
        _
    $region60: #{conv3_forward.1} parent=5 // pred_fallthru
      _
    %p2660 = scmp.le.s32.totalorder 2, %s16
    // Predicated region
    $region65: #{conv3_forward.1} parent=5 // pred_check
      %p2661 = pneg %p2660
    $region66: #{conv3_forward.1} parent=5 // pred_check_branch
      %2663 = sbr.rel (%p2661) target = $region68
    $region67: #{conv3_forward.1} parent=5 // pred_region
      %s2664 = ssub.s32 %s16, 2
      // Predicated region
      $region69: #{conv3_forward.1} parent=67 // pred_check
        %p2665 = pneg %p260
      $region70: #{conv3_forward.1} parent=67 // pred_check_branch
        %2667 = sbr.rel (%p2665) target = $region72
      $region71: #{conv3_forward.1} parent=67 // pred_region
        %p2668 = scmp.lt.s32.totalorder %s22, 1
        %s2669 = scalar_select %p2668, %s22, 1
        %s2670 = smul.addr %s2669, 2
        %s2671 = smul.addr %s2670, 8
        %s2672 = scalar_lea.vmem %s10, %s2671
      $region72: #{conv3_forward.1} parent=67 // pred_fallthru
        _
    $region68: #{conv3_forward.1} parent=5 // pred_fallthru
      _
  $region6: #{conv3_forward.1} parent=0 // loop_footer
    %s20 = sadd.s32 1, %s16
  $region7: #{conv3_forward.1} parent=0 // loop_footer_branch
    %15 = sbr.rel target = $region3
  $region8: #{conv3_forward.1} parent=0 // loop_exit
    _

</llo_original>
